<compile_context>
chip_gen: v6e
topology: v6e:2x2x1
jax: 0.10.0
libtpu: 0.0.40
codegen_flags: <defaults>
</compile_context>

<pallas_src>
import functools

import jax
import jax.numpy as jnp
from jax.experimental import pallas as pl
from jax.experimental.pallas import tpu as pltpu


def lstm_cls_kernel(x_ref,      # (T*B, D)  bf16 embedded tokens, time-major rows
                    h0_ref,     # (L, B, H) f32
                    c0_ref,     # (L, B, H) f32
                    w_ih_ref,   # (L, D, 4H) bf16, gate cols reordered (i,f,o,g)
                    w_hh_ref,   # (L, H, 4H) bf16, gate cols reordered (i,f,o,g)
                    b_ref,      # (L, 1, 4H) f32  (b_ih + b_hh), reordered
                    fc_w_ref,   # (H, 1) bf16
                    fc_b_ref,   # (1, 1) f32
                    probs_ref,  # out (B, 1)  sigmoid(fc(last step of last layer))
                    hn_ref,     # out (L, B, H) f32
                    cn_ref,     # out (L, B, H) f32
                    xp_ref,     # scratch (T_c*B, 4H) f32 — chunked input projection
                    seq_ref):   # scratch (T*B, H) bf16 — current layer's outputs
    L, B, H = h0_ref.shape
    TB = x_ref.shape[0]
    T = TB // B
    chunk_t = xp_ref.shape[0] // B          # static; wrapper guarantees T % chunk_t == 0
    n_chunks = T // chunk_t
    unroll = True if chunk_t <= 16 else 8   # bounded unroll for larger T

    h_fin = None
    for layer in range(L):                  # static unroll over layers (L is small)
        w_ih = w_ih_ref[layer]              # (D, 4H) bf16, resident for the layer
        w_hh = w_hh_ref[layer]              # (H, 4H) bf16, resident for the layer
        bias = b_ref[layer]                 # (1, 4H) f32
        store_seq = layer < L - 1           # last layer's per-step outputs are unused

        h = h0_ref[layer]                   # (B, H) f32
        c = c0_ref[layer]

        for ck in range(n_chunks):          # static loop over time chunks
            row0 = ck * chunk_t * B

            # ---- batched input projection for this chunk (one MXU matmul) --
            if layer == 0:
                src = x_ref[pl.ds(row0, chunk_t * B), :]      # bf16
            else:
                src = seq_ref[pl.ds(row0, chunk_t * B), :]    # bf16 (prev layer)
            xp_ref[...] = (jnp.dot(src, w_ih,
                                   preferred_element_type=jnp.float32)
                           + bias)                            # (T_c*B, 4H) f32

            def step(t, carry, _row0=row0, _store=store_seq, _w_hh=w_hh):
                h, c = carry                                  # (B, H) f32 each
                row_l = pl.multiple_of(t * B, B)              # chunk-local row
                gates = xp_ref[pl.ds(row_l, B), :] + jnp.dot(
                    h.astype(jnp.bfloat16), _w_hh,
                    preferred_element_type=jnp.float32)       # (B, 4H) f32
                # Gate columns are (i, f, o, g): one sigmoid over 3H lanes,
                # one tanh over H lanes (lane-aligned when H % 128 == 0; at
                # the toy H=32 the slices are merely sub-vreg, not a bug).
                sig = jax.nn.sigmoid(gates[:, :3 * H])
                g_g = jnp.tanh(gates[:, 3 * H:])
                i_g = sig[:, 0 * H:1 * H]
                f_g = sig[:, 1 * H:2 * H]
                o_g = sig[:, 2 * H:3 * H]
                c_new = f_g * c + i_g * g_g                   # f32 state update
                h_new = o_g * jnp.tanh(c_new)
                if _store:
                    row_g = pl.multiple_of(_row0 + t * B, B)  # global row
                    seq_ref[pl.ds(row_g, B), :] = h_new.astype(jnp.bfloat16)
                return (h_new, c_new)

            h, c = jax.lax.fori_loop(0, chunk_t, step, (h, c), unroll=unroll)

        hn_ref[layer] = h
        cn_ref[layer] = c
        h_fin = h
        # inter-layer dropout: eval-mode identity (deterministic forward)

    # fc + sigmoid on the last layer's final hidden state (== output[:, -1]).
    logits = jnp.dot(h_fin.astype(jnp.bfloat16), fc_w_ref[...],
                     preferred_element_type=jnp.float32) + fc_b_ref[...]
    probs_ref[...] = jax.nn.sigmoid(logits)                   # (B, 1)


def _reorder_gate_cols(w, H):
    """Reorder the last (4H) axis from PyTorch (i,f,g,o) to (i,f,o,g)."""
    return jnp.concatenate(
        [w[..., :2 * H], w[..., 3 * H:], w[..., 2 * H:3 * H]], axis=-1)


def _pick_time_chunk(T, B, H, budget_bytes=8 * 2**20):
    """Largest divisor of T whose (T_c*B, 4H) f32 projection fits the budget."""
    best = 1
    for ct in range(1, T + 1):
        if T % ct == 0 and ct * B * 4 * H * 4 <= budget_bytes:
            best = ct
    return best


def lstm_for_sequence_classification(tokens, hidden, params):
    """Pallas equivalent of LSTMForSequenceClassification.forward (eval mode)."""
    h0, c0 = hidden
    B, T = tokens.shape
    L, D, H4 = params["w_ih_t"].shape
    H = H4 // 4
    assert D == H, "original module requires n_inputs == n_hidden"

    # Glue: embedding lookup + eval-mode dropout (identity), time-major rows.
    x_tm = jnp.take(params["embedding"], tokens.T, axis=0)       # (T, B, D) f32

    # Pad batch to a multiple of 16 so bf16 per-step stores into the sequence
    # scratch stay sublane-pack aligned and matmul LHS rows aren't mostly pad.
    B_pad = max(16, ((B + 15) // 16) * 16)
    if B_pad != B:
        pad = B_pad - B
        x_tm = jnp.pad(x_tm, ((0, 0), (0, pad), (0, 0)))
        h0 = jnp.pad(h0, ((0, 0), (0, pad), (0, 0)))
        c0 = jnp.pad(c0, ((0, 0), (0, pad), (0, 0)))

    x_rows = x_tm.reshape(T * B_pad, D).astype(jnp.bfloat16)     # (T*B, D)

    # Weight prep (glue): gate-column reorder + bf16 cast of matmul operands.
    w_ih = _reorder_gate_cols(params["w_ih_t"], H).astype(jnp.bfloat16)
    w_hh = _reorder_gate_cols(params["w_hh_t"], H).astype(jnp.bfloat16)
    bias = _reorder_gate_cols(params["bias"], H)                 # f32
    fc_w = params["fc_w_t"].astype(jnp.bfloat16)
    fc_b = params["fc_b"]

    # Chunk the hoisted input projection over time so its f32 scratch stays
    # bounded (largest single VMEM consumer at realistic T/H).
    chunk_t = _pick_time_chunk(T, B_pad, H)

    # Scoped-VMEM limit sized to the actual resident set (inputs are
    # double-buffered by the runtime; scratch is single-buffered).
    bytes_in = (x_rows.size * 2 + h0.size * 4 + c0.size * 4
                + w_ih.size * 2 + w_hh.size * 2 + bias.size * 4
                + fc_w.size * 2 + fc_b.size * 4)
    bytes_out = B_pad * 4 + 2 * L * B_pad * H * 4
    bytes_scr = chunk_t * B_pad * 4 * H * 4 + T * B_pad * H * 2
    vmem_limit = int(min(64 * 2**20,
                         max(32 * 2**20,
                             2 * (bytes_in + bytes_out) + bytes_scr + (2 << 20))))

    vmem = functools.partial(pl.BlockSpec, memory_space=pltpu.MemorySpace.VMEM)
    probs, h_n, c_n = pl.pallas_call(
        lstm_cls_kernel,
        out_shape=(jax.ShapeDtypeStruct((B_pad, 1), jnp.float32),
                   jax.ShapeDtypeStruct((L, B_pad, H), jnp.float32),
                   jax.ShapeDtypeStruct((L, B_pad, H), jnp.float32)),
        in_specs=[vmem()] * 8,
        out_specs=(vmem(), vmem(), vmem()),
        scratch_shapes=[pltpu.VMEM((chunk_t * B_pad, 4 * H), jnp.float32),
                        pltpu.VMEM((T * B_pad, H), jnp.bfloat16)],
        compiler_params=pltpu.CompilerParams(vmem_limit_bytes=vmem_limit),
    )(x_rows, h0, c0, w_ih, w_hh, bias, fc_w, fc_b)

    # output.flatten() in the original module; drop the batch padding.
    return probs[:B].reshape(-1), (h_n[:, :B], c_n[:, :B])


def init_params(key, n_tokens, n_inputs, n_hidden, n_layers):
    assert n_inputs == n_hidden, "original module requires n_inputs == n_hidden"
    ks = jax.random.split(key, 7)
    bound = 1.0 / float(n_hidden) ** 0.5
    emb = jax.random.normal(ks[0], (n_tokens, n_inputs), jnp.float32)
    w_ih = jax.random.uniform(ks[1], (n_layers, 4 * n_hidden, n_inputs),
                              jnp.float32, -bound, bound)
    w_hh = jax.random.uniform(ks[2], (n_layers, 4 * n_hidden, n_hidden),
                              jnp.float32, -bound, bound)
    b_ih = jax.random.uniform(ks[3], (n_layers, 4 * n_hidden),
                              jnp.float32, -bound, bound)
    b_hh = jax.random.uniform(ks[4], (n_layers, 4 * n_hidden),
                              jnp.float32, -bound, bound)
    fc_w = jax.random.uniform(ks[5], (1, n_hidden), jnp.float32, -bound, bound)
    fc_b = jax.random.uniform(ks[6], (1,), jnp.float32, -bound, bound)
    return dict(
        embedding=emb,
        w_ih_t=jnp.transpose(w_ih, (0, 2, 1)),     # (L, D, 4H), gate order i,f,g,o
        w_hh_t=jnp.transpose(w_hh, (0, 2, 1)),     # (L, H, 4H), gate order i,f,g,o
        bias=(b_ih + b_hh)[:, None, :],            # (L, 1, 4H), gate order i,f,g,o
        fc_w_t=fc_w.T,                             # (H, 1)
        fc_b=fc_b.reshape(1, 1),                   # (1, 1)
    )


def reference_forward(tokens, hidden, params, matmul_dtype=jnp.float32):
    """Pure-JAX reference replicating PyTorch semantics (eval mode).

    matmul_dtype=jnp.bfloat16 mirrors the kernel's bf16 MXU operands (f32
    accumulation) for a tight numerical comparison; jnp.float32 gives the
    exact PyTorch-style full-f32 forward.
    """
    def mm(a, b):
        return jnp.dot(a.astype(matmul_dtype), b.astype(matmul_dtype),
                       preferred_element_type=jnp.float32)

    x = jnp.take(params["embedding"], tokens, axis=0)          # (B, T, D)
    h0, c0 = hidden
    L, _, H = h0.shape
    layer_in = x
    hs, cs = [], []
    for l in range(L):
        h, c = h0[l], c0[l]
        outs = []
        for t in range(layer_in.shape[1]):
            gates = (mm(layer_in[:, t], params["w_ih_t"][l])
                     + mm(h, params["w_hh_t"][l]) + params["bias"][l])
            i = jax.nn.sigmoid(gates[:, :H])
            f = jax.nn.sigmoid(gates[:, H:2 * H])
            g = jnp.tanh(gates[:, 2 * H:3 * H])
            o = jax.nn.sigmoid(gates[:, 3 * H:])
            c = f * c + i * g
            h = o * jnp.tanh(c)
            outs.append(h)
        layer_in = jnp.stack(outs, axis=1)
        hs.append(h)
        cs.append(c)
    logits = mm(layer_in[:, -1], params["fc_w_t"]) + params["fc_b"]
    return jax.nn.sigmoid(logits).reshape(-1), (jnp.stack(hs), jnp.stack(cs))


if __name__ == "__main__":
    n_tokens, n_inputs, n_hidden, n_layers = 50, 32, 32, 2
    batch, seq_len = 2, 8

    key = jax.random.PRNGKey(0)
    kp, kt = jax.random.split(key)
    params = init_params(kp, n_tokens, n_inputs, n_hidden, n_layers)
    tokens = jax.random.randint(kt, (batch, seq_len), 0, n_tokens,
                                dtype=jnp.int32)
    # init_hidden(batch): zeros of shape (n_layers, B, n_hidden)
    hidden = (jnp.zeros((n_layers, batch, n_hidden), jnp.float32),
              jnp.zeros((n_layers, batch, n_hidden), jnp.float32))

    probs, (h_n, c_n) = lstm_for_sequence_classification(tokens, hidden, params)
    jax.block_until_ready((probs, h_n, c_n))

    assert probs.shape == (batch,)
    assert h_n.shape == (n_layers, batch, n_hidden)
    assert c_n.shape == (n_layers, batch, n_hidden)

    # Tight check against a reference that mirrors the kernel's bf16 MXU
    # operands (f32 accumulation everywhere else).
    bp, (bh, bc) = reference_forward(tokens, hidden, params, jnp.bfloat16)
    assert jnp.allclose(probs, bp, atol=2e-3, rtol=2e-3)
    assert jnp.allclose(h_n, bh, atol=2e-3, rtol=2e-3)
    assert jnp.allclose(c_n, bc, atol=2e-3, rtol=2e-3)

    # Looser check against the full-f32 (PyTorch-semantics) forward; the only
    # deviation is the deliberate bf16 rounding of matmul operands.
    fp, (fh, fc_) = reference_forward(tokens, hidden, params, jnp.float32)
    assert jnp.allclose(probs, fp, atol=2e-2, rtol=2e-2)
    assert jnp.allclose(h_n, fh, atol=3e-2, rtol=3e-2)
    assert jnp.allclose(c_n, fc_, atol=3e-2, rtol=3e-2)

    print("KERNEL_OK")
</pallas_src>

<mosaic_0001>
module attributes {stable_mosaic.version = 11 : i64} {
  func.func @lstm_cls_kernel(%arg0: memref<128x32xbf16, #tpu.memory_space<vmem>>, %arg1: memref<2x16x32xf32, #tpu.memory_space<vmem>>, %arg2: memref<2x16x32xf32, #tpu.memory_space<vmem>>, %arg3: memref<2x32x128xbf16, #tpu.memory_space<vmem>>, %arg4: memref<2x32x128xbf16, #tpu.memory_space<vmem>>, %arg5: memref<2x1x128xf32, #tpu.memory_space<vmem>>, %arg6: memref<32x1xbf16, #tpu.memory_space<vmem>>, %arg7: memref<1x1xf32, #tpu.memory_space<vmem>>, %arg8: memref<16x1xf32, #tpu.memory_space<vmem>>, %arg9: memref<2x16x32xf32, #tpu.memory_space<vmem>>, %arg10: memref<2x16x32xf32, #tpu.memory_space<vmem>>, %arg11: memref<128x128xf32, #tpu.memory_space<vmem>>, %arg12: memref<128x32xbf16, #tpu.memory_space<vmem>>) attributes {dimension_semantics = [], scalar_prefetch = 0 : i64, scratch_operands = 2 : i64, tpu.core_type = #tpu.core_type<tc>} {
    %c0 = arith.constant 0 : index
    %c0_0 = arith.constant 0 : index
    %c0_1 = arith.constant 0 : index
    %0 = vector.load %arg3[%c0, %c0_0, %c0_1] : memref<2x32x128xbf16, #tpu.memory_space<vmem>>, vector<1x32x128xbf16>
    %1 = vector.shape_cast %0 : vector<1x32x128xbf16> to vector<32x128xbf16>
    %c0_2 = arith.constant 0 : index
    %c0_3 = arith.constant 0 : index
    %c0_4 = arith.constant 0 : index
    %2 = vector.load %arg4[%c0_2, %c0_3, %c0_4] : memref<2x32x128xbf16, #tpu.memory_space<vmem>>, vector<1x32x128xbf16>
    %3 = vector.shape_cast %2 : vector<1x32x128xbf16> to vector<32x128xbf16>
    %c0_5 = arith.constant 0 : index
    %c0_6 = arith.constant 0 : index
    %c0_7 = arith.constant 0 : index
    %4 = vector.load %arg5[%c0_5, %c0_6, %c0_7] : memref<2x1x128xf32, #tpu.memory_space<vmem>>, vector<1x1x128xf32>
    %5 = vector.shape_cast %4 : vector<1x1x128xf32> to vector<1x128xf32>
    %c0_8 = arith.constant 0 : index
    %c0_9 = arith.constant 0 : index
    %c0_10 = arith.constant 0 : index
    %6 = vector.load %arg1[%c0_8, %c0_9, %c0_10] : memref<2x16x32xf32, #tpu.memory_space<vmem>>, vector<1x16x32xf32>
    %7 = vector.shape_cast %6 : vector<1x16x32xf32> to vector<16x32xf32>
    %c0_11 = arith.constant 0 : index
    %c0_12 = arith.constant 0 : index
    %c0_13 = arith.constant 0 : index
    %8 = vector.load %arg2[%c0_11, %c0_12, %c0_13] : memref<2x16x32xf32, #tpu.memory_space<vmem>>, vector<1x16x32xf32>
    %9 = vector.shape_cast %8 : vector<1x16x32xf32> to vector<16x32xf32>
    %c0_14 = arith.constant 0 : index
    %c0_15 = arith.constant 0 : index
    %10 = vector.load %arg0[%c0_14, %c0_15] : memref<128x32xbf16, #tpu.memory_space<vmem>>, vector<128x32xbf16>
    %cst = arith.constant dense<0.000000e+00> : vector<128x128xf32>
    %11 = tpu.matmul %10, %1, %cst {dimension_numbers = #tpu.dot_dimension_numbers<[1], [0], [0], [1], [0, 0, 1, 1], [], []>} : vector<128x32xbf16>, vector<32x128xbf16>, vector<128x128xf32> -> vector<128x128xf32>
    %12 = vector.broadcast %5 : vector<1x128xf32> to vector<128x128xf32>
    %13 = arith.addf %11, %12 : vector<128x128xf32>
    %c0_16 = arith.constant 0 : index
    %c0_17 = arith.constant 0 : index
    %14 = vector.load %arg11[%c0_16, %c0_17] : memref<128x128xf32, #tpu.memory_space<vmem>>, vector<128x128xf32>
    tpu.vector_store %arg11[%c0_16, %c0_17], %13 {strides = array<i32>} : memref<128x128xf32, #tpu.memory_space<vmem>>, vector<128x128xf32>,
    %c0_i32 = arith.constant 0 : i32
    %c16_i32 = arith.constant 16 : i32
    %15 = arith.muli %c0_i32, %c16_i32 : i32
    %16 = tpu.assume_multiple %15, 16 : i32
    %17 = arith.index_cast %16 : i32 to index
    %c0_18 = arith.constant 0 : index
    %18 = vector.load %arg11[%17, %c0_18] : memref<128x128xf32, #tpu.memory_space<vmem>>, vector<16x128xf32>
    %19 = arith.truncf %7 : vector<16x32xf32> to vector<16x32xbf16>
    %cst_19 = arith.constant dense<0.000000e+00> : vector<16x128xf32>
    %20 = tpu.matmul %19, %3, %cst_19 {dimension_numbers = #tpu.dot_dimension_numbers<[1], [0], [0], [1], [0, 0, 1, 1], [], []>} : vector<16x32xbf16>, vector<32x128xbf16>, vector<16x128xf32> -> vector<16x128xf32>
    %21 = arith.addf %18, %20 : vector<16x128xf32>
    %22 = vector.extract_strided_slice %21 {offsets = [0, 0], sizes = [16, 96], strides = [1, 1]} : vector<16x128xf32> to vector<16x96xf32>
    %23 = arith.negf %22 : vector<16x96xf32>
    %24 = math.exp %23 : vector<16x96xf32>
    %cst_20 = arith.constant 1.000000e+00 : f32
    %25 = vector.broadcast %cst_20 : f32 to vector<16x96xf32>
    %26 = arith.addf %25, %24 : vector<16x96xf32>
    %27 = arith.divf %25, %26 : vector<16x96xf32>
    %28 = vector.extract_strided_slice %21 {offsets = [0, 96], sizes = [16, 32], strides = [1, 1]} : vector<16x128xf32> to vector<16x32xf32>
    %29 = math.tanh %28 : vector<16x32xf32>
    %30 = vector.extract_strided_slice %27 {offsets = [0, 0], sizes = [16, 32], strides = [1, 1]} : vector<16x96xf32> to vector<16x32xf32>
    %31 = vector.extract_strided_slice %27 {offsets = [0, 32], sizes = [16, 32], strides = [1, 1]} : vector<16x96xf32> to vector<16x32xf32>
    %32 = vector.extract_strided_slice %27 {offsets = [0, 64], sizes = [16, 32], strides = [1, 1]} : vector<16x96xf32> to vector<16x32xf32>
    %33 = arith.mulf %31, %9 : vector<16x32xf32>
    %34 = arith.mulf %30, %29 : vector<16x32xf32>
    %35 = arith.addf %33, %34 : vector<16x32xf32>
    %36 = math.tanh %35 : vector<16x32xf32>
    %37 = arith.mulf %32, %36 : vector<16x32xf32>
    %c16_i32_21 = arith.constant 16 : i32
    %38 = arith.muli %c0_i32, %c16_i32_21 : i32
    %c0_i32_22 = arith.constant 0 : i32
    %39 = arith.addi %c0_i32_22, %38 : i32
    %40 = tpu.assume_multiple %39, 16 : i32
    %41 = arith.truncf %37 : vector<16x32xf32> to vector<16x32xbf16>
    %42 = arith.index_cast %40 : i32 to index
    %c0_23 = arith.constant 0 : index
    %43 = vector.load %arg12[%42, %c0_23] : memref<128x32xbf16, #tpu.memory_space<vmem>>, vector<16x32xbf16>
    tpu.vector_store %arg12[%42, %c0_23], %41 {strides = array<i32>} : memref<128x32xbf16, #tpu.memory_space<vmem>>, vector<16x32xbf16>,
    %c1_i32 = arith.constant 1 : i32
    %c16_i32_24 = arith.constant 16 : i32
    %44 = arith.muli %c1_i32, %c16_i32_24 : i32
    %45 = tpu.assume_multiple %44, 16 : i32
    %46 = arith.index_cast %45 : i32 to index
    %c0_25 = arith.constant 0 : index
    %47 = vector.load %arg11[%46, %c0_25] : memref<128x128xf32, #tpu.memory_space<vmem>>, vector<16x128xf32>
    %48 = arith.truncf %37 : vector<16x32xf32> to vector<16x32xbf16>
    %cst_26 = arith.constant dense<0.000000e+00> : vector<16x128xf32>
    %49 = tpu.matmul %48, %3, %cst_26 {dimension_numbers = #tpu.dot_dimension_numbers<[1], [0], [0], [1], [0, 0, 1, 1], [], []>} : vector<16x32xbf16>, vector<32x128xbf16>, vector<16x128xf32> -> vector<16x128xf32>
    %50 = arith.addf %47, %49 : vector<16x128xf32>
    %51 = vector.extract_strided_slice %50 {offsets = [0, 0], sizes = [16, 96], strides = [1, 1]} : vector<16x128xf32> to vector<16x96xf32>
    %52 = arith.negf %51 : vector<16x96xf32>
    %53 = math.exp %52 : vector<16x96xf32>
    %cst_27 = arith.constant 1.000000e+00 : f32
    %54 = vector.broadcast %cst_27 : f32 to vector<16x96xf32>
    %55 = arith.addf %54, %53 : vector<16x96xf32>
    %56 = arith.divf %54, %55 : vector<16x96xf32>
    %57 = vector.extract_strided_slice %50 {offsets = [0, 96], sizes = [16, 32], strides = [1, 1]} : vector<16x128xf32> to vector<16x32xf32>
    %58 = math.tanh %57 : vector<16x32xf32>
    %59 = vector.extract_strided_slice %56 {offsets = [0, 0], sizes = [16, 32], strides = [1, 1]} : vector<16x96xf32> to vector<16x32xf32>
    %60 = vector.extract_strided_slice %56 {offsets = [0, 32], sizes = [16, 32], strides = [1, 1]} : vector<16x96xf32> to vector<16x32xf32>
    %61 = vector.extract_strided_slice %56 {offsets = [0, 64], sizes = [16, 32], strides = [1, 1]} : vector<16x96xf32> to vector<16x32xf32>
    %62 = arith.mulf %60, %35 : vector<16x32xf32>
    %63 = arith.mulf %59, %58 : vector<16x32xf32>
    %64 = arith.addf %62, %63 : vector<16x32xf32>
    %65 = math.tanh %64 : vector<16x32xf32>
    %66 = arith.mulf %61, %65 : vector<16x32xf32>
    %c16_i32_28 = arith.constant 16 : i32
    %67 = arith.muli %c1_i32, %c16_i32_28 : i32
    %c0_i32_29 = arith.constant 0 : i32
    %68 = arith.addi %c0_i32_29, %67 : i32
    %69 = tpu.assume_multiple %68, 16 : i32
    %70 = arith.truncf %66 : vector<16x32xf32> to vector<16x32xbf16>
    %71 = arith.index_cast %69 : i32 to index
    %c0_30 = arith.constant 0 : index
    %72 = vector.load %arg12[%71, %c0_30] : memref<128x32xbf16, #tpu.memory_space<vmem>>, vector<16x32xbf16>
    tpu.vector_store %arg12[%71, %c0_30], %70 {strides = array<i32>} : memref<128x32xbf16, #tpu.memory_space<vmem>>, vector<16x32xbf16>,
    %c2_i32 = arith.constant 2 : i32
    %c16_i32_31 = arith.constant 16 : i32
    %73 = arith.muli %c2_i32, %c16_i32_31 : i32
    %74 = tpu.assume_multiple %73, 16 : i32
    %75 = arith.index_cast %74 : i32 to index
    %c0_32 = arith.constant 0 : index
    %76 = vector.load %arg11[%75, %c0_32] : memref<128x128xf32, #tpu.memory_space<vmem>>, vector<16x128xf32>
    %77 = arith.truncf %66 : vector<16x32xf32> to vector<16x32xbf16>
    %cst_33 = arith.constant dense<0.000000e+00> : vector<16x128xf32>
    %78 = tpu.matmul %77, %3, %cst_33 {dimension_numbers = #tpu.dot_dimension_numbers<[1], [0], [0], [1], [0, 0, 1, 1], [], []>} : vector<16x32xbf16>, vector<32x128xbf16>, vector<16x128xf32> -> vector<16x128xf32>
    %79 = arith.addf %76, %78 : vector<16x128xf32>
    %80 = vector.extract_strided_slice %79 {offsets = [0, 0], sizes = [16, 96], strides = [1, 1]} : vector<16x128xf32> to vector<16x96xf32>
    %81 = arith.negf %80 : vector<16x96xf32>
    %82 = math.exp %81 : vector<16x96xf32>
    %cst_34 = arith.constant 1.000000e+00 : f32
    %83 = vector.broadcast %cst_34 : f32 to vector<16x96xf32>
    %84 = arith.addf %83, %82 : vector<16x96xf32>
    %85 = arith.divf %83, %84 : vector<16x96xf32>
    %86 = vector.extract_strided_slice %79 {offsets = [0, 96], sizes = [16, 32], strides = [1, 1]} : vector<16x128xf32> to vector<16x32xf32>
    %87 = math.tanh %86 : vector<16x32xf32>
    %88 = vector.extract_strided_slice %85 {offsets = [0, 0], sizes = [16, 32], strides = [1, 1]} : vector<16x96xf32> to vector<16x32xf32>
    %89 = vector.extract_strided_slice %85 {offsets = [0, 32], sizes = [16, 32], strides = [1, 1]} : vector<16x96xf32> to vector<16x32xf32>
    %90 = vector.extract_strided_slice %85 {offsets = [0, 64], sizes = [16, 32], strides = [1, 1]} : vector<16x96xf32> to vector<16x32xf32>
    %91 = arith.mulf %89, %64 : vector<16x32xf32>
    %92 = arith.mulf %88, %87 : vector<16x32xf32>
    %93 = arith.addf %91, %92 : vector<16x32xf32>
    %94 = math.tanh %93 : vector<16x32xf32>
    %95 = arith.mulf %90, %94 : vector<16x32xf32>
    %c16_i32_35 = arith.constant 16 : i32
    %96 = arith.muli %c2_i32, %c16_i32_35 : i32
    %c0_i32_36 = arith.constant 0 : i32
    %97 = arith.addi %c0_i32_36, %96 : i32
    %98 = tpu.assume_multiple %97, 16 : i32
    %99 = arith.truncf %95 : vector<16x32xf32> to vector<16x32xbf16>
    %100 = arith.index_cast %98 : i32 to index
    %c0_37 = arith.constant 0 : index
    %101 = vector.load %arg12[%100, %c0_37] : memref<128x32xbf16, #tpu.memory_space<vmem>>, vector<16x32xbf16>
    tpu.vector_store %arg12[%100, %c0_37], %99 {strides = array<i32>} : memref<128x32xbf16, #tpu.memory_space<vmem>>, vector<16x32xbf16>,
    %c3_i32 = arith.constant 3 : i32
    %c16_i32_38 = arith.constant 16 : i32
    %102 = arith.muli %c3_i32, %c16_i32_38 : i32
    %103 = tpu.assume_multiple %102, 16 : i32
    %104 = arith.index_cast %103 : i32 to index
    %c0_39 = arith.constant 0 : index
    %105 = vector.load %arg11[%104, %c0_39] : memref<128x128xf32, #tpu.memory_space<vmem>>, vector<16x128xf32>
    %106 = arith.truncf %95 : vector<16x32xf32> to vector<16x32xbf16>
    %cst_40 = arith.constant dense<0.000000e+00> : vector<16x128xf32>
    %107 = tpu.matmul %106, %3, %cst_40 {dimension_numbers = #tpu.dot_dimension_numbers<[1], [0], [0], [1], [0, 0, 1, 1], [], []>} : vector<16x32xbf16>, vector<32x128xbf16>, vector<16x128xf32> -> vector<16x128xf32>
    %108 = arith.addf %105, %107 : vector<16x128xf32>
    %109 = vector.extract_strided_slice %108 {offsets = [0, 0], sizes = [16, 96], strides = [1, 1]} : vector<16x128xf32> to vector<16x96xf32>
    %110 = arith.negf %109 : vector<16x96xf32>
    %111 = math.exp %110 : vector<16x96xf32>
    %cst_41 = arith.constant 1.000000e+00 : f32
    %112 = vector.broadcast %cst_41 : f32 to vector<16x96xf32>
    %113 = arith.addf %112, %111 : vector<16x96xf32>
    %114 = arith.divf %112, %113 : vector<16x96xf32>
    %115 = vector.extract_strided_slice %108 {offsets = [0, 96], sizes = [16, 32], strides = [1, 1]} : vector<16x128xf32> to vector<16x32xf32>
    %116 = math.tanh %115 : vector<16x32xf32>
    %117 = vector.extract_strided_slice %114 {offsets = [0, 0], sizes = [16, 32], strides = [1, 1]} : vector<16x96xf32> to vector<16x32xf32>
    %118 = vector.extract_strided_slice %114 {offsets = [0, 32], sizes = [16, 32], strides = [1, 1]} : vector<16x96xf32> to vector<16x32xf32>
    %119 = vector.extract_strided_slice %114 {offsets = [0, 64], sizes = [16, 32], strides = [1, 1]} : vector<16x96xf32> to vector<16x32xf32>
    %120 = arith.mulf %118, %93 : vector<16x32xf32>
    %121 = arith.mulf %117, %116 : vector<16x32xf32>
    %122 = arith.addf %120, %121 : vector<16x32xf32>
    %123 = math.tanh %122 : vector<16x32xf32>
    %124 = arith.mulf %119, %123 : vector<16x32xf32>
    %c16_i32_42 = arith.constant 16 : i32
    %125 = arith.muli %c3_i32, %c16_i32_42 : i32
    %c0_i32_43 = arith.constant 0 : i32
    %126 = arith.addi %c0_i32_43, %125 : i32
    %127 = tpu.assume_multiple %126, 16 : i32
    %128 = arith.truncf %124 : vector<16x32xf32> to vector<16x32xbf16>
    %129 = arith.index_cast %127 : i32 to index
    %c0_44 = arith.constant 0 : index
    %130 = vector.load %arg12[%129, %c0_44] : memref<128x32xbf16, #tpu.memory_space<vmem>>, vector<16x32xbf16>
    tpu.vector_store %arg12[%129, %c0_44], %128 {strides = array<i32>} : memref<128x32xbf16, #tpu.memory_space<vmem>>, vector<16x32xbf16>,
    %c4_i32 = arith.constant 4 : i32
    %c16_i32_45 = arith.constant 16 : i32
    %131 = arith.muli %c4_i32, %c16_i32_45 : i32
    %132 = tpu.assume_multiple %131, 16 : i32
    %133 = arith.index_cast %132 : i32 to index
    %c0_46 = arith.constant 0 : index
    %134 = vector.load %arg11[%133, %c0_46] : memref<128x128xf32, #tpu.memory_space<vmem>>, vector<16x128xf32>
    %135 = arith.truncf %124 : vector<16x32xf32> to vector<16x32xbf16>
    %cst_47 = arith.constant dense<0.000000e+00> : vector<16x128xf32>
    %136 = tpu.matmul %135, %3, %cst_47 {dimension_numbers = #tpu.dot_dimension_numbers<[1], [0], [0], [1], [0, 0, 1, 1], [], []>} : vector<16x32xbf16>, vector<32x128xbf16>, vector<16x128xf32> -> vector<16x128xf32>
    %137 = arith.addf %134, %136 : vector<16x128xf32>
    %138 = vector.extract_strided_slice %137 {offsets = [0, 0], sizes = [16, 96], strides = [1, 1]} : vector<16x128xf32> to vector<16x96xf32>
    %139 = arith.negf %138 : vector<16x96xf32>
    %140 = math.exp %139 : vector<16x96xf32>
    %cst_48 = arith.constant 1.000000e+00 : f32
    %141 = vector.broadcast %cst_48 : f32 to vector<16x96xf32>
    %142 = arith.addf %141, %140 : vector<16x96xf32>
    %143 = arith.divf %141, %142 : vector<16x96xf32>
    %144 = vector.extract_strided_slice %137 {offsets = [0, 96], sizes = [16, 32], strides = [1, 1]} : vector<16x128xf32> to vector<16x32xf32>
    %145 = math.tanh %144 : vector<16x32xf32>
    %146 = vector.extract_strided_slice %143 {offsets = [0, 0], sizes = [16, 32], strides = [1, 1]} : vector<16x96xf32> to vector<16x32xf32>
    %147 = vector.extract_strided_slice %143 {offsets = [0, 32], sizes = [16, 32], strides = [1, 1]} : vector<16x96xf32> to vector<16x32xf32>
    %148 = vector.extract_strided_slice %143 {offsets = [0, 64], sizes = [16, 32], strides = [1, 1]} : vector<16x96xf32> to vector<16x32xf32>
    %149 = arith.mulf %147, %122 : vector<16x32xf32>
    %150 = arith.mulf %146, %145 : vector<16x32xf32>
    %151 = arith.addf %149, %150 : vector<16x32xf32>
    %152 = math.tanh %151 : vector<16x32xf32>
    %153 = arith.mulf %148, %152 : vector<16x32xf32>
    %c16_i32_49 = arith.constant 16 : i32
    %154 = arith.muli %c4_i32, %c16_i32_49 : i32
    %c0_i32_50 = arith.constant 0 : i32
    %155 = arith.addi %c0_i32_50, %154 : i32
    %156 = tpu.assume_multiple %155, 16 : i32
    %157 = arith.truncf %153 : vector<16x32xf32> to vector<16x32xbf16>
    %158 = arith.index_cast %156 : i32 to index
    %c0_51 = arith.constant 0 : index
    %159 = vector.load %arg12[%158, %c0_51] : memref<128x32xbf16, #tpu.memory_space<vmem>>, vector<16x32xbf16>
    tpu.vector_store %arg12[%158, %c0_51], %157 {strides = array<i32>} : memref<128x32xbf16, #tpu.memory_space<vmem>>, vector<16x32xbf16>,
    %c5_i32 = arith.constant 5 : i32
    %c16_i32_52 = arith.constant 16 : i32
    %160 = arith.muli %c5_i32, %c16_i32_52 : i32
    %161 = tpu.assume_multiple %160, 16 : i32
    %162 = arith.index_cast %161 : i32 to index
    %c0_53 = arith.constant 0 : index
    %163 = vector.load %arg11[%162, %c0_53] : memref<128x128xf32, #tpu.memory_space<vmem>>, vector<16x128xf32>
    %164 = arith.truncf %153 : vector<16x32xf32> to vector<16x32xbf16>
    %cst_54 = arith.constant dense<0.000000e+00> : vector<16x128xf32>
    %165 = tpu.matmul %164, %3, %cst_54 {dimension_numbers = #tpu.dot_dimension_numbers<[1], [0], [0], [1], [0, 0, 1, 1], [], []>} : vector<16x32xbf16>, vector<32x128xbf16>, vector<16x128xf32> -> vector<16x128xf32>
    %166 = arith.addf %163, %165 : vector<16x128xf32>
    %167 = vector.extract_strided_slice %166 {offsets = [0, 0], sizes = [16, 96], strides = [1, 1]} : vector<16x128xf32> to vector<16x96xf32>
    %168 = arith.negf %167 : vector<16x96xf32>
    %169 = math.exp %168 : vector<16x96xf32>
    %cst_55 = arith.constant 1.000000e+00 : f32
    %170 = vector.broadcast %cst_55 : f32 to vector<16x96xf32>
    %171 = arith.addf %170, %169 : vector<16x96xf32>
    %172 = arith.divf %170, %171 : vector<16x96xf32>
    %173 = vector.extract_strided_slice %166 {offsets = [0, 96], sizes = [16, 32], strides = [1, 1]} : vector<16x128xf32> to vector<16x32xf32>
    %174 = math.tanh %173 : vector<16x32xf32>
    %175 = vector.extract_strided_slice %172 {offsets = [0, 0], sizes = [16, 32], strides = [1, 1]} : vector<16x96xf32> to vector<16x32xf32>
    %176 = vector.extract_strided_slice %172 {offsets = [0, 32], sizes = [16, 32], strides = [1, 1]} : vector<16x96xf32> to vector<16x32xf32>
    %177 = vector.extract_strided_slice %172 {offsets = [0, 64], sizes = [16, 32], strides = [1, 1]} : vector<16x96xf32> to vector<16x32xf32>
    %178 = arith.mulf %176, %151 : vector<16x32xf32>
    %179 = arith.mulf %175, %174 : vector<16x32xf32>
    %180 = arith.addf %178, %179 : vector<16x32xf32>
    %181 = math.tanh %180 : vector<16x32xf32>
    %182 = arith.mulf %177, %181 : vector<16x32xf32>
    %c16_i32_56 = arith.constant 16 : i32
    %183 = arith.muli %c5_i32, %c16_i32_56 : i32
    %c0_i32_57 = arith.constant 0 : i32
    %184 = arith.addi %c0_i32_57, %183 : i32
    %185 = tpu.assume_multiple %184, 16 : i32
    %186 = arith.truncf %182 : vector<16x32xf32> to vector<16x32xbf16>
    %187 = arith.index_cast %185 : i32 to index
    %c0_58 = arith.constant 0 : index
    %188 = vector.load %arg12[%187, %c0_58] : memref<128x32xbf16, #tpu.memory_space<vmem>>, vector<16x32xbf16>
    tpu.vector_store %arg12[%187, %c0_58], %186 {strides = array<i32>} : memref<128x32xbf16, #tpu.memory_space<vmem>>, vector<16x32xbf16>,
    %c6_i32 = arith.constant 6 : i32
    %c16_i32_59 = arith.constant 16 : i32
    %189 = arith.muli %c6_i32, %c16_i32_59 : i32
    %190 = tpu.assume_multiple %189, 16 : i32
    %191 = arith.index_cast %190 : i32 to index
    %c0_60 = arith.constant 0 : index
    %192 = vector.load %arg11[%191, %c0_60] : memref<128x128xf32, #tpu.memory_space<vmem>>, vector<16x128xf32>
    %193 = arith.truncf %182 : vector<16x32xf32> to vector<16x32xbf16>
    %cst_61 = arith.constant dense<0.000000e+00> : vector<16x128xf32>
    %194 = tpu.matmul %193, %3, %cst_61 {dimension_numbers = #tpu.dot_dimension_numbers<[1], [0], [0], [1], [0, 0, 1, 1], [], []>} : vector<16x32xbf16>, vector<32x128xbf16>, vector<16x128xf32> -> vector<16x128xf32>
    %195 = arith.addf %192, %194 : vector<16x128xf32>
    %196 = vector.extract_strided_slice %195 {offsets = [0, 0], sizes = [16, 96], strides = [1, 1]} : vector<16x128xf32> to vector<16x96xf32>
    %197 = arith.negf %196 : vector<16x96xf32>
    %198 = math.exp %197 : vector<16x96xf32>
    %cst_62 = arith.constant 1.000000e+00 : f32
    %199 = vector.broadcast %cst_62 : f32 to vector<16x96xf32>
    %200 = arith.addf %199, %198 : vector<16x96xf32>
    %201 = arith.divf %199, %200 : vector<16x96xf32>
    %202 = vector.extract_strided_slice %195 {offsets = [0, 96], sizes = [16, 32], strides = [1, 1]} : vector<16x128xf32> to vector<16x32xf32>
    %203 = math.tanh %202 : vector<16x32xf32>
    %204 = vector.extract_strided_slice %201 {offsets = [0, 0], sizes = [16, 32], strides = [1, 1]} : vector<16x96xf32> to vector<16x32xf32>
    %205 = vector.extract_strided_slice %201 {offsets = [0, 32], sizes = [16, 32], strides = [1, 1]} : vector<16x96xf32> to vector<16x32xf32>
    %206 = vector.extract_strided_slice %201 {offsets = [0, 64], sizes = [16, 32], strides = [1, 1]} : vector<16x96xf32> to vector<16x32xf32>
    %207 = arith.mulf %205, %180 : vector<16x32xf32>
    %208 = arith.mulf %204, %203 : vector<16x32xf32>
    %209 = arith.addf %207, %208 : vector<16x32xf32>
    %210 = math.tanh %209 : vector<16x32xf32>
    %211 = arith.mulf %206, %210 : vector<16x32xf32>
    %c16_i32_63 = arith.constant 16 : i32
    %212 = arith.muli %c6_i32, %c16_i32_63 : i32
    %c0_i32_64 = arith.constant 0 : i32
    %213 = arith.addi %c0_i32_64, %212 : i32
    %214 = tpu.assume_multiple %213, 16 : i32
    %215 = arith.truncf %211 : vector<16x32xf32> to vector<16x32xbf16>
    %216 = arith.index_cast %214 : i32 to index
    %c0_65 = arith.constant 0 : index
    %217 = vector.load %arg12[%216, %c0_65] : memref<128x32xbf16, #tpu.memory_space<vmem>>, vector<16x32xbf16>
    tpu.vector_store %arg12[%216, %c0_65], %215 {strides = array<i32>} : memref<128x32xbf16, #tpu.memory_space<vmem>>, vector<16x32xbf16>,
    %c7_i32 = arith.constant 7 : i32
    %c16_i32_66 = arith.constant 16 : i32
    %218 = arith.muli %c7_i32, %c16_i32_66 : i32
    %219 = tpu.assume_multiple %218, 16 : i32
    %220 = arith.index_cast %219 : i32 to index
    %c0_67 = arith.constant 0 : index
    %221 = vector.load %arg11[%220, %c0_67] : memref<128x128xf32, #tpu.memory_space<vmem>>, vector<16x128xf32>
    %222 = arith.truncf %211 : vector<16x32xf32> to vector<16x32xbf16>
    %cst_68 = arith.constant dense<0.000000e+00> : vector<16x128xf32>
    %223 = tpu.matmul %222, %3, %cst_68 {dimension_numbers = #tpu.dot_dimension_numbers<[1], [0], [0], [1], [0, 0, 1, 1], [], []>} : vector<16x32xbf16>, vector<32x128xbf16>, vector<16x128xf32> -> vector<16x128xf32>
    %224 = arith.addf %221, %223 : vector<16x128xf32>
    %225 = vector.extract_strided_slice %224 {offsets = [0, 0], sizes = [16, 96], strides = [1, 1]} : vector<16x128xf32> to vector<16x96xf32>
    %226 = arith.negf %225 : vector<16x96xf32>
    %227 = math.exp %226 : vector<16x96xf32>
    %cst_69 = arith.constant 1.000000e+00 : f32
    %228 = vector.broadcast %cst_69 : f32 to vector<16x96xf32>
    %229 = arith.addf %228, %227 : vector<16x96xf32>
    %230 = arith.divf %228, %229 : vector<16x96xf32>
    %231 = vector.extract_strided_slice %224 {offsets = [0, 96], sizes = [16, 32], strides = [1, 1]} : vector<16x128xf32> to vector<16x32xf32>
    %232 = math.tanh %231 : vector<16x32xf32>
    %233 = vector.extract_strided_slice %230 {offsets = [0, 0], sizes = [16, 32], strides = [1, 1]} : vector<16x96xf32> to vector<16x32xf32>
    %234 = vector.extract_strided_slice %230 {offsets = [0, 32], sizes = [16, 32], strides = [1, 1]} : vector<16x96xf32> to vector<16x32xf32>
    %235 = vector.extract_strided_slice %230 {offsets = [0, 64], sizes = [16, 32], strides = [1, 1]} : vector<16x96xf32> to vector<16x32xf32>
    %236 = arith.mulf %234, %209 : vector<16x32xf32>
    %237 = arith.mulf %233, %232 : vector<16x32xf32>
    %238 = arith.addf %236, %237 : vector<16x32xf32>
    %239 = math.tanh %238 : vector<16x32xf32>
    %240 = arith.mulf %235, %239 : vector<16x32xf32>
    %c16_i32_70 = arith.constant 16 : i32
    %241 = arith.muli %c7_i32, %c16_i32_70 : i32
    %c0_i32_71 = arith.constant 0 : i32
    %242 = arith.addi %c0_i32_71, %241 : i32
    %243 = tpu.assume_multiple %242, 16 : i32
    %244 = arith.truncf %240 : vector<16x32xf32> to vector<16x32xbf16>
    %245 = arith.index_cast %243 : i32 to index
    %c0_72 = arith.constant 0 : index
    %246 = vector.load %arg12[%245, %c0_72] : memref<128x32xbf16, #tpu.memory_space<vmem>>, vector<16x32xbf16>
    tpu.vector_store %arg12[%245, %c0_72], %244 {strides = array<i32>} : memref<128x32xbf16, #tpu.memory_space<vmem>>, vector<16x32xbf16>,
    %c8_i32 = arith.constant 8 : i32
    %c0_73 = arith.constant 0 : index
    %c0_74 = arith.constant 0 : index
    %c0_75 = arith.constant 0 : index
    %247 = vector.load %arg9[%c0_73, %c0_74, %c0_75] : memref<2x16x32xf32, #tpu.memory_space<vmem>>, vector<1x16x32xf32>
    %248 = vector.shape_cast %247 : vector<1x16x32xf32> to vector<16x32xf32>
    %249 = vector.shape_cast %240 : vector<16x32xf32> to vector<1x16x32xf32>
    tpu.vector_store %arg9[%c0_73, %c0_74, %c0_75], %249 {strides = array<i32>} : memref<2x16x32xf32, #tpu.memory_space<vmem>>, vector<1x16x32xf32>,
    %c0_76 = arith.constant 0 : index
    %c0_77 = arith.constant 0 : index
    %c0_78 = arith.constant 0 : index
    %250 = vector.load %arg10[%c0_76, %c0_77, %c0_78] : memref<2x16x32xf32, #tpu.memory_space<vmem>>, vector<1x16x32xf32>
    %251 = vector.shape_cast %250 : vector<1x16x32xf32> to vector<16x32xf32>
    %252 = vector.shape_cast %238 : vector<16x32xf32> to vector<1x16x32xf32>
    tpu.vector_store %arg10[%c0_76, %c0_77, %c0_78], %252 {strides = array<i32>} : memref<2x16x32xf32, #tpu.memory_space<vmem>>, vector<1x16x32xf32>,
    %c1 = arith.constant 1 : index
    %c0_79 = arith.constant 0 : index
    %c0_80 = arith.constant 0 : index
    %253 = vector.load %arg3[%c1, %c0_79, %c0_80] : memref<2x32x128xbf16, #tpu.memory_space<vmem>>, vector<1x32x128xbf16>
    %254 = vector.shape_cast %253 : vector<1x32x128xbf16> to vector<32x128xbf16>
    %c1_81 = arith.constant 1 : index
    %c0_82 = arith.constant 0 : index
    %c0_83 = arith.constant 0 : index
    %255 = vector.load %arg4[%c1_81, %c0_82, %c0_83] : memref<2x32x128xbf16, #tpu.memory_space<vmem>>, vector<1x32x128xbf16>
    %256 = vector.shape_cast %255 : vector<1x32x128xbf16> to vector<32x128xbf16>
    %c1_84 = arith.constant 1 : index
    %c0_85 = arith.constant 0 : index
    %c0_86 = arith.constant 0 : index
    %257 = vector.load %arg5[%c1_84, %c0_85, %c0_86] : memref<2x1x128xf32, #tpu.memory_space<vmem>>, vector<1x1x128xf32>
    %258 = vector.shape_cast %257 : vector<1x1x128xf32> to vector<1x128xf32>
    %c1_87 = arith.constant 1 : index
    %c0_88 = arith.constant 0 : index
    %c0_89 = arith.constant 0 : index
    %259 = vector.load %arg1[%c1_87, %c0_88, %c0_89] : memref<2x16x32xf32, #tpu.memory_space<vmem>>, vector<1x16x32xf32>
    %260 = vector.shape_cast %259 : vector<1x16x32xf32> to vector<16x32xf32>
    %c1_90 = arith.constant 1 : index
    %c0_91 = arith.constant 0 : index
    %c0_92 = arith.constant 0 : index
    %261 = vector.load %arg2[%c1_90, %c0_91, %c0_92] : memref<2x16x32xf32, #tpu.memory_space<vmem>>, vector<1x16x32xf32>
    %262 = vector.shape_cast %261 : vector<1x16x32xf32> to vector<16x32xf32>
    %c0_93 = arith.constant 0 : index
    %c0_94 = arith.constant 0 : index
    %263 = vector.load %arg12[%c0_93, %c0_94] : memref<128x32xbf16, #tpu.memory_space<vmem>>, vector<128x32xbf16>
    %cst_95 = arith.constant dense<0.000000e+00> : vector<128x128xf32>
    %264 = tpu.matmul %263, %254, %cst_95 {dimension_numbers = #tpu.dot_dimension_numbers<[1], [0], [0], [1], [0, 0, 1, 1], [], []>} : vector<128x32xbf16>, vector<32x128xbf16>, vector<128x128xf32> -> vector<128x128xf32>
    %265 = vector.broadcast %258 : vector<1x128xf32> to vector<128x128xf32>
    %266 = arith.addf %264, %265 : vector<128x128xf32>
    %c0_96 = arith.constant 0 : index
    %c0_97 = arith.constant 0 : index
    %267 = vector.load %arg11[%c0_96, %c0_97] : memref<128x128xf32, #tpu.memory_space<vmem>>, vector<128x128xf32>
    tpu.vector_store %arg11[%c0_96, %c0_97], %266 {strides = array<i32>} : memref<128x128xf32, #tpu.memory_space<vmem>>, vector<128x128xf32>,
    %c0_i32_98 = arith.constant 0 : i32
    %c16_i32_99 = arith.constant 16 : i32
    %268 = arith.muli %c0_i32_98, %c16_i32_99 : i32
    %269 = tpu.assume_multiple %268, 16 : i32
    %270 = arith.index_cast %269 : i32 to index
    %c0_100 = arith.constant 0 : index
    %271 = vector.load %arg11[%270, %c0_100] : memref<128x128xf32, #tpu.memory_space<vmem>>, vector<16x128xf32>
    %272 = arith.truncf %260 : vector<16x32xf32> to vector<16x32xbf16>
    %cst_101 = arith.constant dense<0.000000e+00> : vector<16x128xf32>
    %273 = tpu.matmul %272, %256, %cst_101 {dimension_numbers = #tpu.dot_dimension_numbers<[1], [0], [0], [1], [0, 0, 1, 1], [], []>} : vector<16x32xbf16>, vector<32x128xbf16>, vector<16x128xf32> -> vector<16x128xf32>
    %274 = arith.addf %271, %273 : vector<16x128xf32>
    %275 = vector.extract_strided_slice %274 {offsets = [0, 0], sizes = [16, 96], strides = [1, 1]} : vector<16x128xf32> to vector<16x96xf32>
    %276 = arith.negf %275 : vector<16x96xf32>
    %277 = math.exp %276 : vector<16x96xf32>
    %cst_102 = arith.constant 1.000000e+00 : f32
    %278 = vector.broadcast %cst_102 : f32 to vector<16x96xf32>
    %279 = arith.addf %278, %277 : vector<16x96xf32>
    %280 = arith.divf %278, %279 : vector<16x96xf32>
    %281 = vector.extract_strided_slice %274 {offsets = [0, 96], sizes = [16, 32], strides = [1, 1]} : vector<16x128xf32> to vector<16x32xf32>
    %282 = math.tanh %281 : vector<16x32xf32>
    %283 = vector.extract_strided_slice %280 {offsets = [0, 0], sizes = [16, 32], strides = [1, 1]} : vector<16x96xf32> to vector<16x32xf32>
    %284 = vector.extract_strided_slice %280 {offsets = [0, 32], sizes = [16, 32], strides = [1, 1]} : vector<16x96xf32> to vector<16x32xf32>
    %285 = vector.extract_strided_slice %280 {offsets = [0, 64], sizes = [16, 32], strides = [1, 1]} : vector<16x96xf32> to vector<16x32xf32>
    %286 = arith.mulf %284, %262 : vector<16x32xf32>
    %287 = arith.mulf %283, %282 : vector<16x32xf32>
    %288 = arith.addf %286, %287 : vector<16x32xf32>
    %289 = math.tanh %288 : vector<16x32xf32>
    %290 = arith.mulf %285, %289 : vector<16x32xf32>
    %c1_i32_103 = arith.constant 1 : i32
    %c16_i32_104 = arith.constant 16 : i32
    %291 = arith.muli %c1_i32_103, %c16_i32_104 : i32
    %292 = tpu.assume_multiple %291, 16 : i32
    %293 = arith.index_cast %292 : i32 to index
    %c0_105 = arith.constant 0 : index
    %294 = vector.load %arg11[%293, %c0_105] : memref<128x128xf32, #tpu.memory_space<vmem>>, vector<16x128xf32>
    %295 = arith.truncf %290 : vector<16x32xf32> to vector<16x32xbf16>
    %cst_106 = arith.constant dense<0.000000e+00> : vector<16x128xf32>
    %296 = tpu.matmul %295, %256, %cst_106 {dimension_numbers = #tpu.dot_dimension_numbers<[1], [0], [0], [1], [0, 0, 1, 1], [], []>} : vector<16x32xbf16>, vector<32x128xbf16>, vector<16x128xf32> -> vector<16x128xf32>
    %297 = arith.addf %294, %296 : vector<16x128xf32>
    %298 = vector.extract_strided_slice %297 {offsets = [0, 0], sizes = [16, 96], strides = [1, 1]} : vector<16x128xf32> to vector<16x96xf32>
    %299 = arith.negf %298 : vector<16x96xf32>
    %300 = math.exp %299 : vector<16x96xf32>
    %cst_107 = arith.constant 1.000000e+00 : f32
    %301 = vector.broadcast %cst_107 : f32 to vector<16x96xf32>
    %302 = arith.addf %301, %300 : vector<16x96xf32>
    %303 = arith.divf %301, %302 : vector<16x96xf32>
    %304 = vector.extract_strided_slice %297 {offsets = [0, 96], sizes = [16, 32], strides = [1, 1]} : vector<16x128xf32> to vector<16x32xf32>
    %305 = math.tanh %304 : vector<16x32xf32>
    %306 = vector.extract_strided_slice %303 {offsets = [0, 0], sizes = [16, 32], strides = [1, 1]} : vector<16x96xf32> to vector<16x32xf32>
    %307 = vector.extract_strided_slice %303 {offsets = [0, 32], sizes = [16, 32], strides = [1, 1]} : vector<16x96xf32> to vector<16x32xf32>
    %308 = vector.extract_strided_slice %303 {offsets = [0, 64], sizes = [16, 32], strides = [1, 1]} : vector<16x96xf32> to vector<16x32xf32>
    %309 = arith.mulf %307, %288 : vector<16x32xf32>
    %310 = arith.mulf %306, %305 : vector<16x32xf32>
    %311 = arith.addf %309, %310 : vector<16x32xf32>
    %312 = math.tanh %311 : vector<16x32xf32>
    %313 = arith.mulf %308, %312 : vector<16x32xf32>
    %c2_i32_108 = arith.constant 2 : i32
    %c16_i32_109 = arith.constant 16 : i32
    %314 = arith.muli %c2_i32_108, %c16_i32_109 : i32
    %315 = tpu.assume_multiple %314, 16 : i32
    %316 = arith.index_cast %315 : i32 to index
    %c0_110 = arith.constant 0 : index
    %317 = vector.load %arg11[%316, %c0_110] : memref<128x128xf32, #tpu.memory_space<vmem>>, vector<16x128xf32>
    %318 = arith.truncf %313 : vector<16x32xf32> to vector<16x32xbf16>
    %cst_111 = arith.constant dense<0.000000e+00> : vector<16x128xf32>
    %319 = tpu.matmul %318, %256, %cst_111 {dimension_numbers = #tpu.dot_dimension_numbers<[1], [0], [0], [1], [0, 0, 1, 1], [], []>} : vector<16x32xbf16>, vector<32x128xbf16>, vector<16x128xf32> -> vector<16x128xf32>
    %320 = arith.addf %317, %319 : vector<16x128xf32>
    %321 = vector.extract_strided_slice %320 {offsets = [0, 0], sizes = [16, 96], strides = [1, 1]} : vector<16x128xf32> to vector<16x96xf32>
    %322 = arith.negf %321 : vector<16x96xf32>
    %323 = math.exp %322 : vector<16x96xf32>
    %cst_112 = arith.constant 1.000000e+00 : f32
    %324 = vector.broadcast %cst_112 : f32 to vector<16x96xf32>
    %325 = arith.addf %324, %323 : vector<16x96xf32>
    %326 = arith.divf %324, %325 : vector<16x96xf32>
    %327 = vector.extract_strided_slice %320 {offsets = [0, 96], sizes = [16, 32], strides = [1, 1]} : vector<16x128xf32> to vector<16x32xf32>
    %328 = math.tanh %327 : vector<16x32xf32>
    %329 = vector.extract_strided_slice %326 {offsets = [0, 0], sizes = [16, 32], strides = [1, 1]} : vector<16x96xf32> to vector<16x32xf32>
    %330 = vector.extract_strided_slice %326 {offsets = [0, 32], sizes = [16, 32], strides = [1, 1]} : vector<16x96xf32> to vector<16x32xf32>
    %331 = vector.extract_strided_slice %326 {offsets = [0, 64], sizes = [16, 32], strides = [1, 1]} : vector<16x96xf32> to vector<16x32xf32>
    %332 = arith.mulf %330, %311 : vector<16x32xf32>
    %333 = arith.mulf %329, %328 : vector<16x32xf32>
    %334 = arith.addf %332, %333 : vector<16x32xf32>
    %335 = math.tanh %334 : vector<16x32xf32>
    %336 = arith.mulf %331, %335 : vector<16x32xf32>
    %c3_i32_113 = arith.constant 3 : i32
    %c16_i32_114 = arith.constant 16 : i32
    %337 = arith.muli %c3_i32_113, %c16_i32_114 : i32
    %338 = tpu.assume_multiple %337, 16 : i32
    %339 = arith.index_cast %338 : i32 to index
    %c0_115 = arith.constant 0 : index
    %340 = vector.load %arg11[%339, %c0_115] : memref<128x128xf32, #tpu.memory_space<vmem>>, vector<16x128xf32>
    %341 = arith.truncf %336 : vector<16x32xf32> to vector<16x32xbf16>
    %cst_116 = arith.constant dense<0.000000e+00> : vector<16x128xf32>
    %342 = tpu.matmul %341, %256, %cst_116 {dimension_numbers = #tpu.dot_dimension_numbers<[1], [0], [0], [1], [0, 0, 1, 1], [], []>} : vector<16x32xbf16>, vector<32x128xbf16>, vector<16x128xf32> -> vector<16x128xf32>
    %343 = arith.addf %340, %342 : vector<16x128xf32>
    %344 = vector.extract_strided_slice %343 {offsets = [0, 0], sizes = [16, 96], strides = [1, 1]} : vector<16x128xf32> to vector<16x96xf32>
    %345 = arith.negf %344 : vector<16x96xf32>
    %346 = math.exp %345 : vector<16x96xf32>
    %cst_117 = arith.constant 1.000000e+00 : f32
    %347 = vector.broadcast %cst_117 : f32 to vector<16x96xf32>
    %348 = arith.addf %347, %346 : vector<16x96xf32>
    %349 = arith.divf %347, %348 : vector<16x96xf32>
    %350 = vector.extract_strided_slice %343 {offsets = [0, 96], sizes = [16, 32], strides = [1, 1]} : vector<16x128xf32> to vector<16x32xf32>
    %351 = math.tanh %350 : vector<16x32xf32>
    %352 = vector.extract_strided_slice %349 {offsets = [0, 0], sizes = [16, 32], strides = [1, 1]} : vector<16x96xf32> to vector<16x32xf32>
    %353 = vector.extract_strided_slice %349 {offsets = [0, 32], sizes = [16, 32], strides = [1, 1]} : vector<16x96xf32> to vector<16x32xf32>
    %354 = vector.extract_strided_slice %349 {offsets = [0, 64], sizes = [16, 32], strides = [1, 1]} : vector<16x96xf32> to vector<16x32xf32>
    %355 = arith.mulf %353, %334 : vector<16x32xf32>
    %356 = arith.mulf %352, %351 : vector<16x32xf32>
    %357 = arith.addf %355, %356 : vector<16x32xf32>
    %358 = math.tanh %357 : vector<16x32xf32>
    %359 = arith.mulf %354, %358 : vector<16x32xf32>
    %c4_i32_118 = arith.constant 4 : i32
    %c16_i32_119 = arith.constant 16 : i32
    %360 = arith.muli %c4_i32_118, %c16_i32_119 : i32
    %361 = tpu.assume_multiple %360, 16 : i32
    %362 = arith.index_cast %361 : i32 to index
    %c0_120 = arith.constant 0 : index
    %363 = vector.load %arg11[%362, %c0_120] : memref<128x128xf32, #tpu.memory_space<vmem>>, vector<16x128xf32>
    %364 = arith.truncf %359 : vector<16x32xf32> to vector<16x32xbf16>
    %cst_121 = arith.constant dense<0.000000e+00> : vector<16x128xf32>
    %365 = tpu.matmul %364, %256, %cst_121 {dimension_numbers = #tpu.dot_dimension_numbers<[1], [0], [0], [1], [0, 0, 1, 1], [], []>} : vector<16x32xbf16>, vector<32x128xbf16>, vector<16x128xf32> -> vector<16x128xf32>
    %366 = arith.addf %363, %365 : vector<16x128xf32>
    %367 = vector.extract_strided_slice %366 {offsets = [0, 0], sizes = [16, 96], strides = [1, 1]} : vector<16x128xf32> to vector<16x96xf32>
    %368 = arith.negf %367 : vector<16x96xf32>
    %369 = math.exp %368 : vector<16x96xf32>
    %cst_122 = arith.constant 1.000000e+00 : f32
    %370 = vector.broadcast %cst_122 : f32 to vector<16x96xf32>
    %371 = arith.addf %370, %369 : vector<16x96xf32>
    %372 = arith.divf %370, %371 : vector<16x96xf32>
    %373 = vector.extract_strided_slice %366 {offsets = [0, 96], sizes = [16, 32], strides = [1, 1]} : vector<16x128xf32> to vector<16x32xf32>
    %374 = math.tanh %373 : vector<16x32xf32>
    %375 = vector.extract_strided_slice %372 {offsets = [0, 0], sizes = [16, 32], strides = [1, 1]} : vector<16x96xf32> to vector<16x32xf32>
    %376 = vector.extract_strided_slice %372 {offsets = [0, 32], sizes = [16, 32], strides = [1, 1]} : vector<16x96xf32> to vector<16x32xf32>
    %377 = vector.extract_strided_slice %372 {offsets = [0, 64], sizes = [16, 32], strides = [1, 1]} : vector<16x96xf32> to vector<16x32xf32>
    %378 = arith.mulf %376, %357 : vector<16x32xf32>
    %379 = arith.mulf %375, %374 : vector<16x32xf32>
    %380 = arith.addf %378, %379 : vector<16x32xf32>
    %381 = math.tanh %380 : vector<16x32xf32>
    %382 = arith.mulf %377, %381 : vector<16x32xf32>
    %c5_i32_123 = arith.constant 5 : i32
    %c16_i32_124 = arith.constant 16 : i32
    %383 = arith.muli %c5_i32_123, %c16_i32_124 : i32
    %384 = tpu.assume_multiple %383, 16 : i32
    %385 = arith.index_cast %384 : i32 to index
    %c0_125 = arith.constant 0 : index
    %386 = vector.load %arg11[%385, %c0_125] : memref<128x128xf32, #tpu.memory_space<vmem>>, vector<16x128xf32>
    %387 = arith.truncf %382 : vector<16x32xf32> to vector<16x32xbf16>
    %cst_126 = arith.constant dense<0.000000e+00> : vector<16x128xf32>
    %388 = tpu.matmul %387, %256, %cst_126 {dimension_numbers = #tpu.dot_dimension_numbers<[1], [0], [0], [1], [0, 0, 1, 1], [], []>} : vector<16x32xbf16>, vector<32x128xbf16>, vector<16x128xf32> -> vector<16x128xf32>
    %389 = arith.addf %386, %388 : vector<16x128xf32>
    %390 = vector.extract_strided_slice %389 {offsets = [0, 0], sizes = [16, 96], strides = [1, 1]} : vector<16x128xf32> to vector<16x96xf32>
    %391 = arith.negf %390 : vector<16x96xf32>
    %392 = math.exp %391 : vector<16x96xf32>
    %cst_127 = arith.constant 1.000000e+00 : f32
    %393 = vector.broadcast %cst_127 : f32 to vector<16x96xf32>
    %394 = arith.addf %393, %392 : vector<16x96xf32>
    %395 = arith.divf %393, %394 : vector<16x96xf32>
    %396 = vector.extract_strided_slice %389 {offsets = [0, 96], sizes = [16, 32], strides = [1, 1]} : vector<16x128xf32> to vector<16x32xf32>
    %397 = math.tanh %396 : vector<16x32xf32>
    %398 = vector.extract_strided_slice %395 {offsets = [0, 0], sizes = [16, 32], strides = [1, 1]} : vector<16x96xf32> to vector<16x32xf32>
    %399 = vector.extract_strided_slice %395 {offsets = [0, 32], sizes = [16, 32], strides = [1, 1]} : vector<16x96xf32> to vector<16x32xf32>
    %400 = vector.extract_strided_slice %395 {offsets = [0, 64], sizes = [16, 32], strides = [1, 1]} : vector<16x96xf32> to vector<16x32xf32>
    %401 = arith.mulf %399, %380 : vector<16x32xf32>
    %402 = arith.mulf %398, %397 : vector<16x32xf32>
    %403 = arith.addf %401, %402 : vector<16x32xf32>
    %404 = math.tanh %403 : vector<16x32xf32>
    %405 = arith.mulf %400, %404 : vector<16x32xf32>
    %c6_i32_128 = arith.constant 6 : i32
    %c16_i32_129 = arith.constant 16 : i32
    %406 = arith.muli %c6_i32_128, %c16_i32_129 : i32
    %407 = tpu.assume_multiple %406, 16 : i32
    %408 = arith.index_cast %407 : i32 to index
    %c0_130 = arith.constant 0 : index
    %409 = vector.load %arg11[%408, %c0_130] : memref<128x128xf32, #tpu.memory_space<vmem>>, vector<16x128xf32>
    %410 = arith.truncf %405 : vector<16x32xf32> to vector<16x32xbf16>
    %cst_131 = arith.constant dense<0.000000e+00> : vector<16x128xf32>
    %411 = tpu.matmul %410, %256, %cst_131 {dimension_numbers = #tpu.dot_dimension_numbers<[1], [0], [0], [1], [0, 0, 1, 1], [], []>} : vector<16x32xbf16>, vector<32x128xbf16>, vector<16x128xf32> -> vector<16x128xf32>
    %412 = arith.addf %409, %411 : vector<16x128xf32>
    %413 = vector.extract_strided_slice %412 {offsets = [0, 0], sizes = [16, 96], strides = [1, 1]} : vector<16x128xf32> to vector<16x96xf32>
    %414 = arith.negf %413 : vector<16x96xf32>
    %415 = math.exp %414 : vector<16x96xf32>
    %cst_132 = arith.constant 1.000000e+00 : f32
    %416 = vector.broadcast %cst_132 : f32 to vector<16x96xf32>
    %417 = arith.addf %416, %415 : vector<16x96xf32>
    %418 = arith.divf %416, %417 : vector<16x96xf32>
    %419 = vector.extract_strided_slice %412 {offsets = [0, 96], sizes = [16, 32], strides = [1, 1]} : vector<16x128xf32> to vector<16x32xf32>
    %420 = math.tanh %419 : vector<16x32xf32>
    %421 = vector.extract_strided_slice %418 {offsets = [0, 0], sizes = [16, 32], strides = [1, 1]} : vector<16x96xf32> to vector<16x32xf32>
    %422 = vector.extract_strided_slice %418 {offsets = [0, 32], sizes = [16, 32], strides = [1, 1]} : vector<16x96xf32> to vector<16x32xf32>
    %423 = vector.extract_strided_slice %418 {offsets = [0, 64], sizes = [16, 32], strides = [1, 1]} : vector<16x96xf32> to vector<16x32xf32>
    %424 = arith.mulf %422, %403 : vector<16x32xf32>
    %425 = arith.mulf %421, %420 : vector<16x32xf32>
    %426 = arith.addf %424, %425 : vector<16x32xf32>
    %427 = math.tanh %426 : vector<16x32xf32>
    %428 = arith.mulf %423, %427 : vector<16x32xf32>
    %c7_i32_133 = arith.constant 7 : i32
    %c16_i32_134 = arith.constant 16 : i32
    %429 = arith.muli %c7_i32_133, %c16_i32_134 : i32
    %430 = tpu.assume_multiple %429, 16 : i32
    %431 = arith.index_cast %430 : i32 to index
    %c0_135 = arith.constant 0 : index
    %432 = vector.load %arg11[%431, %c0_135] : memref<128x128xf32, #tpu.memory_space<vmem>>, vector<16x128xf32>
    %433 = arith.truncf %428 : vector<16x32xf32> to vector<16x32xbf16>
    %cst_136 = arith.constant dense<0.000000e+00> : vector<16x128xf32>
    %434 = tpu.matmul %433, %256, %cst_136 {dimension_numbers = #tpu.dot_dimension_numbers<[1], [0], [0], [1], [0, 0, 1, 1], [], []>} : vector<16x32xbf16>, vector<32x128xbf16>, vector<16x128xf32> -> vector<16x128xf32>
    %435 = arith.addf %432, %434 : vector<16x128xf32>
    %436 = vector.extract_strided_slice %435 {offsets = [0, 0], sizes = [16, 96], strides = [1, 1]} : vector<16x128xf32> to vector<16x96xf32>
    %437 = arith.negf %436 : vector<16x96xf32>
    %438 = math.exp %437 : vector<16x96xf32>
    %cst_137 = arith.constant 1.000000e+00 : f32
    %439 = vector.broadcast %cst_137 : f32 to vector<16x96xf32>
    %440 = arith.addf %439, %438 : vector<16x96xf32>
    %441 = arith.divf %439, %440 : vector<16x96xf32>
    %442 = vector.extract_strided_slice %435 {offsets = [0, 96], sizes = [16, 32], strides = [1, 1]} : vector<16x128xf32> to vector<16x32xf32>
    %443 = math.tanh %442 : vector<16x32xf32>
    %444 = vector.extract_strided_slice %441 {offsets = [0, 0], sizes = [16, 32], strides = [1, 1]} : vector<16x96xf32> to vector<16x32xf32>
    %445 = vector.extract_strided_slice %441 {offsets = [0, 32], sizes = [16, 32], strides = [1, 1]} : vector<16x96xf32> to vector<16x32xf32>
    %446 = vector.extract_strided_slice %441 {offsets = [0, 64], sizes = [16, 32], strides = [1, 1]} : vector<16x96xf32> to vector<16x32xf32>
    %447 = arith.mulf %445, %426 : vector<16x32xf32>
    %448 = arith.mulf %444, %443 : vector<16x32xf32>
    %449 = arith.addf %447, %448 : vector<16x32xf32>
    %450 = math.tanh %449 : vector<16x32xf32>
    %451 = arith.mulf %446, %450 : vector<16x32xf32>
    %c8_i32_138 = arith.constant 8 : i32
    %c1_139 = arith.constant 1 : index
    %c0_140 = arith.constant 0 : index
    %c0_141 = arith.constant 0 : index
    %452 = vector.load %arg9[%c1_139, %c0_140, %c0_141] : memref<2x16x32xf32, #tpu.memory_space<vmem>>, vector<1x16x32xf32>
    %453 = vector.shape_cast %452 : vector<1x16x32xf32> to vector<16x32xf32>
    %454 = vector.shape_cast %451 : vector<16x32xf32> to vector<1x16x32xf32>
    tpu.vector_store %arg9[%c1_139, %c0_140, %c0_141], %454 {strides = array<i32>} : memref<2x16x32xf32, #tpu.memory_space<vmem>>, vector<1x16x32xf32>,
    %c1_142 = arith.constant 1 : index
    %c0_143 = arith.constant 0 : index
    %c0_144 = arith.constant 0 : index
    %455 = vector.load %arg10[%c1_142, %c0_143, %c0_144] : memref<2x16x32xf32, #tpu.memory_space<vmem>>, vector<1x16x32xf32>
    %456 = vector.shape_cast %455 : vector<1x16x32xf32> to vector<16x32xf32>
    %457 = vector.shape_cast %449 : vector<16x32xf32> to vector<1x16x32xf32>
    tpu.vector_store %arg10[%c1_142, %c0_143, %c0_144], %457 {strides = array<i32>} : memref<2x16x32xf32, #tpu.memory_space<vmem>>, vector<1x16x32xf32>,
    %458 = arith.truncf %451 : vector<16x32xf32> to vector<16x32xbf16>
    %c0_145 = arith.constant 0 : index
    %c0_146 = arith.constant 0 : index
    %459 = vector.load %arg6[%c0_145, %c0_146] : memref<32x1xbf16, #tpu.memory_space<vmem>>, vector<32x1xbf16>
    %cst_147 = arith.constant dense<0.000000e+00> : vector<16x1xf32>
    %460 = tpu.matmul %458, %459, %cst_147 {dimension_numbers = #tpu.dot_dimension_numbers<[1], [0], [0], [1], [0, 0, 1, 1], [], []>} : vector<16x32xbf16>, vector<32x1xbf16>, vector<16x1xf32> -> vector<16x1xf32>
    %c0_148 = arith.constant 0 : index
    %c0_149 = arith.constant 0 : index
    %461 = vector.load %arg7[%c0_148, %c0_149] : memref<1x1xf32, #tpu.memory_space<vmem>>, vector<1x1xf32>
    %462 = vector.broadcast %461 : vector<1x1xf32> to vector<16x1xf32>
    %463 = arith.addf %460, %462 : vector<16x1xf32>
    %464 = arith.negf %463 : vector<16x1xf32>
    %465 = math.exp %464 : vector<16x1xf32>
    %cst_150 = arith.constant 1.000000e+00 : f32
    %466 = vector.broadcast %cst_150 : f32 to vector<16x1xf32>
    %467 = arith.addf %466, %465 : vector<16x1xf32>
    %468 = arith.divf %466, %467 : vector<16x1xf32>
    %c0_151 = arith.constant 0 : index
    %c0_152 = arith.constant 0 : index
    %469 = vector.load %arg8[%c0_151, %c0_152] : memref<16x1xf32, #tpu.memory_space<vmem>>, vector<16x1xf32>
    tpu.vector_store %arg8[%c0_151, %c0_152], %468 {strides = array<i32>} : memref<16x1xf32, #tpu.memory_space<vmem>>, vector<16x1xf32>,
    return
  }
}

</mosaic_0001>

<llo_original>
// kernel: tpu_custom_call.1
$region0: #{tpu_custom_call.1}
  #allocation0 [shape = 'u32[]', space=smem, size = 0x4, offset = 0x4, fixed_abs, tag = 'smem constant byte address 0x4 - core index']
  #allocation1 [shape = 'u32[144,128]{1,0:T(1,128)}', space=vmem, size = 0x12000, scoped, tag = 'internal scratch']
  #allocation2 [shape = 'f32[128,128]{1,0:T(8,128)}', space=vmem, size = 0x10000, scoped, tag = 'scratch operand']
  #allocation3 [shape = 'bf16[128,32]{1,0:T(8,128)(2,1)}', space=vmem, size = 0x8000, scoped, tag = 'scratch operand']
  #allocation4 [shape = 'f32[1,1]{1,0:T(1,128)S(1)}', space=vmem, size = 0x200, scoped, tag = 'scoped memory for tpu_custom_call.1']
  %s0 = inlined_call_operand.vmem [shape: bf16[128,32], index: 0, kind: input, shape index: {}]
  %s1 = inlined_call_operand.vmem [shape: f32[2,16,32], index: 1, kind: input, shape index: {}]
  %s2 = inlined_call_operand.vmem [shape: f32[2,16,32], index: 2, kind: input, shape index: {}]
  %s3 = inlined_call_operand.vmem [shape: bf16[2,32,128], index: 3, kind: input, shape index: {}]
  %s4 = inlined_call_operand.hbm [shape: bf16[2,32,128], index: 4, kind: input, shape index: {}]
  %s5 = inlined_call_operand.vmem [shape: f32[2,1,128], index: 5, kind: input, shape index: {}]
  %s6 = inlined_call_operand.vmem [shape: bf16[32,1], index: 6, kind: input, shape index: {}]
  %s7 = inlined_call_operand.<no memory space> [shape: f32[1,1], index: 7, kind: input, shape index: {}]
  %s8 = inlined_call_operand.vmem [shape: f32[16,1], index: 8, kind: output, shape index: {0}]
  %s9 = inlined_call_operand.hbm [shape: f32[2,16,32], index: 9, kind: output, shape index: {1}]
  %s10 = inlined_call_operand.hbm [shape: f32[2,16,32], index: 10, kind: output, shape index: {2}]
  %11 = xla_tuple %s8, %s9, %s10
  %s12 = sld [smem:[#allocation0]]
  $region62: #{tpu_custom_call.1} parent=0
    _
  %s14 = ssub.s32 1, %s12
  %s15 = scalar_select 0, %s14, %s12
  %v16 = vstv %s7
  %17 = vst [vmem:[#allocation4] sm:$0x1] %v16
  $region1: #{tpu_custom_call.1} parent=0
    #allocation5 [shape = 'u8[16384]{0}', space=vmem, size = 0x4000, scoped, tag = 'input window, operand 4, single buffered']
    #allocation6 [shape = 's32[1]{0}', space=sflag, size = 0x4, scoped, tag = 'scoped memory for tpu_custom_call.1']
    #allocation7 [shape = 's32[1]{0}', space=sflag, size = 0x4, scoped, tag = 'scoped memory for tpu_custom_call.1']
    #allocation8 [shape = 'u8[16384]{0}', space=vmem, size = 0x4000, scoped, tag = 'output window, operand 1, single buffered']
    #allocation9 [shape = 'u8[16384]{0}', space=vmem, size = 0x4000, scoped, tag = 'output window, operand 2, single buffered']
    #allocation10 [shape = 's32[1]{0}', space=sflag, size = 0x4, scoped, tag = 'scoped memory for tpu_custom_call.1']
    %18 = vsyncpa [#allocation6], 0
    %19 = vsyncpa [#allocation7], 0
    %20 = vsyncpa [#allocation10], 0
    // Predicated region
    $region2: #{tpu_custom_call.1} parent=1 // pred_check
      _
    $region3: #{tpu_custom_call.1} parent=1 // pred_check_branch
      %22 = sbr.rel (0) target = $region5
    $region4: #{tpu_custom_call.1} parent=1 // pred_region
      _
    $region5: #{tpu_custom_call.1} parent=1 // pred_fallthru
      _
    // Predicated region
    $region6: #{tpu_custom_call.1} parent=1 // pred_check
      _
    $region7: #{tpu_custom_call.1} parent=1 // pred_check_branch
      %24 = sbr.rel (0) target = $region9
    $region8: #{tpu_custom_call.1} parent=1 // pred_region
      _
    $region9: #{tpu_custom_call.1} parent=1 // pred_fallthru
      _
    // Predicated region
    $region10: #{tpu_custom_call.1} parent=1 // pred_check
      _
    $region11: #{tpu_custom_call.1} parent=1 // pred_check_branch
      %26 = sbr.rel (0) target = $region13
    $region12: #{tpu_custom_call.1} parent=1 // pred_region
      _
    $region13: #{tpu_custom_call.1} parent=1 // pred_fallthru
      _
    // Predicated region
    $region14: #{tpu_custom_call.1} parent=1 // pred_check
      _
    $region15: #{tpu_custom_call.1} parent=1 // pred_check_branch
      %28 = sbr.rel (0) target = $region17
    $region16: #{tpu_custom_call.1} parent=1 // pred_region
      _
    $region17: #{tpu_custom_call.1} parent=1 // pred_fallthru
      _
    // Predicated region
    $region18: #{tpu_custom_call.1} parent=1 // pred_check
      _
    $region19: #{tpu_custom_call.1} parent=1 // pred_check_branch
      %30 = sbr.rel (0) target = $region21
    $region20: #{tpu_custom_call.1} parent=1 // pred_region
      %s32 = ssub.s32 512, 512
      %33 = vsyncadd [#allocation6], %s32
      %s34 = sshll.u32 [#allocation5], 4
      %s35 = int_to_ptr.vmem [resolvable:$true] %s34
      %40 = dma.hbm_to_vmem [thread:$0]  %s4, 512, %s35, [#allocation6], 64, 64, 4
    $region21: #{tpu_custom_call.1} parent=1 // pred_fallthru
      _
    // Predicated region
    $region22: #{tpu_custom_call.1} parent=1 // pred_check
      _
    $region23: #{tpu_custom_call.1} parent=1 // pred_check_branch
      %42 = sbr.rel (0) target = $region25
    $region24: #{tpu_custom_call.1} parent=1 // pred_region
      _
    $region25: #{tpu_custom_call.1} parent=1 // pred_fallthru
      _
    // Predicated region
    $region26: #{tpu_custom_call.1} parent=1 // pred_check
      _
    $region27: #{tpu_custom_call.1} parent=1 // pred_check_branch
      %44 = sbr.rel (0) target = $region29
    $region28: #{tpu_custom_call.1} parent=1 // pred_region
      _
    $region29: #{tpu_custom_call.1} parent=1 // pred_fallthru
      _
    // Predicated region
    $region30: #{tpu_custom_call.1} parent=1 // pred_check
      _
    $region31: #{tpu_custom_call.1} parent=1 // pred_check_branch
      %46 = sbr.rel (0) target = $region33
    $region32: #{tpu_custom_call.1} parent=1 // pred_region
      _
    $region33: #{tpu_custom_call.1} parent=1 // pred_fallthru
      _
    // Predicated region
    $region34: #{tpu_custom_call.1} parent=1 // pred_check
      _
    $region35: #{tpu_custom_call.1} parent=1 // pred_check_branch
      %48 = sbr.rel (0) target = $region37
    $region36: #{tpu_custom_call.1} parent=1 // pred_region
      %49 = dma.done [#allocation6], 512
    $region37: #{tpu_custom_call.1} parent=1 // pred_fallthru
      _
    %v51 = vld [vmem:[%s3] sm:$0xf]
    %v52 = vld [vmem:[%s3 + $0x4] sm:$0xf]
    %v53 = vld [vmem:[%s3 + $0x8] sm:$0xf]
    %v54 = vld [vmem:[%s3 + $0xc] sm:$0xf]
    %v55 = vld [vmem:[#allocation5] sm:$0xf]
    %v56 = vld [vmem:[#allocation5 + $0x4] sm:$0xf]
    %v57 = vld [vmem:[#allocation5 + $0x8] sm:$0xf]
    %v58 = vld [vmem:[#allocation5 + $0xc] sm:$0xf]
    %v59 = vld [vmem:[%s5] sm:$0x1]
    %v60 = vld [vmem:[%s1] sm:$0xff]
    %v61 = vld [vmem:[%s1 + $0x8] sm:$0xff]
    %v62 = vld [vmem:[%s2] sm:$0xff]
    %v63 = vld [vmem:[%s2 + $0x8] sm:$0xff]
    %v64 = vld [vmem:[%s0] sm:$0xf]
    %v65 = vld [vmem:[%s0 + $0x4] sm:$0xf]
    %v66 = vld [vmem:[%s0 + $0x8] sm:$0xf]
    %v67 = vld [vmem:[%s0 + $0xc] sm:$0xf]
    %v68 = vld [vmem:[%s0 + $0x10] sm:$0xf]
    %v69 = vld [vmem:[%s0 + $0x14] sm:$0xf]
    %v70 = vld [vmem:[%s0 + $0x18] sm:$0xf]
    %v71 = vld [vmem:[%s0 + $0x1c] sm:$0xf]
    %v72 = vld [vmem:[%s0 + $0x20] sm:$0xf]
    %v73 = vld [vmem:[%s0 + $0x24] sm:$0xf]
    %v74 = vld [vmem:[%s0 + $0x28] sm:$0xf]
    %v75 = vld [vmem:[%s0 + $0x2c] sm:$0xf]
    %v76 = vld [vmem:[%s0 + $0x30] sm:$0xf]
    %v77 = vld [vmem:[%s0 + $0x34] sm:$0xf]
    %v78 = vld [vmem:[%s0 + $0x38] sm:$0xf]
    %v79 = vld [vmem:[%s0 + $0x3c] sm:$0xf]
    %v81 = vlaneseq
    %v82 = vshrl.u32 %v81, 7
    %v83 = vsub.s32 0, %v82
    %v84 = vrot.slane %v59, %v83
    %v102 = vunpack.c.l.b16 %v64
    %v103 = vunpack.c.l.b16 %v65
    %v104 = vunpack.c.l.b16 %v66
    %v105 = vunpack.c.l.b16 %v67
    %v106 = vunpack.c.l.b16 %v68
    %v107 = vunpack.c.l.b16 %v69
    %v108 = vunpack.c.l.b16 %v70
    %v109 = vunpack.c.l.b16 %v71
    %v110 = vunpack.c.l.b16 %v72
    %v111 = vunpack.c.l.b16 %v73
    %v112 = vunpack.c.l.b16 %v74
    %v113 = vunpack.c.l.b16 %v75
    %v114 = vunpack.c.l.b16 %v76
    %v115 = vunpack.c.l.b16 %v77
    %v116 = vunpack.c.l.b16 %v78
    %v117 = vunpack.c.l.b16 %v79
    %v118 = vpack.c.b16 %v103, %v102
    %v119 = vpack.c.b16 %v105, %v104
    %v120 = vpack.c.b16 %v107, %v106
    %v121 = vpack.c.b16 %v109, %v108
    %v122 = vpack.c.b16 %v111, %v110
    %v123 = vpack.c.b16 %v113, %v112
    %v124 = vpack.c.b16 %v115, %v114
    %v125 = vpack.c.b16 %v117, %v116
    %v130 = vunpack.c.l.b16 %v51
    %v131 = vunpack.c.l.b16 %v52
    %v132 = vunpack.c.l.b16 %v53
    %v133 = vunpack.c.l.b16 %v54
    %v134 = vpack.c.b16 %v131, %v130
    %v135 = vpack.c.b16 %v133, %v132
    %vm138 = vcmask 261120
    %v140 = vsel %vm138, %v118, 0
    %v143 = vsel %vm138, %v119, 0
    %v146 = vsel %vm138, %v120, 0
    %v149 = vsel %vm138, %v121, 0
    %v152 = vsel %vm138, %v122, 0
    %v155 = vsel %vm138, %v123, 0
    %v158 = vsel %vm138, %v124, 0
    %v161 = vsel %vm138, %v125, 0
    %163 = vmatprep.subr.bf16.mxu0 0
    %164 = vmatpush1.bf16.msra.mxu0 0
    %165 = vmatprep.subr.bf16.mxu0 0
    %166 = vmatpush1.bf16.msra.mxu0 0
    %167 = vmatprep.subr.bf16.mxu0 0
    %168 = vmatpush1.bf16.msra.mxu0 0
    %169 = vmatprep.subr.bf16.mxu0 0
    %170 = vmatpush1.bf16.msra.mxu0 0
    %171 = vmatprep.subr.bf16.mxu0 0
    %172 = vmatpush1.bf16.msra.mxu0 0
    %173 = vmatprep.subr.bf16.mxu0 0
    %174 = vmatpush1.bf16.msra.mxu0 0
    %175 = vmatprep.subr.bf16.mxu0 0
    %176 = vmatpush1.bf16.msra.mxu0 %v135
    %177 = vmatprep.subr.bf16.mxu0 0
    %178 = vmatpush1.bf16.msra.mxu0 %v134
    %179 = vmatprep.subr.bf16.mxu0 0
    %180 = vmatpush2.bf16.msra.mxu0 0
    %181 = vmatprep.subr.bf16.mxu0 0
    %182 = vmatpush2.bf16.msra.mxu0 0
    %183 = vmatprep.subr.bf16.mxu0 0
    %184 = vmatpush2.bf16.msra.mxu0 0
    %185 = vmatprep.subr.bf16.mxu0 0
    %186 = vmatpush2.bf16.msra.mxu0 0
    %187 = vmatprep.subr.bf16.mxu0 0
    %188 = vmatpush2.bf16.msra.mxu0 0
    %189 = vmatprep.subr.bf16.mxu0 0
    %190 = vmatpush2.bf16.msra.mxu0 0
    %191 = vmatprep.subr.bf16.mxu0 0
    %192 = vmatpush2.bf16.msra.mxu0 0
    %193 = vmatprep.subr.bf16.mxu0 0
    %194 = vmatpush2.bf16.msra.mxu0 0
    %195 = vmatprep.mubr.bf16.mxu0 0
    %196 = vmatmul.mubr.bf16.gmra.mxu0 %v140
    %v197 = vpop.f32.mrf.mxu0
    %v198 = vadd.f32 %v84, %v197
    %v199 = vpop.f32.mrf.mxu0
    %v200 = vpop.f32.mrf.mxu0
    %v201 = vadd.f32 %v84, %v200
    %v202 = vpop.f32.mrf.mxu0
    %203 = vmatprep.mubr.bf16.mxu0 0
    %204 = vmatmul.mubr.bf16.gmra.mxu0 %v143
    %v205 = vpop.f32.mrf.mxu0
    %v206 = vadd.f32 %v84, %v205
    %v207 = vpop.f32.mrf.mxu0
    %v208 = vpop.f32.mrf.mxu0
    %v209 = vadd.f32 %v84, %v208
    %v210 = vpop.f32.mrf.mxu0
    %211 = vmatprep.mubr.bf16.mxu0 0
    %212 = vmatmul.mubr.bf16.gmra.mxu0 %v146
    %v213 = vpop.f32.mrf.mxu0
    %v214 = vadd.f32 %v84, %v213
    %v215 = vpop.f32.mrf.mxu0
    %v216 = vpop.f32.mrf.mxu0
    %v217 = vadd.f32 %v84, %v216
    %v218 = vpop.f32.mrf.mxu0
    %219 = vmatprep.mubr.bf16.mxu0 0
    %220 = vmatmul.mubr.bf16.gmra.mxu0 %v149
    %v221 = vpop.f32.mrf.mxu0
    %v222 = vadd.f32 %v84, %v221
    %v223 = vpop.f32.mrf.mxu0
    %v224 = vpop.f32.mrf.mxu0
    %v225 = vadd.f32 %v84, %v224
    %v226 = vpop.f32.mrf.mxu0
    %227 = vmatprep.mubr.bf16.mxu0 0
    %228 = vmatmul.mubr.bf16.gmra.mxu0 %v152
    %v229 = vpop.f32.mrf.mxu0
    %v230 = vadd.f32 %v84, %v229
    %v231 = vpop.f32.mrf.mxu0
    %v232 = vpop.f32.mrf.mxu0
    %v233 = vadd.f32 %v84, %v232
    %v234 = vpop.f32.mrf.mxu0
    %235 = vmatprep.mubr.bf16.mxu0 0
    %236 = vmatmul.mubr.bf16.gmra.mxu0 %v155
    %v237 = vpop.f32.mrf.mxu0
    %v238 = vadd.f32 %v84, %v237
    %v239 = vpop.f32.mrf.mxu0
    %v240 = vpop.f32.mrf.mxu0
    %v241 = vadd.f32 %v84, %v240
    %v242 = vpop.f32.mrf.mxu0
    %243 = vmatprep.mubr.bf16.mxu0 0
    %244 = vmatmul.mubr.bf16.gmra.mxu0 %v158
    %v245 = vpop.f32.mrf.mxu0
    %v246 = vadd.f32 %v84, %v245
    %v247 = vpop.f32.mrf.mxu0
    %v248 = vpop.f32.mrf.mxu0
    %v249 = vadd.f32 %v84, %v248
    %v250 = vpop.f32.mrf.mxu0
    %251 = vmatprep.mubr.bf16.mxu0 0
    %252 = vmatmul.mubr.bf16.gmra.mxu0 %v161
    %v253 = vpop.f32.mrf.mxu0
    %v254 = vadd.f32 %v84, %v253
    %v255 = vpop.f32.mrf.mxu0
    %v256 = vpop.f32.mrf.mxu0
    %v257 = vadd.f32 %v84, %v256
    %v258 = vpop.f32.mrf.mxu0
    %259 = vdwg.mxu0
    %260 = vst [vmem:[#allocation2] sm:$0xff] %v198
    %261 = vst [vmem:[#allocation2 + $0x8] sm:$0xff] %v201
    %262 = vst [vmem:[#allocation2 + $0x10] sm:$0xff] %v206
    %263 = vst [vmem:[#allocation2 + $0x18] sm:$0xff] %v209
    %264 = vst [vmem:[#allocation2 + $0x20] sm:$0xff] %v214
    %265 = vst [vmem:[#allocation2 + $0x28] sm:$0xff] %v217
    %266 = vst [vmem:[#allocation2 + $0x30] sm:$0xff] %v222
    %267 = vst [vmem:[#allocation2 + $0x38] sm:$0xff] %v225
    %268 = vst [vmem:[#allocation2 + $0x40] sm:$0xff] %v230
    %269 = vst [vmem:[#allocation2 + $0x48] sm:$0xff] %v233
    %270 = vst [vmem:[#allocation2 + $0x50] sm:$0xff] %v238
    %271 = vst [vmem:[#allocation2 + $0x58] sm:$0xff] %v241
    %272 = vst [vmem:[#allocation2 + $0x60] sm:$0xff] %v246
    %273 = vst [vmem:[#allocation2 + $0x68] sm:$0xff] %v249
    %274 = vst [vmem:[#allocation2 + $0x70] sm:$0xff] %v254
    %275 = vst [vmem:[#allocation2 + $0x78] sm:$0xff] %v257
    %v276 = vld [vmem:[#allocation2] sm:$0xff]
    %v277 = vld [vmem:[#allocation2 + $0x8] sm:$0xff]
    %v278 = vpack.c.bf16 %v61, %v60
    %v283 = vunpack.c.l.b16 %v55
    %v284 = vunpack.c.l.b16 %v56
    %v285 = vunpack.c.l.b16 %v57
    %v286 = vunpack.c.l.b16 %v58
    %v287 = vpack.c.b16 %v284, %v283
    %v288 = vpack.c.b16 %v286, %v285
    %v292 = vsel %vm138, %v278, 0
    %294 = vmatprep.subr.bf16.mxu0 0
    %295 = vmatpush1.bf16.msra.mxu0 0
    %296 = vmatprep.subr.bf16.mxu0 0
    %297 = vmatpush1.bf16.msra.mxu0 0
    %298 = vmatprep.subr.bf16.mxu0 0
    %299 = vmatpush1.bf16.msra.mxu0 0
    %300 = vmatprep.subr.bf16.mxu0 0
    %301 = vmatpush1.bf16.msra.mxu0 0
    %302 = vmatprep.subr.bf16.mxu0 0
    %303 = vmatpush1.bf16.msra.mxu0 0
    %304 = vmatprep.subr.bf16.mxu0 0
    %305 = vmatpush1.bf16.msra.mxu0 0
    %306 = vmatprep.subr.bf16.mxu0 0
    %307 = vmatpush1.bf16.msra.mxu0 %v288
    %308 = vmatprep.subr.bf16.mxu0 0
    %309 = vmatpush1.bf16.msra.mxu0 %v287
    %310 = vmatprep.subr.bf16.mxu0 0
    %311 = vmatpush2.bf16.msra.mxu0 0
    %312 = vmatprep.subr.bf16.mxu0 0
    %313 = vmatpush2.bf16.msra.mxu0 0
    %314 = vmatprep.subr.bf16.mxu0 0
    %315 = vmatpush2.bf16.msra.mxu0 0
    %316 = vmatprep.subr.bf16.mxu0 0
    %317 = vmatpush2.bf16.msra.mxu0 0
    %318 = vmatprep.subr.bf16.mxu0 0
    %319 = vmatpush2.bf16.msra.mxu0 0
    %320 = vmatprep.subr.bf16.mxu0 0
    %321 = vmatpush2.bf16.msra.mxu0 0
    %322 = vmatprep.subr.bf16.mxu0 0
    %323 = vmatpush2.bf16.msra.mxu0 0
    %324 = vmatprep.subr.bf16.mxu0 0
    %325 = vmatpush2.bf16.msra.mxu0 0
    %326 = vmatprep.mubr.bf16.mxu0 0
    %327 = vmatmul.mubr.bf16.gmra.mxu0 %v292
    %v328 = vpop.f32.mrf.mxu0
    %v329 = vadd.f32 0.0, %v328
    %v330 = vpop.f32.mrf.mxu0
    %v331 = vpop.f32.mrf.mxu0
    %v332 = vadd.f32 0.0, %v331
    %v333 = vpop.f32.mrf.mxu0
    %334 = vdwg.mxu0
    %v335 = vadd.f32 %v276, %v329
    %v336 = vadd.f32 %v277, %v332
    %v337 = vxor.u32 %v335, 2147483648
    %v338 = vxor.u32 %v336, 2147483648
    %v339 = vmul.f32 %v337, 1.442695
    %v340 = vpow.pop %v339
    %v341 = vmul.f32 %v338, 1.442695
    %v342 = vpow.pop %v341
    %v343 = vadd.f32 %v340, 1.0
    %v344 = vadd.f32 %v342, 1.0
    %v345 = vrcp.pop %v343
    %v346 = vmul.f32 1.0, %v345
    %v347 = vrcp.pop %v344
    %v348 = vmul.f32 1.0, %v347
    %v349 = vtanh.pop %v335
    %v350 = vtanh.pop %v336
    %353 = vrot.lane.b32.xlu0 %v62, 32
    %v354 = vpop.permute.xlu0 %353
    %355 = vrot.lane.b32.xlu0 %v63, 32
    %v356 = vpop.permute.xlu0 %355
    %v359 = vmul.f32 %v346, %v354
    %v360 = vmul.f32 %v348, %v356
    %363 = vrot.lane.b32.xlu0 %v349, 32
    %v364 = vpop.permute.xlu0 %363
    %365 = vrot.lane.b32.xlu0 %v350, 32
    %v366 = vpop.permute.xlu0 %365
    %v369 = vmul.f32 %v346, %v364
    %v370 = vmul.f32 %v348, %v366
    %373 = vrot.lane.b32.xlu0 %v369, 32
    %v374 = vpop.permute.xlu0 %373
    %375 = vrot.lane.b32.xlu0 %v370, 32
    %v376 = vpop.permute.xlu0 %375
    %v379 = vadd.f32 %v359, %v374
    %v380 = vadd.f32 %v360, %v376
    %v381 = vtanh.pop %v379
    %v382 = vtanh.pop %v380
    %385 = vrot.lane.b32.xlu0 %v381, 32
    %v386 = vpop.permute.xlu0 %385
    %387 = vrot.lane.b32.xlu0 %v382, 32
    %v388 = vpop.permute.xlu0 %387
    %v391 = vmul.f32 %v346, %v386
    %v392 = vmul.f32 %v348, %v388
    %v393 = vpack.c.bf16 %v392, %v391
    %v395 = vunpack.c.l.b16 %v393
    %v396 = vunpack.c.h.b16 %v393
    %v397 = vpack.c.b16 %v395, %v395
    %v398 = vpack.c.b16 %v396, %v396
    %399 = vrot.lane.b32.xlu0 %v397, 64
    %v400 = vpop.permute.xlu0 %399
    %401 = vrot.lane.b32.xlu0 %v398, 64
    %v402 = vpop.permute.xlu0 %401
    %vm405 = vcmask 257024
    %406 = vst.msk [vmem:[#allocation3] sm:$0xf] %vm405, %v400
    %407 = vst.msk [vmem:[#allocation3 + $0x4] sm:$0xf] %vm405, %v402
    %s408 = scalar_lea.vmem [#allocation2], 16
    %v409 = vld [vmem:[%s408] sm:$0xff]
    %v410 = vld [vmem:[%s408 + $0x8] sm:$0xff]
    %411 = vrot.lane.b32.xlu0 %v393, 64
    %v412 = vpop.permute.xlu0 %411
    %v414 = vsel %vm138, %v412, 0
    %416 = vmatprep.subr.bf16.mxu0 0
    %417 = vmatpush1.bf16.msra.mxu0 0
    %418 = vmatprep.subr.bf16.mxu0 0
    %419 = vmatpush1.bf16.msra.mxu0 0
    %420 = vmatprep.subr.bf16.mxu0 0
    %421 = vmatpush1.bf16.msra.mxu0 0
    %422 = vmatprep.subr.bf16.mxu0 0
    %423 = vmatpush1.bf16.msra.mxu0 0
    %424 = vmatprep.subr.bf16.mxu0 0
    %425 = vmatpush1.bf16.msra.mxu0 0
    %426 = vmatprep.subr.bf16.mxu0 0
    %427 = vmatpush1.bf16.msra.mxu0 0
    %428 = vmatprep.subr.bf16.mxu0 0
    %429 = vmatpush1.bf16.msra.mxu0 %v288
    %430 = vmatprep.subr.bf16.mxu0 0
    %431 = vmatpush1.bf16.msra.mxu0 %v287
    %432 = vmatprep.subr.bf16.mxu0 0
    %433 = vmatpush2.bf16.msra.mxu0 0
    %434 = vmatprep.subr.bf16.mxu0 0
    %435 = vmatpush2.bf16.msra.mxu0 0
    %436 = vmatprep.subr.bf16.mxu0 0
    %437 = vmatpush2.bf16.msra.mxu0 0
    %438 = vmatprep.subr.bf16.mxu0 0
    %439 = vmatpush2.bf16.msra.mxu0 0
    %440 = vmatprep.subr.bf16.mxu0 0
    %441 = vmatpush2.bf16.msra.mxu0 0
    %442 = vmatprep.subr.bf16.mxu0 0
    %443 = vmatpush2.bf16.msra.mxu0 0
    %444 = vmatprep.subr.bf16.mxu0 0
    %445 = vmatpush2.bf16.msra.mxu0 0
    %446 = vmatprep.subr.bf16.mxu0 0
    %447 = vmatpush2.bf16.msra.mxu0 0
    %448 = vmatprep.mubr.bf16.mxu0 0
    %449 = vmatmul.mubr.bf16.gmra.mxu0 %v414
    %v450 = vpop.f32.mrf.mxu0
    %v451 = vadd.f32 0.0, %v450
    %v452 = vpop.f32.mrf.mxu0
    %v453 = vpop.f32.mrf.mxu0
    %v454 = vadd.f32 0.0, %v453
    %v455 = vpop.f32.mrf.mxu0
    %456 = vdwg.mxu0
    %v457 = vadd.f32 %v409, %v451
    %v458 = vadd.f32 %v410, %v454
    %v459 = vxor.u32 %v457, 2147483648
    %v460 = vxor.u32 %v458, 2147483648
    %v461 = vmul.f32 %v459, 1.442695
    %v462 = vpow.pop %v461
    %v463 = vmul.f32 %v460, 1.442695
    %v464 = vpow.pop %v463
    %v465 = vadd.f32 %v462, 1.0
    %v466 = vadd.f32 %v464, 1.0
    %v467 = vrcp.pop %v465
    %v468 = vmul.f32 1.0, %v467
    %v469 = vrcp.pop %v466
    %v470 = vmul.f32 1.0, %v469
    %v471 = vtanh.pop %v457
    %v472 = vtanh.pop %v458
    %v473 = vmul.f32 %v468, %v379
    %v474 = vmul.f32 %v470, %v380
    %477 = vrot.lane.b32.xlu0 %v471, 32
    %v478 = vpop.permute.xlu0 %477
    %479 = vrot.lane.b32.xlu0 %v472, 32
    %v480 = vpop.permute.xlu0 %479
    %v483 = vmul.f32 %v468, %v478
    %v484 = vmul.f32 %v470, %v480
    %487 = vrot.lane.b32.xlu0 %v483, 32
    %v488 = vpop.permute.xlu0 %487
    %489 = vrot.lane.b32.xlu0 %v484, 32
    %v490 = vpop.permute.xlu0 %489
    %v493 = vadd.f32 %v473, %v488
    %v494 = vadd.f32 %v474, %v490
    %v495 = vtanh.pop %v493
    %v496 = vtanh.pop %v494
    %499 = vrot.lane.b32.xlu0 %v495, 32
    %v500 = vpop.permute.xlu0 %499
    %501 = vrot.lane.b32.xlu0 %v496, 32
    %v502 = vpop.permute.xlu0 %501
    %v505 = vmul.f32 %v468, %v500
    %v506 = vmul.f32 %v470, %v502
    %v507 = vpack.c.bf16 %v506, %v505
    %v509 = vunpack.c.l.b16 %v507
    %v510 = vunpack.c.h.b16 %v507
    %v511 = vpack.c.b16 %v509, %v509
    %v512 = vpack.c.b16 %v510, %v510
    %513 = vrot.lane.b32.xlu0 %v511, 64
    %v514 = vpop.permute.xlu0 %513
    %515 = vrot.lane.b32.xlu0 %v512, 64
    %v516 = vpop.permute.xlu0 %515
    %s519 = scalar_lea.vmem [#allocation3], 8
    %520 = vst.msk [vmem:[%s519] sm:$0xf] %vm405, %v514
    %521 = vst.msk [vmem:[%s519 + $0x4] sm:$0xf] %vm405, %v516
    %s522 = scalar_lea.vmem [#allocation2], 32
    %v523 = vld [vmem:[%s522] sm:$0xff]
    %v524 = vld [vmem:[%s522 + $0x8] sm:$0xff]
    %525 = vrot.lane.b32.xlu0 %v507, 64
    %v526 = vpop.permute.xlu0 %525
    %v528 = vsel %vm138, %v526, 0
    %530 = vmatprep.subr.bf16.mxu0 0
    %531 = vmatpush1.bf16.msra.mxu0 0
    %532 = vmatprep.subr.bf16.mxu0 0
    %533 = vmatpush1.bf16.msra.mxu0 0
    %534 = vmatprep.subr.bf16.mxu0 0
    %535 = vmatpush1.bf16.msra.mxu0 0
    %536 = vmatprep.subr.bf16.mxu0 0
    %537 = vmatpush1.bf16.msra.mxu0 0
    %538 = vmatprep.subr.bf16.mxu0 0
    %539 = vmatpush1.bf16.msra.mxu0 0
    %540 = vmatprep.subr.bf16.mxu0 0
    %541 = vmatpush1.bf16.msra.mxu0 0
    %542 = vmatprep.subr.bf16.mxu0 0
    %543 = vmatpush1.bf16.msra.mxu0 %v288
    %544 = vmatprep.subr.bf16.mxu0 0
    %545 = vmatpush1.bf16.msra.mxu0 %v287
    %546 = vmatprep.subr.bf16.mxu0 0
    %547 = vmatpush2.bf16.msra.mxu0 0
    %548 = vmatprep.subr.bf16.mxu0 0
    %549 = vmatpush2.bf16.msra.mxu0 0
    %550 = vmatprep.subr.bf16.mxu0 0
    %551 = vmatpush2.bf16.msra.mxu0 0
    %552 = vmatprep.subr.bf16.mxu0 0
    %553 = vmatpush2.bf16.msra.mxu0 0
    %554 = vmatprep.subr.bf16.mxu0 0
    %555 = vmatpush2.bf16.msra.mxu0 0
    %556 = vmatprep.subr.bf16.mxu0 0
    %557 = vmatpush2.bf16.msra.mxu0 0
    %558 = vmatprep.subr.bf16.mxu0 0
    %559 = vmatpush2.bf16.msra.mxu0 0
    %560 = vmatprep.subr.bf16.mxu0 0
    %561 = vmatpush2.bf16.msra.mxu0 0
    %562 = vmatprep.mubr.bf16.mxu0 0
    %563 = vmatmul.mubr.bf16.gmra.mxu0 %v528
    %v564 = vpop.f32.mrf.mxu0
    %v565 = vadd.f32 0.0, %v564
    %v566 = vpop.f32.mrf.mxu0
    %v567 = vpop.f32.mrf.mxu0
    %v568 = vadd.f32 0.0, %v567
    %v569 = vpop.f32.mrf.mxu0
    %570 = vdwg.mxu0
    %v571 = vadd.f32 %v523, %v565
    %v572 = vadd.f32 %v524, %v568
    %v573 = vxor.u32 %v571, 2147483648
    %v574 = vxor.u32 %v572, 2147483648
    %v575 = vmul.f32 %v573, 1.442695
    %v576 = vpow.pop %v575
    %v577 = vmul.f32 %v574, 1.442695
    %v578 = vpow.pop %v577
    %v579 = vadd.f32 %v576, 1.0
    %v580 = vadd.f32 %v578, 1.0
    %v581 = vrcp.pop %v579
    %v582 = vmul.f32 1.0, %v581
    %v583 = vrcp.pop %v580
    %v584 = vmul.f32 1.0, %v583
    %v585 = vtanh.pop %v571
    %v586 = vtanh.pop %v572
    %v587 = vmul.f32 %v582, %v493
    %v588 = vmul.f32 %v584, %v494
    %591 = vrot.lane.b32.xlu0 %v585, 32
    %v592 = vpop.permute.xlu0 %591
    %593 = vrot.lane.b32.xlu0 %v586, 32
    %v594 = vpop.permute.xlu0 %593
    %v597 = vmul.f32 %v582, %v592
    %v598 = vmul.f32 %v584, %v594
    %601 = vrot.lane.b32.xlu0 %v597, 32
    %v602 = vpop.permute.xlu0 %601
    %603 = vrot.lane.b32.xlu0 %v598, 32
    %v604 = vpop.permute.xlu0 %603
    %v607 = vadd.f32 %v587, %v602
    %v608 = vadd.f32 %v588, %v604
    %v609 = vtanh.pop %v607
    %v610 = vtanh.pop %v608
    %613 = vrot.lane.b32.xlu0 %v609, 32
    %v614 = vpop.permute.xlu0 %613
    %615 = vrot.lane.b32.xlu0 %v610, 32
    %v616 = vpop.permute.xlu0 %615
    %v619 = vmul.f32 %v582, %v614
    %v620 = vmul.f32 %v584, %v616
    %v621 = vpack.c.bf16 %v620, %v619
    %v623 = vunpack.c.l.b16 %v621
    %v624 = vunpack.c.h.b16 %v621
    %v625 = vpack.c.b16 %v623, %v623
    %v626 = vpack.c.b16 %v624, %v624
    %627 = vrot.lane.b32.xlu0 %v625, 64
    %v628 = vpop.permute.xlu0 %627
    %629 = vrot.lane.b32.xlu0 %v626, 64
    %v630 = vpop.permute.xlu0 %629
    %s633 = scalar_lea.vmem [#allocation3], 16
    %634 = vst.msk [vmem:[%s633] sm:$0xf] %vm405, %v628
    %635 = vst.msk [vmem:[%s633 + $0x4] sm:$0xf] %vm405, %v630
    %s636 = scalar_lea.vmem [#allocation2], 48
    %v637 = vld [vmem:[%s636] sm:$0xff]
    %v638 = vld [vmem:[%s636 + $0x8] sm:$0xff]
    %639 = vrot.lane.b32.xlu0 %v621, 64
    %v640 = vpop.permute.xlu0 %639
    %v642 = vsel %vm138, %v640, 0
    %644 = vmatprep.subr.bf16.mxu0 0
    %645 = vmatpush1.bf16.msra.mxu0 0
    %646 = vmatprep.subr.bf16.mxu0 0
    %647 = vmatpush1.bf16.msra.mxu0 0
    %648 = vmatprep.subr.bf16.mxu0 0
    %649 = vmatpush1.bf16.msra.mxu0 0
    %650 = vmatprep.subr.bf16.mxu0 0
    %651 = vmatpush1.bf16.msra.mxu0 0
    %652 = vmatprep.subr.bf16.mxu0 0
    %653 = vmatpush1.bf16.msra.mxu0 0
    %654 = vmatprep.subr.bf16.mxu0 0
    %655 = vmatpush1.bf16.msra.mxu0 0
    %656 = vmatprep.subr.bf16.mxu0 0
    %657 = vmatpush1.bf16.msra.mxu0 %v288
    %658 = vmatprep.subr.bf16.mxu0 0
    %659 = vmatpush1.bf16.msra.mxu0 %v287
    %660 = vmatprep.subr.bf16.mxu0 0
    %661 = vmatpush2.bf16.msra.mxu0 0
    %662 = vmatprep.subr.bf16.mxu0 0
    %663 = vmatpush2.bf16.msra.mxu0 0
    %664 = vmatprep.subr.bf16.mxu0 0
    %665 = vmatpush2.bf16.msra.mxu0 0
    %666 = vmatprep.subr.bf16.mxu0 0
    %667 = vmatpush2.bf16.msra.mxu0 0
    %668 = vmatprep.subr.bf16.mxu0 0
    %669 = vmatpush2.bf16.msra.mxu0 0
    %670 = vmatprep.subr.bf16.mxu0 0
    %671 = vmatpush2.bf16.msra.mxu0 0
    %672 = vmatprep.subr.bf16.mxu0 0
    %673 = vmatpush2.bf16.msra.mxu0 0
    %674 = vmatprep.subr.bf16.mxu0 0
    %675 = vmatpush2.bf16.msra.mxu0 0
    %676 = vmatprep.mubr.bf16.mxu0 0
    %677 = vmatmul.mubr.bf16.gmra.mxu0 %v642
    %v678 = vpop.f32.mrf.mxu0
    %v679 = vadd.f32 0.0, %v678
    %v680 = vpop.f32.mrf.mxu0
    %v681 = vpop.f32.mrf.mxu0
    %v682 = vadd.f32 0.0, %v681
    %v683 = vpop.f32.mrf.mxu0
    %684 = vdwg.mxu0
    %v685 = vadd.f32 %v637, %v679
    %v686 = vadd.f32 %v638, %v682
    %v687 = vxor.u32 %v685, 2147483648
    %v688 = vxor.u32 %v686, 2147483648
    %v689 = vmul.f32 %v687, 1.442695
    %v690 = vpow.pop %v689
    %v691 = vmul.f32 %v688, 1.442695
    %v692 = vpow.pop %v691
    %v693 = vadd.f32 %v690, 1.0
    %v694 = vadd.f32 %v692, 1.0
    %v695 = vrcp.pop %v693
    %v696 = vmul.f32 1.0, %v695
    %v697 = vrcp.pop %v694
    %v698 = vmul.f32 1.0, %v697
    %v699 = vtanh.pop %v685
    %v700 = vtanh.pop %v686
    %v701 = vmul.f32 %v696, %v607
    %v702 = vmul.f32 %v698, %v608
    %705 = vrot.lane.b32.xlu0 %v699, 32
    %v706 = vpop.permute.xlu0 %705
    %707 = vrot.lane.b32.xlu0 %v700, 32
    %v708 = vpop.permute.xlu0 %707
    %v711 = vmul.f32 %v696, %v706
    %v712 = vmul.f32 %v698, %v708
    %715 = vrot.lane.b32.xlu0 %v711, 32
    %v716 = vpop.permute.xlu0 %715
    %717 = vrot.lane.b32.xlu0 %v712, 32
    %v718 = vpop.permute.xlu0 %717
    %v721 = vadd.f32 %v701, %v716
    %v722 = vadd.f32 %v702, %v718
    %v723 = vtanh.pop %v721
    %v724 = vtanh.pop %v722
    %727 = vrot.lane.b32.xlu0 %v723, 32
    %v728 = vpop.permute.xlu0 %727
    %729 = vrot.lane.b32.xlu0 %v724, 32
    %v730 = vpop.permute.xlu0 %729
    %v733 = vmul.f32 %v696, %v728
    %v734 = vmul.f32 %v698, %v730
    %v735 = vpack.c.bf16 %v734, %v733
    %v737 = vunpack.c.l.b16 %v735
    %v738 = vunpack.c.h.b16 %v735
    %v739 = vpack.c.b16 %v737, %v737
    %v740 = vpack.c.b16 %v738, %v738
    %741 = vrot.lane.b32.xlu0 %v739, 64
    %v742 = vpop.permute.xlu0 %741
    %743 = vrot.lane.b32.xlu0 %v740, 64
    %v744 = vpop.permute.xlu0 %743
    %s747 = scalar_lea.vmem [#allocation3], 24
    %748 = vst.msk [vmem:[%s747] sm:$0xf] %vm405, %v742
    %749 = vst.msk [vmem:[%s747 + $0x4] sm:$0xf] %vm405, %v744
    %s750 = scalar_lea.vmem [#allocation2], 64
    %v751 = vld [vmem:[%s750] sm:$0xff]
    %v752 = vld [vmem:[%s750 + $0x8] sm:$0xff]
    %753 = vrot.lane.b32.xlu0 %v735, 64
    %v754 = vpop.permute.xlu0 %753
    %v756 = vsel %vm138, %v754, 0
    %758 = vmatprep.subr.bf16.mxu0 0
    %759 = vmatpush1.bf16.msra.mxu0 0
    %760 = vmatprep.subr.bf16.mxu0 0
    %761 = vmatpush1.bf16.msra.mxu0 0
    %762 = vmatprep.subr.bf16.mxu0 0
    %763 = vmatpush1.bf16.msra.mxu0 0
    %764 = vmatprep.subr.bf16.mxu0 0
    %765 = vmatpush1.bf16.msra.mxu0 0
    %766 = vmatprep.subr.bf16.mxu0 0
    %767 = vmatpush1.bf16.msra.mxu0 0
    %768 = vmatprep.subr.bf16.mxu0 0
    %769 = vmatpush1.bf16.msra.mxu0 0
    %770 = vmatprep.subr.bf16.mxu0 0
    %771 = vmatpush1.bf16.msra.mxu0 %v288
    %772 = vmatprep.subr.bf16.mxu0 0
    %773 = vmatpush1.bf16.msra.mxu0 %v287
    %774 = vmatprep.subr.bf16.mxu0 0
    %775 = vmatpush2.bf16.msra.mxu0 0
    %776 = vmatprep.subr.bf16.mxu0 0
    %777 = vmatpush2.bf16.msra.mxu0 0
    %778 = vmatprep.subr.bf16.mxu0 0
    %779 = vmatpush2.bf16.msra.mxu0 0
    %780 = vmatprep.subr.bf16.mxu0 0
    %781 = vmatpush2.bf16.msra.mxu0 0
    %782 = vmatprep.subr.bf16.mxu0 0
    %783 = vmatpush2.bf16.msra.mxu0 0
    %784 = vmatprep.subr.bf16.mxu0 0
    %785 = vmatpush2.bf16.msra.mxu0 0
    %786 = vmatprep.subr.bf16.mxu0 0
    %787 = vmatpush2.bf16.msra.mxu0 0
    %788 = vmatprep.subr.bf16.mxu0 0
    %789 = vmatpush2.bf16.msra.mxu0 0
    %790 = vmatprep.mubr.bf16.mxu0 0
    %791 = vmatmul.mubr.bf16.gmra.mxu0 %v756
    %v792 = vpop.f32.mrf.mxu0
    %v793 = vadd.f32 0.0, %v792
    %v794 = vpop.f32.mrf.mxu0
    %v795 = vpop.f32.mrf.mxu0
    %v796 = vadd.f32 0.0, %v795
    %v797 = vpop.f32.mrf.mxu0
    %798 = vdwg.mxu0
    %v799 = vadd.f32 %v751, %v793
    %v800 = vadd.f32 %v752, %v796
    %v801 = vxor.u32 %v799, 2147483648
    %v802 = vxor.u32 %v800, 2147483648
    %v803 = vmul.f32 %v801, 1.442695
    %v804 = vpow.pop %v803
    %v805 = vmul.f32 %v802, 1.442695
    %v806 = vpow.pop %v805
    %v807 = vadd.f32 %v804, 1.0
    %v808 = vadd.f32 %v806, 1.0
    %v809 = vrcp.pop %v807
    %v810 = vmul.f32 1.0, %v809
    %v811 = vrcp.pop %v808
    %v812 = vmul.f32 1.0, %v811
    %v813 = vtanh.pop %v799
    %v814 = vtanh.pop %v800
    %v815 = vmul.f32 %v810, %v721
    %v816 = vmul.f32 %v812, %v722
    %819 = vrot.lane.b32.xlu0 %v813, 32
    %v820 = vpop.permute.xlu0 %819
    %821 = vrot.lane.b32.xlu0 %v814, 32
    %v822 = vpop.permute.xlu0 %821
    %v825 = vmul.f32 %v810, %v820
    %v826 = vmul.f32 %v812, %v822
    %829 = vrot.lane.b32.xlu0 %v825, 32
    %v830 = vpop.permute.xlu0 %829
    %831 = vrot.lane.b32.xlu0 %v826, 32
    %v832 = vpop.permute.xlu0 %831
    %v835 = vadd.f32 %v815, %v830
    %v836 = vadd.f32 %v816, %v832
    %v837 = vtanh.pop %v835
    %v838 = vtanh.pop %v836
    %841 = vrot.lane.b32.xlu0 %v837, 32
    %v842 = vpop.permute.xlu0 %841
    %843 = vrot.lane.b32.xlu0 %v838, 32
    %v844 = vpop.permute.xlu0 %843
    %v847 = vmul.f32 %v810, %v842
    %v848 = vmul.f32 %v812, %v844
    %v849 = vpack.c.bf16 %v848, %v847
    %v851 = vunpack.c.l.b16 %v849
    %v852 = vunpack.c.h.b16 %v849
    %v853 = vpack.c.b16 %v851, %v851
    %v854 = vpack.c.b16 %v852, %v852
    %855 = vrot.lane.b32.xlu0 %v853, 64
    %v856 = vpop.permute.xlu0 %855
    %857 = vrot.lane.b32.xlu0 %v854, 64
    %v858 = vpop.permute.xlu0 %857
    %s861 = scalar_lea.vmem [#allocation3], 32
    %862 = vst.msk [vmem:[%s861] sm:$0xf] %vm405, %v856
    %863 = vst.msk [vmem:[%s861 + $0x4] sm:$0xf] %vm405, %v858
    %s864 = scalar_lea.vmem [#allocation2], 80
    %v865 = vld [vmem:[%s864] sm:$0xff]
    %v866 = vld [vmem:[%s864 + $0x8] sm:$0xff]
    %867 = vrot.lane.b32.xlu0 %v849, 64
    %v868 = vpop.permute.xlu0 %867
    %v870 = vsel %vm138, %v868, 0
    %872 = vmatprep.subr.bf16.mxu0 0
    %873 = vmatpush1.bf16.msra.mxu0 0
    %874 = vmatprep.subr.bf16.mxu0 0
    %875 = vmatpush1.bf16.msra.mxu0 0
    %876 = vmatprep.subr.bf16.mxu0 0
    %877 = vmatpush1.bf16.msra.mxu0 0
    %878 = vmatprep.subr.bf16.mxu0 0
    %879 = vmatpush1.bf16.msra.mxu0 0
    %880 = vmatprep.subr.bf16.mxu0 0
    %881 = vmatpush1.bf16.msra.mxu0 0
    %882 = vmatprep.subr.bf16.mxu0 0
    %883 = vmatpush1.bf16.msra.mxu0 0
    %884 = vmatprep.subr.bf16.mxu0 0
    %885 = vmatpush1.bf16.msra.mxu0 %v288
    %886 = vmatprep.subr.bf16.mxu0 0
    %887 = vmatpush1.bf16.msra.mxu0 %v287
    %888 = vmatprep.subr.bf16.mxu0 0
    %889 = vmatpush2.bf16.msra.mxu0 0
    %890 = vmatprep.subr.bf16.mxu0 0
    %891 = vmatpush2.bf16.msra.mxu0 0
    %892 = vmatprep.subr.bf16.mxu0 0
    %893 = vmatpush2.bf16.msra.mxu0 0
    %894 = vmatprep.subr.bf16.mxu0 0
    %895 = vmatpush2.bf16.msra.mxu0 0
    %896 = vmatprep.subr.bf16.mxu0 0
    %897 = vmatpush2.bf16.msra.mxu0 0
    %898 = vmatprep.subr.bf16.mxu0 0
    %899 = vmatpush2.bf16.msra.mxu0 0
    %900 = vmatprep.subr.bf16.mxu0 0
    %901 = vmatpush2.bf16.msra.mxu0 0
    %902 = vmatprep.subr.bf16.mxu0 0
    %903 = vmatpush2.bf16.msra.mxu0 0
    %904 = vmatprep.mubr.bf16.mxu0 0
    %905 = vmatmul.mubr.bf16.gmra.mxu0 %v870
    %v906 = vpop.f32.mrf.mxu0
    %v907 = vadd.f32 0.0, %v906
    %v908 = vpop.f32.mrf.mxu0
    %v909 = vpop.f32.mrf.mxu0
    %v910 = vadd.f32 0.0, %v909
    %v911 = vpop.f32.mrf.mxu0
    %912 = vdwg.mxu0
    %v913 = vadd.f32 %v865, %v907
    %v914 = vadd.f32 %v866, %v910
    %v915 = vxor.u32 %v913, 2147483648
    %v916 = vxor.u32 %v914, 2147483648
    %v917 = vmul.f32 %v915, 1.442695
    %v918 = vpow.pop %v917
    %v919 = vmul.f32 %v916, 1.442695
    %v920 = vpow.pop %v919
    %v921 = vadd.f32 %v918, 1.0
    %v922 = vadd.f32 %v920, 1.0
    %v923 = vrcp.pop %v921
    %v924 = vmul.f32 1.0, %v923
    %v925 = vrcp.pop %v922
    %v926 = vmul.f32 1.0, %v925
    %v927 = vtanh.pop %v913
    %v928 = vtanh.pop %v914
    %v929 = vmul.f32 %v924, %v835
    %v930 = vmul.f32 %v926, %v836
    %933 = vrot.lane.b32.xlu0 %v927, 32
    %v934 = vpop.permute.xlu0 %933
    %935 = vrot.lane.b32.xlu0 %v928, 32
    %v936 = vpop.permute.xlu0 %935
    %v939 = vmul.f32 %v924, %v934
    %v940 = vmul.f32 %v926, %v936
    %943 = vrot.lane.b32.xlu0 %v939, 32
    %v944 = vpop.permute.xlu0 %943
    %945 = vrot.lane.b32.xlu0 %v940, 32
    %v946 = vpop.permute.xlu0 %945
    %v949 = vadd.f32 %v929, %v944
    %v950 = vadd.f32 %v930, %v946
    %v951 = vtanh.pop %v949
    %v952 = vtanh.pop %v950
    %955 = vrot.lane.b32.xlu0 %v951, 32
    %v956 = vpop.permute.xlu0 %955
    %957 = vrot.lane.b32.xlu0 %v952, 32
    %v958 = vpop.permute.xlu0 %957
    %v961 = vmul.f32 %v924, %v956
    %v962 = vmul.f32 %v926, %v958
    %v963 = vpack.c.bf16 %v962, %v961
    %v965 = vunpack.c.l.b16 %v963
    %v966 = vunpack.c.h.b16 %v963
    %v967 = vpack.c.b16 %v965, %v965
    %v968 = vpack.c.b16 %v966, %v966
    %969 = vrot.lane.b32.xlu0 %v967, 64
    %v970 = vpop.permute.xlu0 %969
    %971 = vrot.lane.b32.xlu0 %v968, 64
    %v972 = vpop.permute.xlu0 %971
    %s975 = scalar_lea.vmem [#allocation3], 40
    %976 = vst.msk [vmem:[%s975] sm:$0xf] %vm405, %v970
    %977 = vst.msk [vmem:[%s975 + $0x4] sm:$0xf] %vm405, %v972
    %s978 = scalar_lea.vmem [#allocation2], 96
    %v979 = vld [vmem:[%s978] sm:$0xff]
    %v980 = vld [vmem:[%s978 + $0x8] sm:$0xff]
    %981 = vrot.lane.b32.xlu0 %v963, 64
    %v982 = vpop.permute.xlu0 %981
    %v984 = vsel %vm138, %v982, 0
    %986 = vmatprep.subr.bf16.mxu0 0
    %987 = vmatpush1.bf16.msra.mxu0 0
    %988 = vmatprep.subr.bf16.mxu0 0
    %989 = vmatpush1.bf16.msra.mxu0 0
    %990 = vmatprep.subr.bf16.mxu0 0
    %991 = vmatpush1.bf16.msra.mxu0 0
    %992 = vmatprep.subr.bf16.mxu0 0
    %993 = vmatpush1.bf16.msra.mxu0 0
    %994 = vmatprep.subr.bf16.mxu0 0
    %995 = vmatpush1.bf16.msra.mxu0 0
    %996 = vmatprep.subr.bf16.mxu0 0
    %997 = vmatpush1.bf16.msra.mxu0 0
    %998 = vmatprep.subr.bf16.mxu0 0
    %999 = vmatpush1.bf16.msra.mxu0 %v288
    %1000 = vmatprep.subr.bf16.mxu0 0
    %1001 = vmatpush1.bf16.msra.mxu0 %v287
    %1002 = vmatprep.subr.bf16.mxu0 0
    %1003 = vmatpush2.bf16.msra.mxu0 0
    %1004 = vmatprep.subr.bf16.mxu0 0
    %1005 = vmatpush2.bf16.msra.mxu0 0
    %1006 = vmatprep.subr.bf16.mxu0 0
    %1007 = vmatpush2.bf16.msra.mxu0 0
    %1008 = vmatprep.subr.bf16.mxu0 0
    %1009 = vmatpush2.bf16.msra.mxu0 0
    %1010 = vmatprep.subr.bf16.mxu0 0
    %1011 = vmatpush2.bf16.msra.mxu0 0
    %1012 = vmatprep.subr.bf16.mxu0 0
    %1013 = vmatpush2.bf16.msra.mxu0 0
    %1014 = vmatprep.subr.bf16.mxu0 0
    %1015 = vmatpush2.bf16.msra.mxu0 0
    %1016 = vmatprep.subr.bf16.mxu0 0
    %1017 = vmatpush2.bf16.msra.mxu0 0
    %1018 = vmatprep.mubr.bf16.mxu0 0
    %1019 = vmatmul.mubr.bf16.gmra.mxu0 %v984
    %v1020 = vpop.f32.mrf.mxu0
    %v1021 = vadd.f32 0.0, %v1020
    %v1022 = vpop.f32.mrf.mxu0
    %v1023 = vpop.f32.mrf.mxu0
    %v1024 = vadd.f32 0.0, %v1023
    %v1025 = vpop.f32.mrf.mxu0
    %1026 = vdwg.mxu0
    %v1027 = vadd.f32 %v979, %v1021
    %v1028 = vadd.f32 %v980, %v1024
    %v1029 = vxor.u32 %v1027, 2147483648
    %v1030 = vxor.u32 %v1028, 2147483648
    %v1031 = vmul.f32 %v1029, 1.442695
    %v1032 = vpow.pop %v1031
    %v1033 = vmul.f32 %v1030, 1.442695
    %v1034 = vpow.pop %v1033
    %v1035 = vadd.f32 %v1032, 1.0
    %v1036 = vadd.f32 %v1034, 1.0
    %v1037 = vrcp.pop %v1035
    %v1038 = vmul.f32 1.0, %v1037
    %v1039 = vrcp.pop %v1036
    %v1040 = vmul.f32 1.0, %v1039
    %v1041 = vtanh.pop %v1027
    %v1042 = vtanh.pop %v1028
    %v1043 = vmul.f32 %v1038, %v949
    %v1044 = vmul.f32 %v1040, %v950
    %1047 = vrot.lane.b32.xlu0 %v1041, 32
    %v1048 = vpop.permute.xlu0 %1047
    %1049 = vrot.lane.b32.xlu0 %v1042, 32
    %v1050 = vpop.permute.xlu0 %1049
    %v1053 = vmul.f32 %v1038, %v1048
    %v1054 = vmul.f32 %v1040, %v1050
    %1057 = vrot.lane.b32.xlu0 %v1053, 32
    %v1058 = vpop.permute.xlu0 %1057
    %1059 = vrot.lane.b32.xlu0 %v1054, 32
    %v1060 = vpop.permute.xlu0 %1059
    %v1063 = vadd.f32 %v1043, %v1058
    %v1064 = vadd.f32 %v1044, %v1060
    %v1065 = vtanh.pop %v1063
    %v1066 = vtanh.pop %v1064
    %1069 = vrot.lane.b32.xlu0 %v1065, 32
    %v1070 = vpop.permute.xlu0 %1069
    %1071 = vrot.lane.b32.xlu0 %v1066, 32
    %v1072 = vpop.permute.xlu0 %1071
    %v1075 = vmul.f32 %v1038, %v1070
    %v1076 = vmul.f32 %v1040, %v1072
    %v1077 = vpack.c.bf16 %v1076, %v1075
    %v1079 = vunpack.c.l.b16 %v1077
    %v1080 = vunpack.c.h.b16 %v1077
    %v1081 = vpack.c.b16 %v1079, %v1079
    %v1082 = vpack.c.b16 %v1080, %v1080
    %1083 = vrot.lane.b32.xlu0 %v1081, 64
    %v1084 = vpop.permute.xlu0 %1083
    %1085 = vrot.lane.b32.xlu0 %v1082, 64
    %v1086 = vpop.permute.xlu0 %1085
    %s1089 = scalar_lea.vmem [#allocation3], 48
    %1090 = vst.msk [vmem:[%s1089] sm:$0xf] %vm405, %v1084
    %1091 = vst.msk [vmem:[%s1089 + $0x4] sm:$0xf] %vm405, %v1086
    %s1092 = scalar_lea.vmem [#allocation2], 112
    %v1093 = vld [vmem:[%s1092] sm:$0xff]
    %v1094 = vld [vmem:[%s1092 + $0x8] sm:$0xff]
    %1095 = vrot.lane.b32.xlu0 %v1077, 64
    %v1096 = vpop.permute.xlu0 %1095
    %v1098 = vsel %vm138, %v1096, 0
    %1100 = vmatprep.subr.bf16.mxu0 0
    %1101 = vmatpush1.bf16.msra.mxu0 0
    %1102 = vmatprep.subr.bf16.mxu0 0
    %1103 = vmatpush1.bf16.msra.mxu0 0
    %1104 = vmatprep.subr.bf16.mxu0 0
    %1105 = vmatpush1.bf16.msra.mxu0 0
    %1106 = vmatprep.subr.bf16.mxu0 0
    %1107 = vmatpush1.bf16.msra.mxu0 0
    %1108 = vmatprep.subr.bf16.mxu0 0
    %1109 = vmatpush1.bf16.msra.mxu0 0
    %1110 = vmatprep.subr.bf16.mxu0 0
    %1111 = vmatpush1.bf16.msra.mxu0 0
    %1112 = vmatprep.subr.bf16.mxu0 0
    %1113 = vmatpush1.bf16.msra.mxu0 %v288
    %1114 = vmatprep.subr.bf16.mxu0 0
    %1115 = vmatpush1.bf16.msra.mxu0 %v287
    %1116 = vmatprep.subr.bf16.mxu0 0
    %1117 = vmatpush2.bf16.msra.mxu0 0
    %1118 = vmatprep.subr.bf16.mxu0 0
    %1119 = vmatpush2.bf16.msra.mxu0 0
    %1120 = vmatprep.subr.bf16.mxu0 0
    %1121 = vmatpush2.bf16.msra.mxu0 0
    %1122 = vmatprep.subr.bf16.mxu0 0
    %1123 = vmatpush2.bf16.msra.mxu0 0
    %1124 = vmatprep.subr.bf16.mxu0 0
    %1125 = vmatpush2.bf16.msra.mxu0 0
    %1126 = vmatprep.subr.bf16.mxu0 0
    %1127 = vmatpush2.bf16.msra.mxu0 0
    %1128 = vmatprep.subr.bf16.mxu0 0
    %1129 = vmatpush2.bf16.msra.mxu0 0
    %1130 = vmatprep.subr.bf16.mxu0 0
    %1131 = vmatpush2.bf16.msra.mxu0 0
    %1132 = vmatprep.mubr.bf16.mxu0 0
    %1133 = vmatmul.mubr.bf16.gmra.mxu0 %v1098
    %v1134 = vpop.f32.mrf.mxu0
    %v1135 = vadd.f32 0.0, %v1134
    %v1136 = vpop.f32.mrf.mxu0
    %v1137 = vpop.f32.mrf.mxu0
    %v1138 = vadd.f32 0.0, %v1137
    %v1139 = vpop.f32.mrf.mxu0
    %1140 = vdwg.mxu0
    %v1141 = vadd.f32 %v1093, %v1135
    %v1142 = vadd.f32 %v1094, %v1138
    %v1143 = vxor.u32 %v1141, 2147483648
    %v1144 = vxor.u32 %v1142, 2147483648
    %v1145 = vmul.f32 %v1143, 1.442695
    %v1146 = vpow.pop %v1145
    %v1147 = vmul.f32 %v1144, 1.442695
    %v1148 = vpow.pop %v1147
    %v1149 = vadd.f32 %v1146, 1.0
    %v1150 = vadd.f32 %v1148, 1.0
    %v1151 = vrcp.pop %v1149
    %v1152 = vmul.f32 1.0, %v1151
    %v1153 = vrcp.pop %v1150
    %v1154 = vmul.f32 1.0, %v1153
    %v1155 = vtanh.pop %v1141
    %v1156 = vtanh.pop %v1142
    %v1157 = vmul.f32 %v1152, %v1063
    %v1158 = vmul.f32 %v1154, %v1064
    %1161 = vrot.lane.b32.xlu0 %v1155, 32
    %v1162 = vpop.permute.xlu0 %1161
    %1163 = vrot.lane.b32.xlu0 %v1156, 32
    %v1164 = vpop.permute.xlu0 %1163
    %v1167 = vmul.f32 %v1152, %v1162
    %v1168 = vmul.f32 %v1154, %v1164
    %1171 = vrot.lane.b32.xlu0 %v1167, 32
    %v1172 = vpop.permute.xlu0 %1171
    %1173 = vrot.lane.b32.xlu0 %v1168, 32
    %v1174 = vpop.permute.xlu0 %1173
    %v1177 = vadd.f32 %v1157, %v1172
    %v1178 = vadd.f32 %v1158, %v1174
    %v1179 = vtanh.pop %v1177
    %v1180 = vtanh.pop %v1178
    %1183 = vrot.lane.b32.xlu0 %v1179, 32
    %v1184 = vpop.permute.xlu0 %1183
    %1185 = vrot.lane.b32.xlu0 %v1180, 32
    %v1186 = vpop.permute.xlu0 %1185
    %v1189 = vmul.f32 %v1152, %v1184
    %v1190 = vmul.f32 %v1154, %v1186
    %v1191 = vpack.c.bf16 %v1190, %v1189
    %v1193 = vunpack.c.l.b16 %v1191
    %v1194 = vunpack.c.h.b16 %v1191
    %v1195 = vpack.c.b16 %v1193, %v1193
    %v1196 = vpack.c.b16 %v1194, %v1194
    %1197 = vrot.lane.b32.xlu0 %v1195, 64
    %v1198 = vpop.permute.xlu0 %1197
    %1199 = vrot.lane.b32.xlu0 %v1196, 64
    %v1200 = vpop.permute.xlu0 %1199
    %s1203 = scalar_lea.vmem [#allocation3], 56
    %1204 = vst.msk [vmem:[%s1203] sm:$0xf] %vm405, %v1198
    %1205 = vst.msk [vmem:[%s1203 + $0x4] sm:$0xf] %vm405, %v1200
    %1208 = vrot.lane.b32.xlu0 %v1189, 64
    %v1209 = vpop.permute.xlu0 %1208
    %1210 = vrot.lane.b32.xlu0 %v1190, 64
    %v1211 = vpop.permute.xlu0 %1210
    %1214 = vst.msk [vmem:[#allocation8] sm:$0xff] %vm138, %v1209
    %1215 = vst.msk [vmem:[#allocation8 + $0x8] sm:$0xff] %vm138, %v1211
    %1218 = vrot.lane.b32.xlu0 %v1177, 96
    %v1219 = vpop.permute.xlu0 %1218
    %1220 = vrot.lane.b32.xlu0 %v1178, 96
    %v1221 = vpop.permute.xlu0 %1220
    %1224 = vst.msk [vmem:[#allocation9] sm:$0xff] %vm138, %v1219
    %1225 = vst.msk [vmem:[#allocation9 + $0x8] sm:$0xff] %vm138, %v1221
    %s1226 = scalar_lea.vmem %s3, 16
    %v1227 = vld [vmem:[%s1226] sm:$0xf]
    %v1228 = vld [vmem:[%s1226 + $0x4] sm:$0xf]
    %v1229 = vld [vmem:[%s1226 + $0x8] sm:$0xf]
    %v1230 = vld [vmem:[%s1226 + $0xc] sm:$0xf]
    %s1231 = scalar_lea.vmem [#allocation5], 16
    %v1232 = vld [vmem:[%s1231] sm:$0xf]
    %v1233 = vld [vmem:[%s1231 + $0x4] sm:$0xf]
    %v1234 = vld [vmem:[%s1231 + $0x8] sm:$0xf]
    %v1235 = vld [vmem:[%s1231 + $0xc] sm:$0xf]
    %s1236 = scalar_lea.vmem %s5, 1
    %v1237 = vld [vmem:[%s1236] sm:$0x1]
    %s1238 = scalar_lea.vmem %s1, 16
    %v1239 = vld [vmem:[%s1238] sm:$0xff]
    %v1240 = vld [vmem:[%s1238 + $0x8] sm:$0xff]
    %s1241 = scalar_lea.vmem %s2, 16
    %v1242 = vld [vmem:[%s1241] sm:$0xff]
    %v1243 = vld [vmem:[%s1241 + $0x8] sm:$0xff]
    %v1244 = vld [vmem:[#allocation3] sm:$0xf]
    %v1245 = vld [vmem:[#allocation3 + $0x4] sm:$0xf]
    %v1246 = vld [vmem:[#allocation3 + $0x8] sm:$0xf]
    %v1247 = vld [vmem:[#allocation3 + $0xc] sm:$0xf]
    %v1248 = vld [vmem:[#allocation3 + $0x10] sm:$0xf]
    %v1249 = vld [vmem:[#allocation3 + $0x14] sm:$0xf]
    %v1250 = vld [vmem:[#allocation3 + $0x18] sm:$0xf]
    %v1251 = vld [vmem:[#allocation3 + $0x1c] sm:$0xf]
    %v1252 = vld [vmem:[#allocation3 + $0x20] sm:$0xf]
    %v1253 = vld [vmem:[#allocation3 + $0x24] sm:$0xf]
    %v1254 = vld [vmem:[#allocation3 + $0x28] sm:$0xf]
    %v1255 = vld [vmem:[#allocation3 + $0x2c] sm:$0xf]
    %v1256 = vld [vmem:[#allocation3 + $0x30] sm:$0xf]
    %v1257 = vld [vmem:[#allocation3 + $0x34] sm:$0xf]
    %v1258 = vld [vmem:[#allocation3 + $0x38] sm:$0xf]
    %v1259 = vld [vmem:[#allocation3 + $0x3c] sm:$0xf]
    %v1261 = vlaneseq
    %v1262 = vshrl.u32 %v1261, 7
    %v1263 = vsub.s32 0, %v1262
    %v1264 = vrot.slane %v1237, %v1263
    %v1282 = vunpack.c.l.b16 %v1244
    %v1283 = vunpack.c.l.b16 %v1245
    %v1284 = vunpack.c.l.b16 %v1246
    %v1285 = vunpack.c.l.b16 %v1247
    %v1286 = vunpack.c.l.b16 %v1248
    %v1287 = vunpack.c.l.b16 %v1249
    %v1288 = vunpack.c.l.b16 %v1250
    %v1289 = vunpack.c.l.b16 %v1251
    %v1290 = vunpack.c.l.b16 %v1252
    %v1291 = vunpack.c.l.b16 %v1253
    %v1292 = vunpack.c.l.b16 %v1254
    %v1293 = vunpack.c.l.b16 %v1255
    %v1294 = vunpack.c.l.b16 %v1256
    %v1295 = vunpack.c.l.b16 %v1257
    %v1296 = vunpack.c.l.b16 %v1258
    %v1297 = vunpack.c.l.b16 %v1259
    %v1298 = vpack.c.b16 %v1283, %v1282
    %v1299 = vpack.c.b16 %v1285, %v1284
    %v1300 = vpack.c.b16 %v1287, %v1286
    %v1301 = vpack.c.b16 %v1289, %v1288
    %v1302 = vpack.c.b16 %v1291, %v1290
    %v1303 = vpack.c.b16 %v1293, %v1292
    %v1304 = vpack.c.b16 %v1295, %v1294
    %v1305 = vpack.c.b16 %v1297, %v1296
    %v1310 = vunpack.c.l.b16 %v1227
    %v1311 = vunpack.c.l.b16 %v1228
    %v1312 = vunpack.c.l.b16 %v1229
    %v1313 = vunpack.c.l.b16 %v1230
    %v1314 = vpack.c.b16 %v1311, %v1310
    %v1315 = vpack.c.b16 %v1313, %v1312
    %v1319 = vsel %vm138, %v1298, 0
    %v1322 = vsel %vm138, %v1299, 0
    %v1325 = vsel %vm138, %v1300, 0
    %v1328 = vsel %vm138, %v1301, 0
    %v1331 = vsel %vm138, %v1302, 0
    %v1334 = vsel %vm138, %v1303, 0
    %v1337 = vsel %vm138, %v1304, 0
    %v1340 = vsel %vm138, %v1305, 0
    %1342 = vmatprep.subr.bf16.mxu0 0
    %1343 = vmatpush1.bf16.msra.mxu0 0
    %1344 = vmatprep.subr.bf16.mxu0 0
    %1345 = vmatpush1.bf16.msra.mxu0 0
    %1346 = vmatprep.subr.bf16.mxu0 0
    %1347 = vmatpush1.bf16.msra.mxu0 0
    %1348 = vmatprep.subr.bf16.mxu0 0
    %1349 = vmatpush1.bf16.msra.mxu0 0
    %1350 = vmatprep.subr.bf16.mxu0 0
    %1351 = vmatpush1.bf16.msra.mxu0 0
    %1352 = vmatprep.subr.bf16.mxu0 0
    %1353 = vmatpush1.bf16.msra.mxu0 0
    %1354 = vmatprep.subr.bf16.mxu0 0
    %1355 = vmatpush1.bf16.msra.mxu0 %v1315
    %1356 = vmatprep.subr.bf16.mxu0 0
    %1357 = vmatpush1.bf16.msra.mxu0 %v1314
    %1358 = vmatprep.subr.bf16.mxu0 0
    %1359 = vmatpush2.bf16.msra.mxu0 0
    %1360 = vmatprep.subr.bf16.mxu0 0
    %1361 = vmatpush2.bf16.msra.mxu0 0
    %1362 = vmatprep.subr.bf16.mxu0 0
    %1363 = vmatpush2.bf16.msra.mxu0 0
    %1364 = vmatprep.subr.bf16.mxu0 0
    %1365 = vmatpush2.bf16.msra.mxu0 0
    %1366 = vmatprep.subr.bf16.mxu0 0
    %1367 = vmatpush2.bf16.msra.mxu0 0
    %1368 = vmatprep.subr.bf16.mxu0 0
    %1369 = vmatpush2.bf16.msra.mxu0 0
    %1370 = vmatprep.subr.bf16.mxu0 0
    %1371 = vmatpush2.bf16.msra.mxu0 0
    %1372 = vmatprep.subr.bf16.mxu0 0
    %1373 = vmatpush2.bf16.msra.mxu0 0
    %1374 = vmatprep.mubr.bf16.mxu0 0
    %1375 = vmatmul.mubr.bf16.gmra.mxu0 %v1319
    %v1376 = vpop.f32.mrf.mxu0
    %v1377 = vadd.f32 %v1264, %v1376
    %v1378 = vpop.f32.mrf.mxu0
    %v1379 = vpop.f32.mrf.mxu0
    %v1380 = vadd.f32 %v1264, %v1379
    %v1381 = vpop.f32.mrf.mxu0
    %1382 = vmatprep.mubr.bf16.mxu0 0
    %1383 = vmatmul.mubr.bf16.gmra.mxu0 %v1322
    %v1384 = vpop.f32.mrf.mxu0
    %v1385 = vadd.f32 %v1264, %v1384
    %v1386 = vpop.f32.mrf.mxu0
    %v1387 = vpop.f32.mrf.mxu0
    %v1388 = vadd.f32 %v1264, %v1387
    %v1389 = vpop.f32.mrf.mxu0
    %1390 = vmatprep.mubr.bf16.mxu0 0
    %1391 = vmatmul.mubr.bf16.gmra.mxu0 %v1325
    %v1392 = vpop.f32.mrf.mxu0
    %v1393 = vadd.f32 %v1264, %v1392
    %v1394 = vpop.f32.mrf.mxu0
    %v1395 = vpop.f32.mrf.mxu0
    %v1396 = vadd.f32 %v1264, %v1395
    %v1397 = vpop.f32.mrf.mxu0
    %1398 = vmatprep.mubr.bf16.mxu0 0
    %1399 = vmatmul.mubr.bf16.gmra.mxu0 %v1328
    %v1400 = vpop.f32.mrf.mxu0
    %v1401 = vadd.f32 %v1264, %v1400
    %v1402 = vpop.f32.mrf.mxu0
    %v1403 = vpop.f32.mrf.mxu0
    %v1404 = vadd.f32 %v1264, %v1403
    %v1405 = vpop.f32.mrf.mxu0
    %1406 = vmatprep.mubr.bf16.mxu0 0
    %1407 = vmatmul.mubr.bf16.gmra.mxu0 %v1331
    %v1408 = vpop.f32.mrf.mxu0
    %v1409 = vadd.f32 %v1264, %v1408
    %v1410 = vpop.f32.mrf.mxu0
    %v1411 = vpop.f32.mrf.mxu0
    %v1412 = vadd.f32 %v1264, %v1411
    %v1413 = vpop.f32.mrf.mxu0
    %1414 = vmatprep.mubr.bf16.mxu0 0
    %1415 = vmatmul.mubr.bf16.gmra.mxu0 %v1334
    %v1416 = vpop.f32.mrf.mxu0
    %v1417 = vadd.f32 %v1264, %v1416
    %v1418 = vpop.f32.mrf.mxu0
    %v1419 = vpop.f32.mrf.mxu0
    %v1420 = vadd.f32 %v1264, %v1419
    %v1421 = vpop.f32.mrf.mxu0
    %1422 = vmatprep.mubr.bf16.mxu0 0
    %1423 = vmatmul.mubr.bf16.gmra.mxu0 %v1337
    %v1424 = vpop.f32.mrf.mxu0
    %v1425 = vadd.f32 %v1264, %v1424
    %v1426 = vpop.f32.mrf.mxu0
    %v1427 = vpop.f32.mrf.mxu0
    %v1428 = vadd.f32 %v1264, %v1427
    %v1429 = vpop.f32.mrf.mxu0
    %1430 = vmatprep.mubr.bf16.mxu0 0
    %1431 = vmatmul.mubr.bf16.gmra.mxu0 %v1340
    %v1432 = vpop.f32.mrf.mxu0
    %v1433 = vadd.f32 %v1264, %v1432
    %v1434 = vpop.f32.mrf.mxu0
    %v1435 = vpop.f32.mrf.mxu0
    %v1436 = vadd.f32 %v1264, %v1435
    %v1437 = vpop.f32.mrf.mxu0
    %1438 = vdwg.mxu0
    %1439 = vst [vmem:[#allocation2] sm:$0xff] %v1377
    %1440 = vst [vmem:[#allocation2 + $0x8] sm:$0xff] %v1380
    %1441 = vst [vmem:[#allocation2 + $0x10] sm:$0xff] %v1385
    %1442 = vst [vmem:[#allocation2 + $0x18] sm:$0xff] %v1388
    %1443 = vst [vmem:[#allocation2 + $0x20] sm:$0xff] %v1393
    %1444 = vst [vmem:[#allocation2 + $0x28] sm:$0xff] %v1396
    %1445 = vst [vmem:[#allocation2 + $0x30] sm:$0xff] %v1401
    %1446 = vst [vmem:[#allocation2 + $0x38] sm:$0xff] %v1404
    %1447 = vst [vmem:[#allocation2 + $0x40] sm:$0xff] %v1409
    %1448 = vst [vmem:[#allocation2 + $0x48] sm:$0xff] %v1412
    %1449 = vst [vmem:[#allocation2 + $0x50] sm:$0xff] %v1417
    %1450 = vst [vmem:[#allocation2 + $0x58] sm:$0xff] %v1420
    %1451 = vst [vmem:[#allocation2 + $0x60] sm:$0xff] %v1425
    %1452 = vst [vmem:[#allocation2 + $0x68] sm:$0xff] %v1428
    %1453 = vst [vmem:[#allocation2 + $0x70] sm:$0xff] %v1433
    %1454 = vst [vmem:[#allocation2 + $0x78] sm:$0xff] %v1436
    %v1455 = vld [vmem:[#allocation2] sm:$0xff]
    %v1456 = vld [vmem:[#allocation2 + $0x8] sm:$0xff]
    %v1457 = vpack.c.bf16 %v1240, %v1239
    %v1462 = vunpack.c.l.b16 %v1232
    %v1463 = vunpack.c.l.b16 %v1233
    %v1464 = vunpack.c.l.b16 %v1234
    %v1465 = vunpack.c.l.b16 %v1235
    %v1466 = vpack.c.b16 %v1463, %v1462
    %v1467 = vpack.c.b16 %v1465, %v1464
    %v1471 = vsel %vm138, %v1457, 0
    %1473 = vmatprep.subr.bf16.mxu0 0
    %1474 = vmatpush1.bf16.msra.mxu0 0
    %1475 = vmatprep.subr.bf16.mxu0 0
    %1476 = vmatpush1.bf16.msra.mxu0 0
    %1477 = vmatprep.subr.bf16.mxu0 0
    %1478 = vmatpush1.bf16.msra.mxu0 0
    %1479 = vmatprep.subr.bf16.mxu0 0
    %1480 = vmatpush1.bf16.msra.mxu0 0
    %1481 = vmatprep.subr.bf16.mxu0 0
    %1482 = vmatpush1.bf16.msra.mxu0 0
    %1483 = vmatprep.subr.bf16.mxu0 0
    %1484 = vmatpush1.bf16.msra.mxu0 0
    %1485 = vmatprep.subr.bf16.mxu0 0
    %1486 = vmatpush1.bf16.msra.mxu0 %v1467
    %1487 = vmatprep.subr.bf16.mxu0 0
    %1488 = vmatpush1.bf16.msra.mxu0 %v1466
    %1489 = vmatprep.subr.bf16.mxu0 0
    %1490 = vmatpush2.bf16.msra.mxu0 0
    %1491 = vmatprep.subr.bf16.mxu0 0
    %1492 = vmatpush2.bf16.msra.mxu0 0
    %1493 = vmatprep.subr.bf16.mxu0 0
    %1494 = vmatpush2.bf16.msra.mxu0 0
    %1495 = vmatprep.subr.bf16.mxu0 0
    %1496 = vmatpush2.bf16.msra.mxu0 0
    %1497 = vmatprep.subr.bf16.mxu0 0
    %1498 = vmatpush2.bf16.msra.mxu0 0
    %1499 = vmatprep.subr.bf16.mxu0 0
    %1500 = vmatpush2.bf16.msra.mxu0 0
    %1501 = vmatprep.subr.bf16.mxu0 0
    %1502 = vmatpush2.bf16.msra.mxu0 0
    %1503 = vmatprep.subr.bf16.mxu0 0
    %1504 = vmatpush2.bf16.msra.mxu0 0
    %1505 = vmatprep.mubr.bf16.mxu0 0
    %1506 = vmatmul.mubr.bf16.gmra.mxu0 %v1471
    %v1507 = vpop.f32.mrf.mxu0
    %v1508 = vadd.f32 0.0, %v1507
    %v1509 = vpop.f32.mrf.mxu0
    %v1510 = vpop.f32.mrf.mxu0
    %v1511 = vadd.f32 0.0, %v1510
    %v1512 = vpop.f32.mrf.mxu0
    %1513 = vdwg.mxu0
    %v1514 = vadd.f32 %v1455, %v1508
    %v1515 = vadd.f32 %v1456, %v1511
    %v1516 = vxor.u32 %v1514, 2147483648
    %v1517 = vxor.u32 %v1515, 2147483648
    %v1518 = vmul.f32 %v1516, 1.442695
    %v1519 = vpow.pop %v1518
    %v1520 = vmul.f32 %v1517, 1.442695
    %v1521 = vpow.pop %v1520
    %v1522 = vadd.f32 %v1519, 1.0
    %v1523 = vadd.f32 %v1521, 1.0
    %v1524 = vrcp.pop %v1522
    %v1525 = vmul.f32 1.0, %v1524
    %v1526 = vrcp.pop %v1523
    %v1527 = vmul.f32 1.0, %v1526
    %v1528 = vtanh.pop %v1514
    %v1529 = vtanh.pop %v1515
    %1532 = vrot.lane.b32.xlu0 %v1242, 32
    %v1533 = vpop.permute.xlu0 %1532
    %1534 = vrot.lane.b32.xlu0 %v1243, 32
    %v1535 = vpop.permute.xlu0 %1534
    %v1538 = vmul.f32 %v1525, %v1533
    %v1539 = vmul.f32 %v1527, %v1535
    %1542 = vrot.lane.b32.xlu0 %v1528, 32
    %v1543 = vpop.permute.xlu0 %1542
    %1544 = vrot.lane.b32.xlu0 %v1529, 32
    %v1545 = vpop.permute.xlu0 %1544
    %v1548 = vmul.f32 %v1525, %v1543
    %v1549 = vmul.f32 %v1527, %v1545
    %1552 = vrot.lane.b32.xlu0 %v1548, 32
    %v1553 = vpop.permute.xlu0 %1552
    %1554 = vrot.lane.b32.xlu0 %v1549, 32
    %v1555 = vpop.permute.xlu0 %1554
    %v1558 = vadd.f32 %v1538, %v1553
    %v1559 = vadd.f32 %v1539, %v1555
    %v1560 = vtanh.pop %v1558
    %v1561 = vtanh.pop %v1559
    %1564 = vrot.lane.b32.xlu0 %v1560, 32
    %v1565 = vpop.permute.xlu0 %1564
    %1566 = vrot.lane.b32.xlu0 %v1561, 32
    %v1567 = vpop.permute.xlu0 %1566
    %v1570 = vmul.f32 %v1525, %v1565
    %v1571 = vmul.f32 %v1527, %v1567
    %v1572 = vld [vmem:[%s408] sm:$0xff]
    %v1573 = vld [vmem:[%s408 + $0x8] sm:$0xff]
    %v1574 = vpack.c.bf16 %v1571, %v1570
    %1576 = vrot.lane.b32.xlu0 %v1574, 64
    %v1577 = vpop.permute.xlu0 %1576
    %v1579 = vsel %vm138, %v1577, 0
    %1581 = vmatprep.subr.bf16.mxu0 0
    %1582 = vmatpush1.bf16.msra.mxu0 0
    %1583 = vmatprep.subr.bf16.mxu0 0
    %1584 = vmatpush1.bf16.msra.mxu0 0
    %1585 = vmatprep.subr.bf16.mxu0 0
    %1586 = vmatpush1.bf16.msra.mxu0 0
    %1587 = vmatprep.subr.bf16.mxu0 0
    %1588 = vmatpush1.bf16.msra.mxu0 0
    %1589 = vmatprep.subr.bf16.mxu0 0
    %1590 = vmatpush1.bf16.msra.mxu0 0
    %1591 = vmatprep.subr.bf16.mxu0 0
    %1592 = vmatpush1.bf16.msra.mxu0 0
    %1593 = vmatprep.subr.bf16.mxu0 0
    %1594 = vmatpush1.bf16.msra.mxu0 %v1467
    %1595 = vmatprep.subr.bf16.mxu0 0
    %1596 = vmatpush1.bf16.msra.mxu0 %v1466
    %1597 = vmatprep.subr.bf16.mxu0 0
    %1598 = vmatpush2.bf16.msra.mxu0 0
    %1599 = vmatprep.subr.bf16.mxu0 0
    %1600 = vmatpush2.bf16.msra.mxu0 0
    %1601 = vmatprep.subr.bf16.mxu0 0
    %1602 = vmatpush2.bf16.msra.mxu0 0
    %1603 = vmatprep.subr.bf16.mxu0 0
    %1604 = vmatpush2.bf16.msra.mxu0 0
    %1605 = vmatprep.subr.bf16.mxu0 0
    %1606 = vmatpush2.bf16.msra.mxu0 0
    %1607 = vmatprep.subr.bf16.mxu0 0
    %1608 = vmatpush2.bf16.msra.mxu0 0
    %1609 = vmatprep.subr.bf16.mxu0 0
    %1610 = vmatpush2.bf16.msra.mxu0 0
    %1611 = vmatprep.subr.bf16.mxu0 0
    %1612 = vmatpush2.bf16.msra.mxu0 0
    %1613 = vmatprep.mubr.bf16.mxu0 0
    %1614 = vmatmul.mubr.bf16.gmra.mxu0 %v1579
    %v1615 = vpop.f32.mrf.mxu0
    %v1616 = vadd.f32 0.0, %v1615
    %v1617 = vpop.f32.mrf.mxu0
    %v1618 = vpop.f32.mrf.mxu0
    %v1619 = vadd.f32 0.0, %v1618
    %v1620 = vpop.f32.mrf.mxu0
    %1621 = vdwg.mxu0
    %v1622 = vadd.f32 %v1572, %v1616
    %v1623 = vadd.f32 %v1573, %v1619
    %v1624 = vxor.u32 %v1622, 2147483648
    %v1625 = vxor.u32 %v1623, 2147483648
    %v1626 = vmul.f32 %v1624, 1.442695
    %v1627 = vpow.pop %v1626
    %v1628 = vmul.f32 %v1625, 1.442695
    %v1629 = vpow.pop %v1628
    %v1630 = vadd.f32 %v1627, 1.0
    %v1631 = vadd.f32 %v1629, 1.0
    %v1632 = vrcp.pop %v1630
    %v1633 = vmul.f32 1.0, %v1632
    %v1634 = vrcp.pop %v1631
    %v1635 = vmul.f32 1.0, %v1634
    %v1636 = vtanh.pop %v1622
    %v1637 = vtanh.pop %v1623
    %v1638 = vmul.f32 %v1633, %v1558
    %v1639 = vmul.f32 %v1635, %v1559
    %1642 = vrot.lane.b32.xlu0 %v1636, 32
    %v1643 = vpop.permute.xlu0 %1642
    %1644 = vrot.lane.b32.xlu0 %v1637, 32
    %v1645 = vpop.permute.xlu0 %1644
    %v1648 = vmul.f32 %v1633, %v1643
    %v1649 = vmul.f32 %v1635, %v1645
    %1652 = vrot.lane.b32.xlu0 %v1648, 32
    %v1653 = vpop.permute.xlu0 %1652
    %1654 = vrot.lane.b32.xlu0 %v1649, 32
    %v1655 = vpop.permute.xlu0 %1654
    %v1658 = vadd.f32 %v1638, %v1653
    %v1659 = vadd.f32 %v1639, %v1655
    %v1660 = vtanh.pop %v1658
    %v1661 = vtanh.pop %v1659
    %1664 = vrot.lane.b32.xlu0 %v1660, 32
    %v1665 = vpop.permute.xlu0 %1664
    %1666 = vrot.lane.b32.xlu0 %v1661, 32
    %v1667 = vpop.permute.xlu0 %1666
    %v1670 = vmul.f32 %v1633, %v1665
    %v1671 = vmul.f32 %v1635, %v1667
    %v1672 = vld [vmem:[%s522] sm:$0xff]
    %v1673 = vld [vmem:[%s522 + $0x8] sm:$0xff]
    %v1674 = vpack.c.bf16 %v1671, %v1670
    %1676 = vrot.lane.b32.xlu0 %v1674, 64
    %v1677 = vpop.permute.xlu0 %1676
    %v1679 = vsel %vm138, %v1677, 0
    %1681 = vmatprep.subr.bf16.mxu0 0
    %1682 = vmatpush1.bf16.msra.mxu0 0
    %1683 = vmatprep.subr.bf16.mxu0 0
    %1684 = vmatpush1.bf16.msra.mxu0 0
    %1685 = vmatprep.subr.bf16.mxu0 0
    %1686 = vmatpush1.bf16.msra.mxu0 0
    %1687 = vmatprep.subr.bf16.mxu0 0
    %1688 = vmatpush1.bf16.msra.mxu0 0
    %1689 = vmatprep.subr.bf16.mxu0 0
    %1690 = vmatpush1.bf16.msra.mxu0 0
    %1691 = vmatprep.subr.bf16.mxu0 0
    %1692 = vmatpush1.bf16.msra.mxu0 0
    %1693 = vmatprep.subr.bf16.mxu0 0
    %1694 = vmatpush1.bf16.msra.mxu0 %v1467
    %1695 = vmatprep.subr.bf16.mxu0 0
    %1696 = vmatpush1.bf16.msra.mxu0 %v1466
    %1697 = vmatprep.subr.bf16.mxu0 0
    %1698 = vmatpush2.bf16.msra.mxu0 0
    %1699 = vmatprep.subr.bf16.mxu0 0
    %1700 = vmatpush2.bf16.msra.mxu0 0
    %1701 = vmatprep.subr.bf16.mxu0 0
    %1702 = vmatpush2.bf16.msra.mxu0 0
    %1703 = vmatprep.subr.bf16.mxu0 0
    %1704 = vmatpush2.bf16.msra.mxu0 0
    %1705 = vmatprep.subr.bf16.mxu0 0
    %1706 = vmatpush2.bf16.msra.mxu0 0
    %1707 = vmatprep.subr.bf16.mxu0 0
    %1708 = vmatpush2.bf16.msra.mxu0 0
    %1709 = vmatprep.subr.bf16.mxu0 0
    %1710 = vmatpush2.bf16.msra.mxu0 0
    %1711 = vmatprep.subr.bf16.mxu0 0
    %1712 = vmatpush2.bf16.msra.mxu0 0
    %1713 = vmatprep.mubr.bf16.mxu0 0
    %1714 = vmatmul.mubr.bf16.gmra.mxu0 %v1679
    %v1715 = vpop.f32.mrf.mxu0
    %v1716 = vadd.f32 0.0, %v1715
    %v1717 = vpop.f32.mrf.mxu0
    %v1718 = vpop.f32.mrf.mxu0
    %v1719 = vadd.f32 0.0, %v1718
    %v1720 = vpop.f32.mrf.mxu0
    %1721 = vdwg.mxu0
    %v1722 = vadd.f32 %v1672, %v1716
    %v1723 = vadd.f32 %v1673, %v1719
    %v1724 = vxor.u32 %v1722, 2147483648
    %v1725 = vxor.u32 %v1723, 2147483648
    %v1726 = vmul.f32 %v1724, 1.442695
    %v1727 = vpow.pop %v1726
    %v1728 = vmul.f32 %v1725, 1.442695
    %v1729 = vpow.pop %v1728
    %v1730 = vadd.f32 %v1727, 1.0
    %v1731 = vadd.f32 %v1729, 1.0
    %v1732 = vrcp.pop %v1730
    %v1733 = vmul.f32 1.0, %v1732
    %v1734 = vrcp.pop %v1731
    %v1735 = vmul.f32 1.0, %v1734
    %v1736 = vtanh.pop %v1722
    %v1737 = vtanh.pop %v1723
    %v1738 = vmul.f32 %v1733, %v1658
    %v1739 = vmul.f32 %v1735, %v1659
    %1742 = vrot.lane.b32.xlu0 %v1736, 32
    %v1743 = vpop.permute.xlu0 %1742
    %1744 = vrot.lane.b32.xlu0 %v1737, 32
    %v1745 = vpop.permute.xlu0 %1744
    %v1748 = vmul.f32 %v1733, %v1743
    %v1749 = vmul.f32 %v1735, %v1745
    %1752 = vrot.lane.b32.xlu0 %v1748, 32
    %v1753 = vpop.permute.xlu0 %1752
    %1754 = vrot.lane.b32.xlu0 %v1749, 32
    %v1755 = vpop.permute.xlu0 %1754
    %v1758 = vadd.f32 %v1738, %v1753
    %v1759 = vadd.f32 %v1739, %v1755
    %v1760 = vtanh.pop %v1758
    %v1761 = vtanh.pop %v1759
    %1764 = vrot.lane.b32.xlu0 %v1760, 32
    %v1765 = vpop.permute.xlu0 %1764
    %1766 = vrot.lane.b32.xlu0 %v1761, 32
    %v1767 = vpop.permute.xlu0 %1766
    %v1770 = vmul.f32 %v1733, %v1765
    %v1771 = vmul.f32 %v1735, %v1767
    %v1772 = vld [vmem:[%s636] sm:$0xff]
    %v1773 = vld [vmem:[%s636 + $0x8] sm:$0xff]
    %v1774 = vpack.c.bf16 %v1771, %v1770
    %1776 = vrot.lane.b32.xlu0 %v1774, 64
    %v1777 = vpop.permute.xlu0 %1776
    %v1779 = vsel %vm138, %v1777, 0
    %1781 = vmatprep.subr.bf16.mxu0 0
    %1782 = vmatpush1.bf16.msra.mxu0 0
    %1783 = vmatprep.subr.bf16.mxu0 0
    %1784 = vmatpush1.bf16.msra.mxu0 0
    %1785 = vmatprep.subr.bf16.mxu0 0
    %1786 = vmatpush1.bf16.msra.mxu0 0
    %1787 = vmatprep.subr.bf16.mxu0 0
    %1788 = vmatpush1.bf16.msra.mxu0 0
    %1789 = vmatprep.subr.bf16.mxu0 0
    %1790 = vmatpush1.bf16.msra.mxu0 0
    %1791 = vmatprep.subr.bf16.mxu0 0
    %1792 = vmatpush1.bf16.msra.mxu0 0
    %1793 = vmatprep.subr.bf16.mxu0 0
    %1794 = vmatpush1.bf16.msra.mxu0 %v1467
    %1795 = vmatprep.subr.bf16.mxu0 0
    %1796 = vmatpush1.bf16.msra.mxu0 %v1466
    %1797 = vmatprep.subr.bf16.mxu0 0
    %1798 = vmatpush2.bf16.msra.mxu0 0
    %1799 = vmatprep.subr.bf16.mxu0 0
    %1800 = vmatpush2.bf16.msra.mxu0 0
    %1801 = vmatprep.subr.bf16.mxu0 0
    %1802 = vmatpush2.bf16.msra.mxu0 0
    %1803 = vmatprep.subr.bf16.mxu0 0
    %1804 = vmatpush2.bf16.msra.mxu0 0
    %1805 = vmatprep.subr.bf16.mxu0 0
    %1806 = vmatpush2.bf16.msra.mxu0 0
    %1807 = vmatprep.subr.bf16.mxu0 0
    %1808 = vmatpush2.bf16.msra.mxu0 0
    %1809 = vmatprep.subr.bf16.mxu0 0
    %1810 = vmatpush2.bf16.msra.mxu0 0
    %1811 = vmatprep.subr.bf16.mxu0 0
    %1812 = vmatpush2.bf16.msra.mxu0 0
    %1813 = vmatprep.mubr.bf16.mxu0 0
    %1814 = vmatmul.mubr.bf16.gmra.mxu0 %v1779
    %v1815 = vpop.f32.mrf.mxu0
    %v1816 = vadd.f32 0.0, %v1815
    %v1817 = vpop.f32.mrf.mxu0
    %v1818 = vpop.f32.mrf.mxu0
    %v1819 = vadd.f32 0.0, %v1818
    %v1820 = vpop.f32.mrf.mxu0
    %1821 = vdwg.mxu0
    %v1822 = vadd.f32 %v1772, %v1816
    %v1823 = vadd.f32 %v1773, %v1819
    %v1824 = vxor.u32 %v1822, 2147483648
    %v1825 = vxor.u32 %v1823, 2147483648
    %v1826 = vmul.f32 %v1824, 1.442695
    %v1827 = vpow.pop %v1826
    %v1828 = vmul.f32 %v1825, 1.442695
    %v1829 = vpow.pop %v1828
    %v1830 = vadd.f32 %v1827, 1.0
    %v1831 = vadd.f32 %v1829, 1.0
    %v1832 = vrcp.pop %v1830
    %v1833 = vmul.f32 1.0, %v1832
    %v1834 = vrcp.pop %v1831
    %v1835 = vmul.f32 1.0, %v1834
    %v1836 = vtanh.pop %v1822
    %v1837 = vtanh.pop %v1823
    %v1838 = vmul.f32 %v1833, %v1758
    %v1839 = vmul.f32 %v1835, %v1759
    %1842 = vrot.lane.b32.xlu0 %v1836, 32
    %v1843 = vpop.permute.xlu0 %1842
    %1844 = vrot.lane.b32.xlu0 %v1837, 32
    %v1845 = vpop.permute.xlu0 %1844
    %v1848 = vmul.f32 %v1833, %v1843
    %v1849 = vmul.f32 %v1835, %v1845
    %1852 = vrot.lane.b32.xlu0 %v1848, 32
    %v1853 = vpop.permute.xlu0 %1852
    %1854 = vrot.lane.b32.xlu0 %v1849, 32
    %v1855 = vpop.permute.xlu0 %1854
    %v1858 = vadd.f32 %v1838, %v1853
    %v1859 = vadd.f32 %v1839, %v1855
    %v1860 = vtanh.pop %v1858
    %v1861 = vtanh.pop %v1859
    %1864 = vrot.lane.b32.xlu0 %v1860, 32
    %v1865 = vpop.permute.xlu0 %1864
    %1866 = vrot.lane.b32.xlu0 %v1861, 32
    %v1867 = vpop.permute.xlu0 %1866
    %v1870 = vmul.f32 %v1833, %v1865
    %v1871 = vmul.f32 %v1835, %v1867
    %v1872 = vld [vmem:[%s750] sm:$0xff]
    %v1873 = vld [vmem:[%s750 + $0x8] sm:$0xff]
    %v1874 = vpack.c.bf16 %v1871, %v1870
    %1876 = vrot.lane.b32.xlu0 %v1874, 64
    %v1877 = vpop.permute.xlu0 %1876
    %v1879 = vsel %vm138, %v1877, 0
    %1881 = vmatprep.subr.bf16.mxu0 0
    %1882 = vmatpush1.bf16.msra.mxu0 0
    %1883 = vmatprep.subr.bf16.mxu0 0
    %1884 = vmatpush1.bf16.msra.mxu0 0
    %1885 = vmatprep.subr.bf16.mxu0 0
    %1886 = vmatpush1.bf16.msra.mxu0 0
    %1887 = vmatprep.subr.bf16.mxu0 0
    %1888 = vmatpush1.bf16.msra.mxu0 0
    %1889 = vmatprep.subr.bf16.mxu0 0
    %1890 = vmatpush1.bf16.msra.mxu0 0
    %1891 = vmatprep.subr.bf16.mxu0 0
    %1892 = vmatpush1.bf16.msra.mxu0 0
    %1893 = vmatprep.subr.bf16.mxu0 0
    %1894 = vmatpush1.bf16.msra.mxu0 %v1467
    %1895 = vmatprep.subr.bf16.mxu0 0
    %1896 = vmatpush1.bf16.msra.mxu0 %v1466
    %1897 = vmatprep.subr.bf16.mxu0 0
    %1898 = vmatpush2.bf16.msra.mxu0 0
    %1899 = vmatprep.subr.bf16.mxu0 0
    %1900 = vmatpush2.bf16.msra.mxu0 0
    %1901 = vmatprep.subr.bf16.mxu0 0
    %1902 = vmatpush2.bf16.msra.mxu0 0
    %1903 = vmatprep.subr.bf16.mxu0 0
    %1904 = vmatpush2.bf16.msra.mxu0 0
    %1905 = vmatprep.subr.bf16.mxu0 0
    %1906 = vmatpush2.bf16.msra.mxu0 0
    %1907 = vmatprep.subr.bf16.mxu0 0
    %1908 = vmatpush2.bf16.msra.mxu0 0
    %1909 = vmatprep.subr.bf16.mxu0 0
    %1910 = vmatpush2.bf16.msra.mxu0 0
    %1911 = vmatprep.subr.bf16.mxu0 0
    %1912 = vmatpush2.bf16.msra.mxu0 0
    %1913 = vmatprep.mubr.bf16.mxu0 0
    %1914 = vmatmul.mubr.bf16.gmra.mxu0 %v1879
    %v1915 = vpop.f32.mrf.mxu0
    %v1916 = vadd.f32 0.0, %v1915
    %v1917 = vpop.f32.mrf.mxu0
    %v1918 = vpop.f32.mrf.mxu0
    %v1919 = vadd.f32 0.0, %v1918
    %v1920 = vpop.f32.mrf.mxu0
    %1921 = vdwg.mxu0
    %v1922 = vadd.f32 %v1872, %v1916
    %v1923 = vadd.f32 %v1873, %v1919
    %v1924 = vxor.u32 %v1922, 2147483648
    %v1925 = vxor.u32 %v1923, 2147483648
    %v1926 = vmul.f32 %v1924, 1.442695
    %v1927 = vpow.pop %v1926
    %v1928 = vmul.f32 %v1925, 1.442695
    %v1929 = vpow.pop %v1928
    %v1930 = vadd.f32 %v1927, 1.0
    %v1931 = vadd.f32 %v1929, 1.0
    %v1932 = vrcp.pop %v1930
    %v1933 = vmul.f32 1.0, %v1932
    %v1934 = vrcp.pop %v1931
    %v1935 = vmul.f32 1.0, %v1934
    %v1936 = vtanh.pop %v1922
    %v1937 = vtanh.pop %v1923
    %v1938 = vmul.f32 %v1933, %v1858
    %v1939 = vmul.f32 %v1935, %v1859
    %1942 = vrot.lane.b32.xlu0 %v1936, 32
    %v1943 = vpop.permute.xlu0 %1942
    %1944 = vrot.lane.b32.xlu0 %v1937, 32
    %v1945 = vpop.permute.xlu0 %1944
    %v1948 = vmul.f32 %v1933, %v1943
    %v1949 = vmul.f32 %v1935, %v1945
    %1952 = vrot.lane.b32.xlu0 %v1948, 32
    %v1953 = vpop.permute.xlu0 %1952
    %1954 = vrot.lane.b32.xlu0 %v1949, 32
    %v1955 = vpop.permute.xlu0 %1954
    %v1958 = vadd.f32 %v1938, %v1953
    %v1959 = vadd.f32 %v1939, %v1955
    %v1960 = vtanh.pop %v1958
    %v1961 = vtanh.pop %v1959
    %1964 = vrot.lane.b32.xlu0 %v1960, 32
    %v1965 = vpop.permute.xlu0 %1964
    %1966 = vrot.lane.b32.xlu0 %v1961, 32
    %v1967 = vpop.permute.xlu0 %1966
    %v1970 = vmul.f32 %v1933, %v1965
    %v1971 = vmul.f32 %v1935, %v1967
    %v1972 = vld [vmem:[%s864] sm:$0xff]
    %v1973 = vld [vmem:[%s864 + $0x8] sm:$0xff]
    %v1974 = vpack.c.bf16 %v1971, %v1970
    %1976 = vrot.lane.b32.xlu0 %v1974, 64
    %v1977 = vpop.permute.xlu0 %1976
    %v1979 = vsel %vm138, %v1977, 0
    %1981 = vmatprep.subr.bf16.mxu0 0
    %1982 = vmatpush1.bf16.msra.mxu0 0
    %1983 = vmatprep.subr.bf16.mxu0 0
    %1984 = vmatpush1.bf16.msra.mxu0 0
    %1985 = vmatprep.subr.bf16.mxu0 0
    %1986 = vmatpush1.bf16.msra.mxu0 0
    %1987 = vmatprep.subr.bf16.mxu0 0
    %1988 = vmatpush1.bf16.msra.mxu0 0
    %1989 = vmatprep.subr.bf16.mxu0 0
    %1990 = vmatpush1.bf16.msra.mxu0 0
    %1991 = vmatprep.subr.bf16.mxu0 0
    %1992 = vmatpush1.bf16.msra.mxu0 0
    %1993 = vmatprep.subr.bf16.mxu0 0
    %1994 = vmatpush1.bf16.msra.mxu0 %v1467
    %1995 = vmatprep.subr.bf16.mxu0 0
    %1996 = vmatpush1.bf16.msra.mxu0 %v1466
    %1997 = vmatprep.subr.bf16.mxu0 0
    %1998 = vmatpush2.bf16.msra.mxu0 0
    %1999 = vmatprep.subr.bf16.mxu0 0
    %2000 = vmatpush2.bf16.msra.mxu0 0
    %2001 = vmatprep.subr.bf16.mxu0 0
    %2002 = vmatpush2.bf16.msra.mxu0 0
    %2003 = vmatprep.subr.bf16.mxu0 0
    %2004 = vmatpush2.bf16.msra.mxu0 0
    %2005 = vmatprep.subr.bf16.mxu0 0
    %2006 = vmatpush2.bf16.msra.mxu0 0
    %2007 = vmatprep.subr.bf16.mxu0 0
    %2008 = vmatpush2.bf16.msra.mxu0 0
    %2009 = vmatprep.subr.bf16.mxu0 0
    %2010 = vmatpush2.bf16.msra.mxu0 0
    %2011 = vmatprep.subr.bf16.mxu0 0
    %2012 = vmatpush2.bf16.msra.mxu0 0
    %2013 = vmatprep.mubr.bf16.mxu0 0
    %2014 = vmatmul.mubr.bf16.gmra.mxu0 %v1979
    %v2015 = vpop.f32.mrf.mxu0
    %v2016 = vadd.f32 0.0, %v2015
    %v2017 = vpop.f32.mrf.mxu0
    %v2018 = vpop.f32.mrf.mxu0
    %v2019 = vadd.f32 0.0, %v2018
    %v2020 = vpop.f32.mrf.mxu0
    %2021 = vdwg.mxu0
    %v2022 = vadd.f32 %v1972, %v2016
    %v2023 = vadd.f32 %v1973, %v2019
    %v2024 = vxor.u32 %v2022, 2147483648
    %v2025 = vxor.u32 %v2023, 2147483648
    %v2026 = vmul.f32 %v2024, 1.442695
    %v2027 = vpow.pop %v2026
    %v2028 = vmul.f32 %v2025, 1.442695
    %v2029 = vpow.pop %v2028
    %v2030 = vadd.f32 %v2027, 1.0
    %v2031 = vadd.f32 %v2029, 1.0
    %v2032 = vrcp.pop %v2030
    %v2033 = vmul.f32 1.0, %v2032
    %v2034 = vrcp.pop %v2031
    %v2035 = vmul.f32 1.0, %v2034
    %v2036 = vtanh.pop %v2022
    %v2037 = vtanh.pop %v2023
    %v2038 = vmul.f32 %v2033, %v1958
    %v2039 = vmul.f32 %v2035, %v1959
    %2042 = vrot.lane.b32.xlu0 %v2036, 32
    %v2043 = vpop.permute.xlu0 %2042
    %2044 = vrot.lane.b32.xlu0 %v2037, 32
    %v2045 = vpop.permute.xlu0 %2044
    %v2048 = vmul.f32 %v2033, %v2043
    %v2049 = vmul.f32 %v2035, %v2045
    %2052 = vrot.lane.b32.xlu0 %v2048, 32
    %v2053 = vpop.permute.xlu0 %2052
    %2054 = vrot.lane.b32.xlu0 %v2049, 32
    %v2055 = vpop.permute.xlu0 %2054
    %v2058 = vadd.f32 %v2038, %v2053
    %v2059 = vadd.f32 %v2039, %v2055
    %v2060 = vtanh.pop %v2058
    %v2061 = vtanh.pop %v2059
    %2064 = vrot.lane.b32.xlu0 %v2060, 32
    %v2065 = vpop.permute.xlu0 %2064
    %2066 = vrot.lane.b32.xlu0 %v2061, 32
    %v2067 = vpop.permute.xlu0 %2066
    %v2070 = vmul.f32 %v2033, %v2065
    %v2071 = vmul.f32 %v2035, %v2067
    %v2072 = vld [vmem:[%s978] sm:$0xff]
    %v2073 = vld [vmem:[%s978 + $0x8] sm:$0xff]
    %v2074 = vpack.c.bf16 %v2071, %v2070
    %2076 = vrot.lane.b32.xlu0 %v2074, 64
    %v2077 = vpop.permute.xlu0 %2076
    %v2079 = vsel %vm138, %v2077, 0
    %2081 = vmatprep.subr.bf16.mxu0 0
    %2082 = vmatpush1.bf16.msra.mxu0 0
    %2083 = vmatprep.subr.bf16.mxu0 0
    %2084 = vmatpush1.bf16.msra.mxu0 0
    %2085 = vmatprep.subr.bf16.mxu0 0
    %2086 = vmatpush1.bf16.msra.mxu0 0
    %2087 = vmatprep.subr.bf16.mxu0 0
    %2088 = vmatpush1.bf16.msra.mxu0 0
    %2089 = vmatprep.subr.bf16.mxu0 0
    %2090 = vmatpush1.bf16.msra.mxu0 0
    %2091 = vmatprep.subr.bf16.mxu0 0
    %2092 = vmatpush1.bf16.msra.mxu0 0
    %2093 = vmatprep.subr.bf16.mxu0 0
    %2094 = vmatpush1.bf16.msra.mxu0 %v1467
    %2095 = vmatprep.subr.bf16.mxu0 0
    %2096 = vmatpush1.bf16.msra.mxu0 %v1466
    %2097 = vmatprep.subr.bf16.mxu0 0
    %2098 = vmatpush2.bf16.msra.mxu0 0
    %2099 = vmatprep.subr.bf16.mxu0 0
    %2100 = vmatpush2.bf16.msra.mxu0 0
    %2101 = vmatprep.subr.bf16.mxu0 0
    %2102 = vmatpush2.bf16.msra.mxu0 0
    %2103 = vmatprep.subr.bf16.mxu0 0
    %2104 = vmatpush2.bf16.msra.mxu0 0
    %2105 = vmatprep.subr.bf16.mxu0 0
    %2106 = vmatpush2.bf16.msra.mxu0 0
    %2107 = vmatprep.subr.bf16.mxu0 0
    %2108 = vmatpush2.bf16.msra.mxu0 0
    %2109 = vmatprep.subr.bf16.mxu0 0
    %2110 = vmatpush2.bf16.msra.mxu0 0
    %2111 = vmatprep.subr.bf16.mxu0 0
    %2112 = vmatpush2.bf16.msra.mxu0 0
    %2113 = vmatprep.mubr.bf16.mxu0 0
    %2114 = vmatmul.mubr.bf16.gmra.mxu0 %v2079
    %v2115 = vpop.f32.mrf.mxu0
    %v2116 = vadd.f32 0.0, %v2115
    %v2117 = vpop.f32.mrf.mxu0
    %v2118 = vpop.f32.mrf.mxu0
    %v2119 = vadd.f32 0.0, %v2118
    %v2120 = vpop.f32.mrf.mxu0
    %2121 = vdwg.mxu0
    %v2122 = vadd.f32 %v2072, %v2116
    %v2123 = vadd.f32 %v2073, %v2119
    %v2124 = vxor.u32 %v2122, 2147483648
    %v2125 = vxor.u32 %v2123, 2147483648
    %v2126 = vmul.f32 %v2124, 1.442695
    %v2127 = vpow.pop %v2126
    %v2128 = vmul.f32 %v2125, 1.442695
    %v2129 = vpow.pop %v2128
    %v2130 = vadd.f32 %v2127, 1.0
    %v2131 = vadd.f32 %v2129, 1.0
    %v2132 = vrcp.pop %v2130
    %v2133 = vmul.f32 1.0, %v2132
    %v2134 = vrcp.pop %v2131
    %v2135 = vmul.f32 1.0, %v2134
    %v2136 = vtanh.pop %v2122
    %v2137 = vtanh.pop %v2123
    %v2138 = vmul.f32 %v2133, %v2058
    %v2139 = vmul.f32 %v2135, %v2059
    %2142 = vrot.lane.b32.xlu0 %v2136, 32
    %v2143 = vpop.permute.xlu0 %2142
    %2144 = vrot.lane.b32.xlu0 %v2137, 32
    %v2145 = vpop.permute.xlu0 %2144
    %v2148 = vmul.f32 %v2133, %v2143
    %v2149 = vmul.f32 %v2135, %v2145
    %2152 = vrot.lane.b32.xlu0 %v2148, 32
    %v2153 = vpop.permute.xlu0 %2152
    %2154 = vrot.lane.b32.xlu0 %v2149, 32
    %v2155 = vpop.permute.xlu0 %2154
    %v2158 = vadd.f32 %v2138, %v2153
    %v2159 = vadd.f32 %v2139, %v2155
    %v2160 = vtanh.pop %v2158
    %v2161 = vtanh.pop %v2159
    %2164 = vrot.lane.b32.xlu0 %v2160, 32
    %v2165 = vpop.permute.xlu0 %2164
    %2166 = vrot.lane.b32.xlu0 %v2161, 32
    %v2167 = vpop.permute.xlu0 %2166
    %v2170 = vmul.f32 %v2133, %v2165
    %v2171 = vmul.f32 %v2135, %v2167
    %v2172 = vld [vmem:[%s1092] sm:$0xff]
    %v2173 = vld [vmem:[%s1092 + $0x8] sm:$0xff]
    %v2174 = vpack.c.bf16 %v2171, %v2170
    %2176 = vrot.lane.b32.xlu0 %v2174, 64
    %v2177 = vpop.permute.xlu0 %2176
    %v2179 = vsel %vm138, %v2177, 0
    %2181 = vmatprep.subr.bf16.mxu0 0
    %2182 = vmatpush1.bf16.msra.mxu0 0
    %2183 = vmatprep.subr.bf16.mxu0 0
    %2184 = vmatpush1.bf16.msra.mxu0 0
    %2185 = vmatprep.subr.bf16.mxu0 0
    %2186 = vmatpush1.bf16.msra.mxu0 0
    %2187 = vmatprep.subr.bf16.mxu0 0
    %2188 = vmatpush1.bf16.msra.mxu0 0
    %2189 = vmatprep.subr.bf16.mxu0 0
    %2190 = vmatpush1.bf16.msra.mxu0 0
    %2191 = vmatprep.subr.bf16.mxu0 0
    %2192 = vmatpush1.bf16.msra.mxu0 0
    %2193 = vmatprep.subr.bf16.mxu0 0
    %2194 = vmatpush1.bf16.msra.mxu0 %v1467
    %2195 = vmatprep.subr.bf16.mxu0 0
    %2196 = vmatpush1.bf16.msra.mxu0 %v1466
    %2197 = vmatprep.subr.bf16.mxu0 0
    %2198 = vmatpush2.bf16.msra.mxu0 0
    %2199 = vmatprep.subr.bf16.mxu0 0
    %2200 = vmatpush2.bf16.msra.mxu0 0
    %2201 = vmatprep.subr.bf16.mxu0 0
    %2202 = vmatpush2.bf16.msra.mxu0 0
    %2203 = vmatprep.subr.bf16.mxu0 0
    %2204 = vmatpush2.bf16.msra.mxu0 0
    %2205 = vmatprep.subr.bf16.mxu0 0
    %2206 = vmatpush2.bf16.msra.mxu0 0
    %2207 = vmatprep.subr.bf16.mxu0 0
    %2208 = vmatpush2.bf16.msra.mxu0 0
    %2209 = vmatprep.subr.bf16.mxu0 0
    %2210 = vmatpush2.bf16.msra.mxu0 0
    %2211 = vmatprep.subr.bf16.mxu0 0
    %2212 = vmatpush2.bf16.msra.mxu0 0
    %2213 = vmatprep.mubr.bf16.mxu0 0
    %2214 = vmatmul.mubr.bf16.gmra.mxu0 %v2179
    %v2215 = vpop.f32.mrf.mxu0
    %v2216 = vadd.f32 0.0, %v2215
    %v2217 = vpop.f32.mrf.mxu0
    %v2218 = vpop.f32.mrf.mxu0
    %v2219 = vadd.f32 0.0, %v2218
    %v2220 = vpop.f32.mrf.mxu0
    %2221 = vdwg.mxu0
    %v2222 = vadd.f32 %v2172, %v2216
    %v2223 = vadd.f32 %v2173, %v2219
    %v2224 = vxor.u32 %v2222, 2147483648
    %v2225 = vxor.u32 %v2223, 2147483648
    %v2226 = vmul.f32 %v2224, 1.442695
    %v2227 = vpow.pop %v2226
    %v2228 = vmul.f32 %v2225, 1.442695
    %v2229 = vpow.pop %v2228
    %v2230 = vadd.f32 %v2227, 1.0
    %v2231 = vadd.f32 %v2229, 1.0
    %v2232 = vrcp.pop %v2230
    %v2233 = vmul.f32 1.0, %v2232
    %v2234 = vrcp.pop %v2231
    %v2235 = vmul.f32 1.0, %v2234
    %v2236 = vtanh.pop %v2222
    %v2237 = vtanh.pop %v2223
    %v2238 = vmul.f32 %v2233, %v2158
    %v2239 = vmul.f32 %v2235, %v2159
    %2242 = vrot.lane.b32.xlu0 %v2236, 32
    %v2243 = vpop.permute.xlu0 %2242
    %2244 = vrot.lane.b32.xlu0 %v2237, 32
    %v2245 = vpop.permute.xlu0 %2244
    %v2248 = vmul.f32 %v2233, %v2243
    %v2249 = vmul.f32 %v2235, %v2245
    %2252 = vrot.lane.b32.xlu0 %v2248, 32
    %v2253 = vpop.permute.xlu0 %2252
    %2254 = vrot.lane.b32.xlu0 %v2249, 32
    %v2255 = vpop.permute.xlu0 %2254
    %v2258 = vadd.f32 %v2238, %v2253
    %v2259 = vadd.f32 %v2239, %v2255
    %v2260 = vtanh.pop %v2258
    %v2261 = vtanh.pop %v2259
    %2264 = vrot.lane.b32.xlu0 %v2260, 32
    %v2265 = vpop.permute.xlu0 %2264
    %2266 = vrot.lane.b32.xlu0 %v2261, 32
    %v2267 = vpop.permute.xlu0 %2266
    %v2270 = vmul.f32 %v2233, %v2265
    %v2271 = vmul.f32 %v2235, %v2267
    %2274 = vrot.lane.b32.xlu0 %v2270, 64
    %v2275 = vpop.permute.xlu0 %2274
    %2276 = vrot.lane.b32.xlu0 %v2271, 64
    %v2277 = vpop.permute.xlu0 %2276
    %s2280 = scalar_lea.vmem [#allocation8], 16
    %2281 = vst.msk [vmem:[%s2280] sm:$0xff] %vm138, %v2275
    %2282 = vst.msk [vmem:[%s2280 + $0x8] sm:$0xff] %vm138, %v2277
    %2285 = vrot.lane.b32.xlu0 %v2258, 96
    %v2286 = vpop.permute.xlu0 %2285
    %2287 = vrot.lane.b32.xlu0 %v2259, 96
    %v2288 = vpop.permute.xlu0 %2287
    %s2291 = scalar_lea.vmem [#allocation9], 16
    %2292 = vst.msk [vmem:[%s2291] sm:$0xff] %vm138, %v2286
    %2293 = vst.msk [vmem:[%s2291 + $0x8] sm:$0xff] %vm138, %v2288
    %v2294 = vpack.c.bf16 %v2271, %v2270
    %v2295 = vld [vmem:[%s6] sm:$0xf]
    %v2296 = vld [vmem:[%s6 + $0x4] sm:$0xf]
    %v2297 = vld [vmem:[%s6 + $0x8] sm:$0xf]
    %v2298 = vld [vmem:[%s6 + $0xc] sm:$0xf]
    %v2299 = vld [vmem:[#allocation4] sm:$0x1]
    %v2301 = vlaneseq
    %v2302 = vshrl.u32 %v2301, 7
    %v2303 = vsub.s32 0, %v2302
    %v2304 = vrot.slane %v2299, %v2303
    %2307 = vrot.lane.b32.xlu0 %v2294, 64
    %v2308 = vpop.permute.xlu0 %2307
    %v2313 = vunpack.c.l.b16 %v2295
    %v2314 = vunpack.c.l.b16 %v2296
    %v2315 = vunpack.c.l.b16 %v2297
    %v2316 = vunpack.c.l.b16 %v2298
    %v2317 = vpack.c.b16 %v2314, %v2313
    %v2318 = vpack.c.b16 %v2316, %v2315
    %v2322 = vsel %vm138, %v2308, 0
    %2324 = vmatprep.subr.bf16.mxu0 0
    %2325 = vmatpush1.bf16.msra.mxu0 0
    %2326 = vmatprep.subr.bf16.mxu0 0
    %2327 = vmatpush1.bf16.msra.mxu0 0
    %2328 = vmatprep.subr.bf16.mxu0 0
    %2329 = vmatpush1.bf16.msra.mxu0 0
    %2330 = vmatprep.subr.bf16.mxu0 0
    %2331 = vmatpush1.bf16.msra.mxu0 0
    %2332 = vmatprep.subr.bf16.mxu0 0
    %2333 = vmatpush1.bf16.msra.mxu0 0
    %2334 = vmatprep.subr.bf16.mxu0 0
    %2335 = vmatpush1.bf16.msra.mxu0 0
    %2336 = vmatprep.subr.bf16.mxu0 0
    %2337 = vmatpush1.bf16.msra.mxu0 %v2318
    %2338 = vmatprep.subr.bf16.mxu0 0
    %2339 = vmatpush1.bf16.msra.mxu0 %v2317
    %2340 = vmatprep.subr.bf16.mxu0 0
    %2341 = vmatpush2.bf16.msra.mxu0 0
    %2342 = vmatprep.subr.bf16.mxu0 0
    %2343 = vmatpush2.bf16.msra.mxu0 0
    %2344 = vmatprep.subr.bf16.mxu0 0
    %2345 = vmatpush2.bf16.msra.mxu0 0
    %2346 = vmatprep.subr.bf16.mxu0 0
    %2347 = vmatpush2.bf16.msra.mxu0 0
    %2348 = vmatprep.subr.bf16.mxu0 0
    %2349 = vmatpush2.bf16.msra.mxu0 0
    %2350 = vmatprep.subr.bf16.mxu0 0
    %2351 = vmatpush2.bf16.msra.mxu0 0
    %2352 = vmatprep.subr.bf16.mxu0 0
    %2353 = vmatpush2.bf16.msra.mxu0 0
    %2354 = vmatprep.subr.bf16.mxu0 0
    %2355 = vmatpush2.bf16.msra.mxu0 0
    %2356 = vmatprep.mubr.bf16.mxu0 0
    %2357 = vmatmul.mubr.bf16.gmra.mxu0 %v2322
    %v2358 = vpop.f32.mrf.mxu0
    %v2359 = vadd.f32 %v2304, %v2358
    %v2360 = vpop.f32.mrf.mxu0
    %v2361 = vpop.f32.mrf.mxu0
    %v2362 = vadd.f32 %v2304, %v2361
    %v2363 = vpop.f32.mrf.mxu0
    %2364 = vdwg.mxu0
    %v2365 = vxor.u32 %v2359, 2147483648
    %v2366 = vxor.u32 %v2362, 2147483648
    %v2367 = vmul.f32 %v2365, 1.442695
    %v2368 = vpow.pop %v2367
    %v2369 = vmul.f32 %v2366, 1.442695
    %v2370 = vpow.pop %v2369
    %v2371 = vadd.f32 %v2368, 1.0
    %v2372 = vadd.f32 %v2370, 1.0
    %v2373 = vrcp.pop %v2371
    %v2374 = vmul.f32 1.0, %v2373
    %v2375 = vrcp.pop %v2372
    %v2376 = vmul.f32 1.0, %v2375
    %vm2377 = vcmask 7168
    %2378 = vst.msk [vmem:[%s8] sm:$0xff] %vm2377, %v2374
    %2379 = vst.msk [vmem:[%s8 + $0x8] sm:$0xff] %vm2377, %v2376
    // Predicated region
    $region38: #{tpu_custom_call.1} parent=1 // pred_check
      _
    $region39: #{tpu_custom_call.1} parent=1 // pred_check_branch
      %2381 = sbr.rel (0) target = $region41
    $region40: #{tpu_custom_call.1} parent=1 // pred_region
      _
    $region41: #{tpu_custom_call.1} parent=1 // pred_fallthru
      _
    // Predicated region
    $region42: #{tpu_custom_call.1} parent=1 // pred_check
      _
    $region43: #{tpu_custom_call.1} parent=1 // pred_check_branch
      %2383 = sbr.rel (0) target = $region45
    $region44: #{tpu_custom_call.1} parent=1 // pred_region
      %s2385 = ssub.s32 512, 512
      %2386 = vsyncadd [#allocation7], %s2385
      %s2387 = sshll.u32 [#allocation8], 4
      %s2388 = int_to_ptr.vmem [resolvable:$true] %s2387
      %2393 = dma.vmem_to_hbm [thread:$0]  %s2388, 512, %s9, [#allocation7], 128, 128, 8
    $region45: #{tpu_custom_call.1} parent=1 // pred_fallthru
      _
    // Predicated region
    $region46: #{tpu_custom_call.1} parent=1 // pred_check
      _
    $region47: #{tpu_custom_call.1} parent=1 // pred_check_branch
      %2395 = sbr.rel (0) target = $region49
    $region48: #{tpu_custom_call.1} parent=1 // pred_region
      %s2397 = ssub.s32 512, 512
      %2398 = vsyncadd [#allocation10], %s2397
      %s2399 = sshll.u32 [#allocation9], 4
      %s2400 = int_to_ptr.vmem [resolvable:$true] %s2399
      %2405 = dma.vmem_to_hbm [thread:$0]  %s2400, 512, %s10, [#allocation10], 128, 128, 8
    $region49: #{tpu_custom_call.1} parent=1 // pred_fallthru
      _
    // Predicated region
    $region50: #{tpu_custom_call.1} parent=1 // pred_check
      _
    $region51: #{tpu_custom_call.1} parent=1 // pred_check_branch
      %2407 = sbr.rel (0) target = $region53
    $region52: #{tpu_custom_call.1} parent=1 // pred_region
      _
    $region53: #{tpu_custom_call.1} parent=1 // pred_fallthru
      _
    // Predicated region
    $region54: #{tpu_custom_call.1} parent=1 // pred_check
      _
    $region55: #{tpu_custom_call.1} parent=1 // pred_check_branch
      %2409 = sbr.rel (0) target = $region57
    $region56: #{tpu_custom_call.1} parent=1 // pred_region
      %2410 = dma.done [#allocation7], 512
    $region57: #{tpu_custom_call.1} parent=1 // pred_fallthru
      _
    // Predicated region
    $region58: #{tpu_custom_call.1} parent=1 // pred_check
      _
    $region59: #{tpu_custom_call.1} parent=1 // pred_check_branch
      %2412 = sbr.rel (0) target = $region61
    $region60: #{tpu_custom_call.1} parent=1 // pred_region
      %2413 = dma.done [#allocation10], 512
    $region61: #{tpu_custom_call.1} parent=1 // pred_fallthru
      _
    %2414 = vsyncpa [#allocation6], 1
    %2415 = vsyncpa [#allocation7], 1
    %2416 = vsyncpa [#allocation10], 1

</llo_original>
